<compile_context>
chip_gen: v5e
topology: v5e:2x2
jax: 0.10.0
libtpu: 0.0.40
codegen_flags: <defaults>
</compile_context>

<pallas_src>
import numpy as np

import jax
import jax.numpy as jnp
from jax import lax
from jax.experimental import pallas as pl
from jax.experimental.pallas import tpu as pltpu


# ----------------------------- fused Pallas kernel -----------------------------

def _lenet5_kernel(x_ref, t1_ref, c1b_ref, t2_ref, c2b_ref,
                   fw1_ref, fb1_ref, fw2_ref, fb2_ref, fw3_ref, fb3_ref,
                   o_ref, p1_ref, feat_ref):
    f32, bf16 = jnp.float32, jnp.bfloat16

    # 0/1 selection matrices: picking even / odd rows turns the height half of a
    # 2x2 max-pool into two tiny MXU matmuls + an elementwise max.
    def row_selectors(npool, nrow):
        r = lax.broadcasted_iota(jnp.int32, (npool, nrow), 0)
        c = lax.broadcasted_iota(jnp.int32, (npool, nrow), 1)
        return (c == 2 * r).astype(f32), (c == 2 * r + 1).astype(f32)

    se1, so1 = row_selectors(12, 24)
    se2, so2 = row_selectors(4, 8)

    bias1 = c1b_ref[...]          # (1, 96)  : lane = pw1*8 + c   (c < 6 real)
    bias2 = c2b_ref[...]          # (1, 64)  : lane = pw2*16 + co (16 real)

    feat_ref[...] = jnp.zeros((8, 256), f32)   # padded-batch flattened features

    for b in range(2):            # tiny static batch, fully unrolled
        # ---- conv1 + bias + relu + 2x2 maxpool ------------------------------
        # 2 (output-column parity) x 5 (kh) Toeplitz GEMMs: rows = output height,
        # lanes = pooled-width-position * 8 + channel.
        a0 = jnp.zeros((24, 96), f32)
        a1 = jnp.zeros((24, 96), f32)
        for kh in range(5):
            slab = x_ref[b, kh:kh + 24, :].astype(bf16)                  # (24, 32)
            a0 = a0 + jnp.dot(slab, t1_ref[0, kh], preferred_element_type=f32)
            a1 = a1 + jnp.dot(slab, t1_ref[1, kh], preferred_element_type=f32)
        m1 = jnp.maximum(jnp.maximum(a0 + bias1, 0.0),
                         jnp.maximum(a1 + bias1, 0.0))                   # width-pooled
        p1_ref[...] = jnp.maximum(jnp.dot(se1, m1, preferred_element_type=f32),
                                  jnp.dot(so1, m1, preferred_element_type=f32))
        # p1_ref: (12, 96) pooled conv1 activations, lane = pw1*8 + c

        # ---- conv2 + bias + relu + 2x2 maxpool ------------------------------
        # 2 x 5 block-Toeplitz GEMMs contracting over (pw1, c_in) lanes.
        c0 = jnp.zeros((8, 64), f32)
        c1 = jnp.zeros((8, 64), f32)
        for kh in range(5):
            slab2 = p1_ref[kh:kh + 8, :].astype(bf16)                    # (8, 96)
            c0 = c0 + jnp.dot(slab2, t2_ref[0, kh], preferred_element_type=f32)
            c1 = c1 + jnp.dot(slab2, t2_ref[1, kh], preferred_element_type=f32)
        m2 = jnp.maximum(jnp.maximum(c0 + bias2, 0.0),
                         jnp.maximum(c1 + bias2, 0.0))                   # (8, 64)
        p2 = jnp.maximum(jnp.dot(se2, m2, preferred_element_type=f32),
                         jnp.dot(so2, m2, preferred_element_type=f32))   # (4, 64)

        # flatten into the (8, 256) VMEM feature buffer: lane = ph*64 + pw*16 + co
        for ph in range(4):
            feat_ref[b:b + 1, 64 * ph:64 * ph + 64] = p2[ph:ph + 1, :]

    # ---- fc1 -> relu -> fc2 -> relu -> fc3 (M padded to 8, N padded to 128) --
    feat = feat_ref[...].astype(bf16)                                    # (8, 256)
    h = jnp.dot(feat, fw1_ref[...], preferred_element_type=f32) + fb1_ref[...]
    h = jnp.maximum(h, 0.0)
    h = jnp.dot(h.astype(bf16), fw2_ref[...], preferred_element_type=f32) + fb2_ref[...]
    h = jnp.maximum(h, 0.0)
    o_ref[...] = (jnp.dot(h.astype(bf16), fw3_ref[...], preferred_element_type=f32)
                  + fb3_ref[...])                                        # (8, 128)


# ----------------------------- wrapper ---------------------------------------

def _full(shape):
    zeros = (0,) * len(shape)
    return pl.BlockSpec(shape, lambda i, z=zeros: z)


@jax.jit
def lenet5_forward(x, packed):
    (T1, c1b, T2, c2b, W1, fb1p, W2, fb2p, W3, fb3p) = packed
    B = x.shape[0]
    assert (B,) + tuple(x.shape[1:]) == (2, 1, 28, 28)
    # squeeze the single input channel and pad W 28 -> 32 (zero lanes, zero weights)
    xp = jnp.pad(x.reshape(B, 28, 28), ((0, 0), (0, 0), (0, 4)))

    operands = (xp, T1, c1b, T2, c2b, W1, fb1p, W2, fb2p, W3, fb3p)
    out = pl.pallas_call(
        _lenet5_kernel,
        out_shape=jax.ShapeDtypeStruct((8, 128), jnp.float32),
        grid=(1,),
        in_specs=[_full(op.shape) for op in operands],
        out_specs=pl.BlockSpec((8, 128), lambda i: (0, 0)),
        scratch_shapes=[pltpu.VMEM((12, 96), jnp.float32),    # pooled conv1 acts
                        pltpu.VMEM((8, 256), jnp.float32)],   # padded flat features
        compiler_params=pltpu.CompilerParams(
            dimension_semantics=("arbitrary",)),
    )(*operands)
    return out[:B, :10]


# ------------------- host-side (one-time) weight repacking --------------------

def pack_params(params):
    (w1, b1, w2, b2, fw1, fb1, fw2, fb2, fw3, fb3) = [
        np.asarray(p, np.float32) for p in params]

    # conv1 -> 2 (parity r) x 5 (kh) Toeplitz matrices over the padded input width:
    #   out_r[oh, pw*8+c] = sum_{kh,iw} x[oh+kh, iw] * T1[r, kh, iw, pw*8+c]
    # equals conv1 output at (oh, ow=2*pw+r, c).
    T1 = np.zeros((2, 5, 32, 96), np.float32)
    for r in range(2):
        for kh in range(5):
            for pw in range(12):
                for kw in range(5):
                    T1[r, kh, 2 * pw + r + kw, pw * 8:pw * 8 + 6] = w1[:, 0, kh, kw]
    c1b = np.zeros((1, 96), np.float32)
    for pw in range(12):
        c1b[0, pw * 8:pw * 8 + 6] = b1

    # conv2 -> 2 x 5 block-Toeplitz matrices contracting over lanes (pw1, c_in):
    #   out_r2[oh2, pw2*16+co] = sum_{kh, pw1, ci} p1[oh2+kh, pw1*8+ci] *
    #                            T2[r2, kh, pw1*8+ci, pw2*16+co]
    T2 = np.zeros((2, 5, 96, 64), np.float32)
    for r2 in range(2):
        for kh in range(5):
            for pw2 in range(4):
                for kw in range(5):
                    pw1 = 2 * pw2 + r2 + kw
                    T2[r2, kh, pw1 * 8:pw1 * 8 + 6,
                       pw2 * 16:pw2 * 16 + 16] = w2[:, :, kh, kw].T
    c2b = np.zeros((1, 64), np.float32)
    for pw2 in range(4):
        c2b[0, pw2 * 16:pw2 * 16 + 16] = b2

    # fc1 remapped from torch's NCHW flatten (f = co*16 + ph*4 + pw) to the
    # kernel's lane order (ph*64 + pw*16 + co); all FC widths padded to 128.
    W1 = np.zeros((256, 128), np.float32)
    for ph in range(4):
        for pw in range(4):
            for co in range(16):
                W1[ph * 64 + pw * 16 + co, :120] = fw1[:, co * 16 + ph * 4 + pw]
    fb1p = np.zeros((1, 128), np.float32); fb1p[0, :120] = fb1
    W2 = np.zeros((128, 128), np.float32); W2[:120, :84] = fw2.T
    fb2p = np.zeros((1, 128), np.float32); fb2p[0, :84] = fb2
    W3 = np.zeros((128, 128), np.float32); W3[:84, :10] = fw3.T
    fb3p = np.zeros((1, 128), np.float32); fb3p[0, :10] = fb3

    bf = jnp.bfloat16
    f = lambda a: jnp.asarray(a, jnp.float32)
    return (jnp.asarray(T1, bf), f(c1b), jnp.asarray(T2, bf), f(c2b),
            jnp.asarray(W1, bf), f(fb1p), jnp.asarray(W2, bf), f(fb2p),
            jnp.asarray(W3, bf), f(fb3p))


# ----------------- deterministic PyTorch-style parameter init -----------------

def init_params(key):
    ks = jax.random.split(key, 10)

    def u(k, shape, fan_in):
        bound = 1.0 / np.sqrt(fan_in)
        return jax.random.uniform(k, shape, jnp.float32, -bound, bound)

    w1 = u(ks[0], (6, 1, 5, 5), 1 * 25);   b1 = u(ks[1], (6,), 1 * 25)
    w2 = u(ks[2], (16, 6, 5, 5), 6 * 25);  b2 = u(ks[3], (16,), 6 * 25)
    fw1 = u(ks[4], (120, 256), 256);       fb1 = u(ks[5], (120,), 256)
    fw2 = u(ks[6], (84, 120), 120);        fb2 = u(ks[7], (84,), 120)
    fw3 = u(ks[8], (10, 84), 84);          fb3 = u(ks[9], (10,), 84)
    return (w1, b1, w2, b2, fw1, fb1, fw2, fb2, fw3, fb3)


# ------------------- pure-JAX reference of the PyTorch forward ----------------

def lenet5_reference(x, params):
    w1, b1, w2, b2, fw1, fb1, fw2, fb2, fw3, fb3 = params
    dn = ('NCHW', 'OIHW', 'NCHW')
    y = jax.lax.conv_general_dilated(x, w1, (1, 1), 'VALID', dimension_numbers=dn)
    y = jnp.maximum(y + b1[None, :, None, None], 0.0)
    y = jax.lax.reduce_window(y, -jnp.inf, jax.lax.max, (1, 1, 2, 2), (1, 1, 2, 2), 'VALID')
    y = jax.lax.conv_general_dilated(y, w2, (1, 1), 'VALID', dimension_numbers=dn)
    y = jnp.maximum(y + b2[None, :, None, None], 0.0)
    y = jax.lax.reduce_window(y, -jnp.inf, jax.lax.max, (1, 1, 2, 2), (1, 1, 2, 2), 'VALID')
    y = y.reshape(y.shape[0], -1)
    y = jnp.maximum(y @ fw1.T + fb1, 0.0)
    y = jnp.maximum(y @ fw2.T + fb2, 0.0)
    return y @ fw3.T + fb3


if __name__ == "__main__":
    key = jax.random.PRNGKey(0)
    kx, kp = jax.random.split(key)
    x = jax.random.normal(kx, (2, 1, 28, 28), jnp.float32)   # MNIST-shaped NCHW input
    params = init_params(kp)
    packed = pack_params(params)                              # one-time weight repack

    out = lenet5_forward(x, packed)
    out = jax.block_until_ready(out)

    ref = lenet5_reference(x, params)
    assert out.shape == (2, 10), out.shape
    np.testing.assert_allclose(np.asarray(out), np.asarray(ref), atol=2e-2, rtol=2e-2)
    print("KERNEL_OK")
</pallas_src>

<mosaic_0001>
module attributes {stable_mosaic.version = 11 : i64} {
  func.func @_lenet5_kernel(%arg0: i32, %arg1: memref<2x28x32xf32, #tpu.memory_space<vmem>>, %arg2: memref<2x5x32x96xbf16, #tpu.memory_space<vmem>>, %arg3: memref<1x96xf32, #tpu.memory_space<vmem>>, %arg4: memref<2x5x96x64xbf16, #tpu.memory_space<vmem>>, %arg5: memref<1x64xf32, #tpu.memory_space<vmem>>, %arg6: memref<256x128xbf16, #tpu.memory_space<vmem>>, %arg7: memref<1x128xf32, #tpu.memory_space<vmem>>, %arg8: memref<128x128xbf16, #tpu.memory_space<vmem>>, %arg9: memref<1x128xf32, #tpu.memory_space<vmem>>, %arg10: memref<128x128xbf16, #tpu.memory_space<vmem>>, %arg11: memref<1x128xf32, #tpu.memory_space<vmem>>, %arg12: memref<8x128xf32, #tpu.memory_space<vmem>>, %arg13: memref<12x96xf32, #tpu.memory_space<vmem>>, %arg14: memref<8x256xf32, #tpu.memory_space<vmem>>) attributes {dimension_semantics = [#tpu.dimension_semantics<arbitrary>], iteration_bounds = array<i64: 1>, scalar_prefetch = 0 : i64, scratch_operands = 2 : i64, tpu.core_type = #tpu.core_type<tc>, window_params = [{pipeline_mode = #tpu.pipeline_mode<synchronous>, transform_indices = @transform_0, window_bounds = array<i64: 2, 28, 32>}, {pipeline_mode = #tpu.pipeline_mode<synchronous>, transform_indices = @transform_1, window_bounds = array<i64: 2, 5, 32, 96>}, {pipeline_mode = #tpu.pipeline_mode<synchronous>, transform_indices = @transform_2, window_bounds = array<i64: 1, 96>}, {pipeline_mode = #tpu.pipeline_mode<synchronous>, transform_indices = @transform_3, window_bounds = array<i64: 2, 5, 96, 64>}, {pipeline_mode = #tpu.pipeline_mode<synchronous>, transform_indices = @transform_4, window_bounds = array<i64: 1, 64>}, {pipeline_mode = #tpu.pipeline_mode<synchronous>, transform_indices = @transform_5, window_bounds = array<i64: 256, 128>}, {pipeline_mode = #tpu.pipeline_mode<synchronous>, transform_indices = @transform_6, window_bounds = array<i64: 1, 128>}, {pipeline_mode = #tpu.pipeline_mode<synchronous>, transform_indices = @transform_7, window_bounds = array<i64: 128, 128>}, {pipeline_mode = #tpu.pipeline_mode<synchronous>, transform_indices = @transform_8, window_bounds = array<i64: 1, 128>}, {pipeline_mode = #tpu.pipeline_mode<synchronous>, transform_indices = @transform_9, window_bounds = array<i64: 128, 128>}, {pipeline_mode = #tpu.pipeline_mode<synchronous>, transform_indices = @transform_10, window_bounds = array<i64: 1, 128>}, {pipeline_mode = #tpu.pipeline_mode<synchronous>, transform_indices = @transform_11, window_bounds = array<i64: 8, 128>}]} {
    %0 = tpu.iota {dimensions = array<i32: 0>} : vector<12x24xi32>
    %1 = tpu.iota {dimensions = array<i32: 1>} : vector<12x24xi32>
    %c2_i32 = arith.constant 2 : i32
    %2 = vector.broadcast %c2_i32 : i32 to vector<12x24xi32>
    %3 = arith.muli %2, %0 : vector<12x24xi32>
    %4 = arith.cmpi eq, %1, %3 : vector<12x24xi32>
    %5 = arith.extui %4 : vector<12x24xi1> to vector<12x24xi32>
    %6 = arith.sitofp %5 : vector<12x24xi32> to vector<12x24xf32>
    %c2_i32_0 = arith.constant 2 : i32
    %7 = vector.broadcast %c2_i32_0 : i32 to vector<12x24xi32>
    %8 = arith.muli %7, %0 : vector<12x24xi32>
    %c1_i32 = arith.constant 1 : i32
    %9 = vector.broadcast %c1_i32 : i32 to vector<12x24xi32>
    %10 = arith.addi %8, %9 : vector<12x24xi32>
    %11 = arith.cmpi eq, %1, %10 : vector<12x24xi32>
    %12 = arith.extui %11 : vector<12x24xi1> to vector<12x24xi32>
    %13 = arith.sitofp %12 : vector<12x24xi32> to vector<12x24xf32>
    %14 = tpu.iota {dimensions = array<i32: 0>} : vector<4x8xi32>
    %15 = tpu.iota {dimensions = array<i32: 1>} : vector<4x8xi32>
    %c2_i32_1 = arith.constant 2 : i32
    %16 = vector.broadcast %c2_i32_1 : i32 to vector<4x8xi32>
    %17 = arith.muli %16, %14 : vector<4x8xi32>
    %18 = arith.cmpi eq, %15, %17 : vector<4x8xi32>
    %19 = arith.extui %18 : vector<4x8xi1> to vector<4x8xi32>
    %20 = arith.sitofp %19 : vector<4x8xi32> to vector<4x8xf32>
    %c2_i32_2 = arith.constant 2 : i32
    %21 = vector.broadcast %c2_i32_2 : i32 to vector<4x8xi32>
    %22 = arith.muli %21, %14 : vector<4x8xi32>
    %c1_i32_3 = arith.constant 1 : i32
    %23 = vector.broadcast %c1_i32_3 : i32 to vector<4x8xi32>
    %24 = arith.addi %22, %23 : vector<4x8xi32>
    %25 = arith.cmpi eq, %15, %24 : vector<4x8xi32>
    %26 = arith.extui %25 : vector<4x8xi1> to vector<4x8xi32>
    %27 = arith.sitofp %26 : vector<4x8xi32> to vector<4x8xf32>
    %c0 = arith.constant 0 : index
    %c0_4 = arith.constant 0 : index
    %28 = vector.load %arg3[%c0, %c0_4] : memref<1x96xf32, #tpu.memory_space<vmem>>, vector<1x96xf32>
    %c0_5 = arith.constant 0 : index
    %c0_6 = arith.constant 0 : index
    %29 = vector.load %arg5[%c0_5, %c0_6] : memref<1x64xf32, #tpu.memory_space<vmem>>, vector<1x64xf32>
    %cst = arith.constant 0.000000e+00 : f32
    %30 = vector.broadcast %cst : f32 to vector<8x256xf32>
    %c0_7 = arith.constant 0 : index
    %c0_8 = arith.constant 0 : index
    %31 = vector.load %arg14[%c0_7, %c0_8] : memref<8x256xf32, #tpu.memory_space<vmem>>, vector<8x256xf32>
    tpu.vector_store %arg14[%c0_7, %c0_8], %30 {strides = array<i32>} : memref<8x256xf32, #tpu.memory_space<vmem>>, vector<8x256xf32>,
    %cst_9 = arith.constant 0.000000e+00 : f32
    %32 = vector.broadcast %cst_9 : f32 to vector<24x96xf32>
    %cst_10 = arith.constant 0.000000e+00 : f32
    %33 = vector.broadcast %cst_10 : f32 to vector<24x96xf32>
    %c0_11 = arith.constant 0 : index
    %c0_12 = arith.constant 0 : index
    %c0_13 = arith.constant 0 : index
    %34 = vector.load %arg1[%c0_11, %c0_12, %c0_13] : memref<2x28x32xf32, #tpu.memory_space<vmem>>, vector<1x24x32xf32>
    %35 = vector.shape_cast %34 : vector<1x24x32xf32> to vector<24x32xf32>
    %36 = arith.truncf %35 : vector<24x32xf32> to vector<24x32xbf16>
    %c0_14 = arith.constant 0 : index
    %c0_15 = arith.constant 0 : index
    %c0_16 = arith.constant 0 : index
    %c0_17 = arith.constant 0 : index
    %37 = vector.load %arg2[%c0_14, %c0_15, %c0_16, %c0_17] : memref<2x5x32x96xbf16, #tpu.memory_space<vmem>>, vector<1x1x32x96xbf16>
    %38 = vector.shape_cast %37 : vector<1x1x32x96xbf16> to vector<32x96xbf16>
    %cst_18 = arith.constant dense<0.000000e+00> : vector<24x96xf32>
    %39 = tpu.matmul %36, %38, %cst_18 {dimension_numbers = #tpu.dot_dimension_numbers<[1], [0], [0], [1], [0, 0, 1, 1], [], []>} : vector<24x32xbf16>, vector<32x96xbf16>, vector<24x96xf32> -> vector<24x96xf32>
    %40 = arith.addf %32, %39 : vector<24x96xf32>
    %c1 = arith.constant 1 : index
    %c0_19 = arith.constant 0 : index
    %c0_20 = arith.constant 0 : index
    %c0_21 = arith.constant 0 : index
    %41 = vector.load %arg2[%c1, %c0_19, %c0_20, %c0_21] : memref<2x5x32x96xbf16, #tpu.memory_space<vmem>>, vector<1x1x32x96xbf16>
    %42 = vector.shape_cast %41 : vector<1x1x32x96xbf16> to vector<32x96xbf16>
    %cst_22 = arith.constant dense<0.000000e+00> : vector<24x96xf32>
    %43 = tpu.matmul %36, %42, %cst_22 {dimension_numbers = #tpu.dot_dimension_numbers<[1], [0], [0], [1], [0, 0, 1, 1], [], []>} : vector<24x32xbf16>, vector<32x96xbf16>, vector<24x96xf32> -> vector<24x96xf32>
    %44 = arith.addf %33, %43 : vector<24x96xf32>
    %c0_23 = arith.constant 0 : index
    %c1_24 = arith.constant 1 : index
    %c0_25 = arith.constant 0 : index
    %45 = vector.load %arg1[%c0_23, %c1_24, %c0_25] : memref<2x28x32xf32, #tpu.memory_space<vmem>>, vector<1x24x32xf32>
    %46 = vector.shape_cast %45 : vector<1x24x32xf32> to vector<24x32xf32>
    %47 = arith.truncf %46 : vector<24x32xf32> to vector<24x32xbf16>
    %c0_26 = arith.constant 0 : index
    %c1_27 = arith.constant 1 : index
    %c0_28 = arith.constant 0 : index
    %c0_29 = arith.constant 0 : index
    %48 = vector.load %arg2[%c0_26, %c1_27, %c0_28, %c0_29] : memref<2x5x32x96xbf16, #tpu.memory_space<vmem>>, vector<1x1x32x96xbf16>
    %49 = vector.shape_cast %48 : vector<1x1x32x96xbf16> to vector<32x96xbf16>
    %cst_30 = arith.constant dense<0.000000e+00> : vector<24x96xf32>
    %50 = tpu.matmul %47, %49, %cst_30 {dimension_numbers = #tpu.dot_dimension_numbers<[1], [0], [0], [1], [0, 0, 1, 1], [], []>} : vector<24x32xbf16>, vector<32x96xbf16>, vector<24x96xf32> -> vector<24x96xf32>
    %51 = arith.addf %40, %50 : vector<24x96xf32>
    %c1_31 = arith.constant 1 : index
    %c1_32 = arith.constant 1 : index
    %c0_33 = arith.constant 0 : index
    %c0_34 = arith.constant 0 : index
    %52 = vector.load %arg2[%c1_31, %c1_32, %c0_33, %c0_34] : memref<2x5x32x96xbf16, #tpu.memory_space<vmem>>, vector<1x1x32x96xbf16>
    %53 = vector.shape_cast %52 : vector<1x1x32x96xbf16> to vector<32x96xbf16>
    %cst_35 = arith.constant dense<0.000000e+00> : vector<24x96xf32>
    %54 = tpu.matmul %47, %53, %cst_35 {dimension_numbers = #tpu.dot_dimension_numbers<[1], [0], [0], [1], [0, 0, 1, 1], [], []>} : vector<24x32xbf16>, vector<32x96xbf16>, vector<24x96xf32> -> vector<24x96xf32>
    %55 = arith.addf %44, %54 : vector<24x96xf32>
    %c0_36 = arith.constant 0 : index
    %c2 = arith.constant 2 : index
    %c0_37 = arith.constant 0 : index
    %56 = vector.load %arg1[%c0_36, %c2, %c0_37] : memref<2x28x32xf32, #tpu.memory_space<vmem>>, vector<1x24x32xf32>
    %57 = vector.shape_cast %56 : vector<1x24x32xf32> to vector<24x32xf32>
    %58 = arith.truncf %57 : vector<24x32xf32> to vector<24x32xbf16>
    %c0_38 = arith.constant 0 : index
    %c2_39 = arith.constant 2 : index
    %c0_40 = arith.constant 0 : index
    %c0_41 = arith.constant 0 : index
    %59 = vector.load %arg2[%c0_38, %c2_39, %c0_40, %c0_41] : memref<2x5x32x96xbf16, #tpu.memory_space<vmem>>, vector<1x1x32x96xbf16>
    %60 = vector.shape_cast %59 : vector<1x1x32x96xbf16> to vector<32x96xbf16>
    %cst_42 = arith.constant dense<0.000000e+00> : vector<24x96xf32>
    %61 = tpu.matmul %58, %60, %cst_42 {dimension_numbers = #tpu.dot_dimension_numbers<[1], [0], [0], [1], [0, 0, 1, 1], [], []>} : vector<24x32xbf16>, vector<32x96xbf16>, vector<24x96xf32> -> vector<24x96xf32>
    %62 = arith.addf %51, %61 : vector<24x96xf32>
    %c1_43 = arith.constant 1 : index
    %c2_44 = arith.constant 2 : index
    %c0_45 = arith.constant 0 : index
    %c0_46 = arith.constant 0 : index
    %63 = vector.load %arg2[%c1_43, %c2_44, %c0_45, %c0_46] : memref<2x5x32x96xbf16, #tpu.memory_space<vmem>>, vector<1x1x32x96xbf16>
    %64 = vector.shape_cast %63 : vector<1x1x32x96xbf16> to vector<32x96xbf16>
    %cst_47 = arith.constant dense<0.000000e+00> : vector<24x96xf32>
    %65 = tpu.matmul %58, %64, %cst_47 {dimension_numbers = #tpu.dot_dimension_numbers<[1], [0], [0], [1], [0, 0, 1, 1], [], []>} : vector<24x32xbf16>, vector<32x96xbf16>, vector<24x96xf32> -> vector<24x96xf32>
    %66 = arith.addf %55, %65 : vector<24x96xf32>
    %c0_48 = arith.constant 0 : index
    %c3 = arith.constant 3 : index
    %c0_49 = arith.constant 0 : index
    %67 = vector.load %arg1[%c0_48, %c3, %c0_49] : memref<2x28x32xf32, #tpu.memory_space<vmem>>, vector<1x24x32xf32>
    %68 = vector.shape_cast %67 : vector<1x24x32xf32> to vector<24x32xf32>
    %69 = arith.truncf %68 : vector<24x32xf32> to vector<24x32xbf16>
    %c0_50 = arith.constant 0 : index
    %c3_51 = arith.constant 3 : index
    %c0_52 = arith.constant 0 : index
    %c0_53 = arith.constant 0 : index
    %70 = vector.load %arg2[%c0_50, %c3_51, %c0_52, %c0_53] : memref<2x5x32x96xbf16, #tpu.memory_space<vmem>>, vector<1x1x32x96xbf16>
    %71 = vector.shape_cast %70 : vector<1x1x32x96xbf16> to vector<32x96xbf16>
    %cst_54 = arith.constant dense<0.000000e+00> : vector<24x96xf32>
    %72 = tpu.matmul %69, %71, %cst_54 {dimension_numbers = #tpu.dot_dimension_numbers<[1], [0], [0], [1], [0, 0, 1, 1], [], []>} : vector<24x32xbf16>, vector<32x96xbf16>, vector<24x96xf32> -> vector<24x96xf32>
    %73 = arith.addf %62, %72 : vector<24x96xf32>
    %c1_55 = arith.constant 1 : index
    %c3_56 = arith.constant 3 : index
    %c0_57 = arith.constant 0 : index
    %c0_58 = arith.constant 0 : index
    %74 = vector.load %arg2[%c1_55, %c3_56, %c0_57, %c0_58] : memref<2x5x32x96xbf16, #tpu.memory_space<vmem>>, vector<1x1x32x96xbf16>
    %75 = vector.shape_cast %74 : vector<1x1x32x96xbf16> to vector<32x96xbf16>
    %cst_59 = arith.constant dense<0.000000e+00> : vector<24x96xf32>
    %76 = tpu.matmul %69, %75, %cst_59 {dimension_numbers = #tpu.dot_dimension_numbers<[1], [0], [0], [1], [0, 0, 1, 1], [], []>} : vector<24x32xbf16>, vector<32x96xbf16>, vector<24x96xf32> -> vector<24x96xf32>
    %77 = arith.addf %66, %76 : vector<24x96xf32>
    %c0_60 = arith.constant 0 : index
    %c4 = arith.constant 4 : index
    %c0_61 = arith.constant 0 : index
    %78 = vector.load %arg1[%c0_60, %c4, %c0_61] : memref<2x28x32xf32, #tpu.memory_space<vmem>>, vector<1x24x32xf32>
    %79 = vector.shape_cast %78 : vector<1x24x32xf32> to vector<24x32xf32>
    %80 = arith.truncf %79 : vector<24x32xf32> to vector<24x32xbf16>
    %c0_62 = arith.constant 0 : index
    %c4_63 = arith.constant 4 : index
    %c0_64 = arith.constant 0 : index
    %c0_65 = arith.constant 0 : index
    %81 = vector.load %arg2[%c0_62, %c4_63, %c0_64, %c0_65] : memref<2x5x32x96xbf16, #tpu.memory_space<vmem>>, vector<1x1x32x96xbf16>
    %82 = vector.shape_cast %81 : vector<1x1x32x96xbf16> to vector<32x96xbf16>
    %cst_66 = arith.constant dense<0.000000e+00> : vector<24x96xf32>
    %83 = tpu.matmul %80, %82, %cst_66 {dimension_numbers = #tpu.dot_dimension_numbers<[1], [0], [0], [1], [0, 0, 1, 1], [], []>} : vector<24x32xbf16>, vector<32x96xbf16>, vector<24x96xf32> -> vector<24x96xf32>
    %84 = arith.addf %73, %83 : vector<24x96xf32>
    %c1_67 = arith.constant 1 : index
    %c4_68 = arith.constant 4 : index
    %c0_69 = arith.constant 0 : index
    %c0_70 = arith.constant 0 : index
    %85 = vector.load %arg2[%c1_67, %c4_68, %c0_69, %c0_70] : memref<2x5x32x96xbf16, #tpu.memory_space<vmem>>, vector<1x1x32x96xbf16>
    %86 = vector.shape_cast %85 : vector<1x1x32x96xbf16> to vector<32x96xbf16>
    %cst_71 = arith.constant dense<0.000000e+00> : vector<24x96xf32>
    %87 = tpu.matmul %80, %86, %cst_71 {dimension_numbers = #tpu.dot_dimension_numbers<[1], [0], [0], [1], [0, 0, 1, 1], [], []>} : vector<24x32xbf16>, vector<32x96xbf16>, vector<24x96xf32> -> vector<24x96xf32>
    %88 = arith.addf %77, %87 : vector<24x96xf32>
    %89 = vector.broadcast %28 : vector<1x96xf32> to vector<24x96xf32>
    %90 = arith.addf %84, %89 : vector<24x96xf32>
    %cst_72 = arith.constant 0.000000e+00 : f32
    %91 = vector.broadcast %cst_72 : f32 to vector<24x96xf32>
    %92 = arith.maximumf %90, %91 : vector<24x96xf32>
    %93 = vector.broadcast %28 : vector<1x96xf32> to vector<24x96xf32>
    %94 = arith.addf %88, %93 : vector<24x96xf32>
    %cst_73 = arith.constant 0.000000e+00 : f32
    %95 = vector.broadcast %cst_73 : f32 to vector<24x96xf32>
    %96 = arith.maximumf %94, %95 : vector<24x96xf32>
    %97 = arith.maximumf %92, %96 : vector<24x96xf32>
    %cst_74 = arith.constant dense<0.000000e+00> : vector<12x96xf32>
    %98 = tpu.matmul %6, %97, %cst_74 {dimension_numbers = #tpu.dot_dimension_numbers<[1], [0], [0], [1], [0, 0, 1, 1], [], []>} : vector<12x24xf32>, vector<24x96xf32>, vector<12x96xf32> -> vector<12x96xf32>
    %cst_75 = arith.constant dense<0.000000e+00> : vector<12x96xf32>
    %99 = tpu.matmul %13, %97, %cst_75 {dimension_numbers = #tpu.dot_dimension_numbers<[1], [0], [0], [1], [0, 0, 1, 1], [], []>} : vector<12x24xf32>, vector<24x96xf32>, vector<12x96xf32> -> vector<12x96xf32>
    %100 = arith.maximumf %98, %99 : vector<12x96xf32>
    %c0_76 = arith.constant 0 : index
    %c0_77 = arith.constant 0 : index
    %101 = vector.load %arg13[%c0_76, %c0_77] : memref<12x96xf32, #tpu.memory_space<vmem>>, vector<12x96xf32>
    tpu.vector_store %arg13[%c0_76, %c0_77], %100 {strides = array<i32>} : memref<12x96xf32, #tpu.memory_space<vmem>>, vector<12x96xf32>,
    %cst_78 = arith.constant 0.000000e+00 : f32
    %102 = vector.broadcast %cst_78 : f32 to vector<8x64xf32>
    %cst_79 = arith.constant 0.000000e+00 : f32
    %103 = vector.broadcast %cst_79 : f32 to vector<8x64xf32>
    %c0_80 = arith.constant 0 : index
    %c0_81 = arith.constant 0 : index
    %104 = vector.load %arg13[%c0_80, %c0_81] : memref<12x96xf32, #tpu.memory_space<vmem>>, vector<8x96xf32>
    %105 = arith.truncf %104 : vector<8x96xf32> to vector<8x96xbf16>
    %c0_82 = arith.constant 0 : index
    %c0_83 = arith.constant 0 : index
    %c0_84 = arith.constant 0 : index
    %c0_85 = arith.constant 0 : index
    %106 = vector.load %arg4[%c0_82, %c0_83, %c0_84, %c0_85] : memref<2x5x96x64xbf16, #tpu.memory_space<vmem>>, vector<1x1x96x64xbf16>
    %107 = vector.shape_cast %106 : vector<1x1x96x64xbf16> to vector<96x64xbf16>
    %cst_86 = arith.constant dense<0.000000e+00> : vector<8x64xf32>
    %108 = tpu.matmul %105, %107, %cst_86 {dimension_numbers = #tpu.dot_dimension_numbers<[1], [0], [0], [1], [0, 0, 1, 1], [], []>} : vector<8x96xbf16>, vector<96x64xbf16>, vector<8x64xf32> -> vector<8x64xf32>
    %109 = arith.addf %102, %108 : vector<8x64xf32>
    %c1_87 = arith.constant 1 : index
    %c0_88 = arith.constant 0 : index
    %c0_89 = arith.constant 0 : index
    %c0_90 = arith.constant 0 : index
    %110 = vector.load %arg4[%c1_87, %c0_88, %c0_89, %c0_90] : memref<2x5x96x64xbf16, #tpu.memory_space<vmem>>, vector<1x1x96x64xbf16>
    %111 = vector.shape_cast %110 : vector<1x1x96x64xbf16> to vector<96x64xbf16>
    %cst_91 = arith.constant dense<0.000000e+00> : vector<8x64xf32>
    %112 = tpu.matmul %105, %111, %cst_91 {dimension_numbers = #tpu.dot_dimension_numbers<[1], [0], [0], [1], [0, 0, 1, 1], [], []>} : vector<8x96xbf16>, vector<96x64xbf16>, vector<8x64xf32> -> vector<8x64xf32>
    %113 = arith.addf %103, %112 : vector<8x64xf32>
    %c1_92 = arith.constant 1 : index
    %c0_93 = arith.constant 0 : index
    %114 = vector.load %arg13[%c1_92, %c0_93] : memref<12x96xf32, #tpu.memory_space<vmem>>, vector<8x96xf32>
    %115 = arith.truncf %114 : vector<8x96xf32> to vector<8x96xbf16>
    %c0_94 = arith.constant 0 : index
    %c1_95 = arith.constant 1 : index
    %c0_96 = arith.constant 0 : index
    %c0_97 = arith.constant 0 : index
    %116 = vector.load %arg4[%c0_94, %c1_95, %c0_96, %c0_97] : memref<2x5x96x64xbf16, #tpu.memory_space<vmem>>, vector<1x1x96x64xbf16>
    %117 = vector.shape_cast %116 : vector<1x1x96x64xbf16> to vector<96x64xbf16>
    %cst_98 = arith.constant dense<0.000000e+00> : vector<8x64xf32>
    %118 = tpu.matmul %115, %117, %cst_98 {dimension_numbers = #tpu.dot_dimension_numbers<[1], [0], [0], [1], [0, 0, 1, 1], [], []>} : vector<8x96xbf16>, vector<96x64xbf16>, vector<8x64xf32> -> vector<8x64xf32>
    %119 = arith.addf %109, %118 : vector<8x64xf32>
    %c1_99 = arith.constant 1 : index
    %c1_100 = arith.constant 1 : index
    %c0_101 = arith.constant 0 : index
    %c0_102 = arith.constant 0 : index
    %120 = vector.load %arg4[%c1_99, %c1_100, %c0_101, %c0_102] : memref<2x5x96x64xbf16, #tpu.memory_space<vmem>>, vector<1x1x96x64xbf16>
    %121 = vector.shape_cast %120 : vector<1x1x96x64xbf16> to vector<96x64xbf16>
    %cst_103 = arith.constant dense<0.000000e+00> : vector<8x64xf32>
    %122 = tpu.matmul %115, %121, %cst_103 {dimension_numbers = #tpu.dot_dimension_numbers<[1], [0], [0], [1], [0, 0, 1, 1], [], []>} : vector<8x96xbf16>, vector<96x64xbf16>, vector<8x64xf32> -> vector<8x64xf32>
    %123 = arith.addf %113, %122 : vector<8x64xf32>
    %c2_104 = arith.constant 2 : index
    %c0_105 = arith.constant 0 : index
    %124 = vector.load %arg13[%c2_104, %c0_105] : memref<12x96xf32, #tpu.memory_space<vmem>>, vector<8x96xf32>
    %125 = arith.truncf %124 : vector<8x96xf32> to vector<8x96xbf16>
    %c0_106 = arith.constant 0 : index
    %c2_107 = arith.constant 2 : index
    %c0_108 = arith.constant 0 : index
    %c0_109 = arith.constant 0 : index
    %126 = vector.load %arg4[%c0_106, %c2_107, %c0_108, %c0_109] : memref<2x5x96x64xbf16, #tpu.memory_space<vmem>>, vector<1x1x96x64xbf16>
    %127 = vector.shape_cast %126 : vector<1x1x96x64xbf16> to vector<96x64xbf16>
    %cst_110 = arith.constant dense<0.000000e+00> : vector<8x64xf32>
    %128 = tpu.matmul %125, %127, %cst_110 {dimension_numbers = #tpu.dot_dimension_numbers<[1], [0], [0], [1], [0, 0, 1, 1], [], []>} : vector<8x96xbf16>, vector<96x64xbf16>, vector<8x64xf32> -> vector<8x64xf32>
    %129 = arith.addf %119, %128 : vector<8x64xf32>
    %c1_111 = arith.constant 1 : index
    %c2_112 = arith.constant 2 : index
    %c0_113 = arith.constant 0 : index
    %c0_114 = arith.constant 0 : index
    %130 = vector.load %arg4[%c1_111, %c2_112, %c0_113, %c0_114] : memref<2x5x96x64xbf16, #tpu.memory_space<vmem>>, vector<1x1x96x64xbf16>
    %131 = vector.shape_cast %130 : vector<1x1x96x64xbf16> to vector<96x64xbf16>
    %cst_115 = arith.constant dense<0.000000e+00> : vector<8x64xf32>
    %132 = tpu.matmul %125, %131, %cst_115 {dimension_numbers = #tpu.dot_dimension_numbers<[1], [0], [0], [1], [0, 0, 1, 1], [], []>} : vector<8x96xbf16>, vector<96x64xbf16>, vector<8x64xf32> -> vector<8x64xf32>
    %133 = arith.addf %123, %132 : vector<8x64xf32>
    %c3_116 = arith.constant 3 : index
    %c0_117 = arith.constant 0 : index
    %134 = vector.load %arg13[%c3_116, %c0_117] : memref<12x96xf32, #tpu.memory_space<vmem>>, vector<8x96xf32>
    %135 = arith.truncf %134 : vector<8x96xf32> to vector<8x96xbf16>
    %c0_118 = arith.constant 0 : index
    %c3_119 = arith.constant 3 : index
    %c0_120 = arith.constant 0 : index
    %c0_121 = arith.constant 0 : index
    %136 = vector.load %arg4[%c0_118, %c3_119, %c0_120, %c0_121] : memref<2x5x96x64xbf16, #tpu.memory_space<vmem>>, vector<1x1x96x64xbf16>
    %137 = vector.shape_cast %136 : vector<1x1x96x64xbf16> to vector<96x64xbf16>
    %cst_122 = arith.constant dense<0.000000e+00> : vector<8x64xf32>
    %138 = tpu.matmul %135, %137, %cst_122 {dimension_numbers = #tpu.dot_dimension_numbers<[1], [0], [0], [1], [0, 0, 1, 1], [], []>} : vector<8x96xbf16>, vector<96x64xbf16>, vector<8x64xf32> -> vector<8x64xf32>
    %139 = arith.addf %129, %138 : vector<8x64xf32>
    %c1_123 = arith.constant 1 : index
    %c3_124 = arith.constant 3 : index
    %c0_125 = arith.constant 0 : index
    %c0_126 = arith.constant 0 : index
    %140 = vector.load %arg4[%c1_123, %c3_124, %c0_125, %c0_126] : memref<2x5x96x64xbf16, #tpu.memory_space<vmem>>, vector<1x1x96x64xbf16>
    %141 = vector.shape_cast %140 : vector<1x1x96x64xbf16> to vector<96x64xbf16>
    %cst_127 = arith.constant dense<0.000000e+00> : vector<8x64xf32>
    %142 = tpu.matmul %135, %141, %cst_127 {dimension_numbers = #tpu.dot_dimension_numbers<[1], [0], [0], [1], [0, 0, 1, 1], [], []>} : vector<8x96xbf16>, vector<96x64xbf16>, vector<8x64xf32> -> vector<8x64xf32>
    %143 = arith.addf %133, %142 : vector<8x64xf32>
    %c4_128 = arith.constant 4 : index
    %c0_129 = arith.constant 0 : index
    %144 = vector.load %arg13[%c4_128, %c0_129] : memref<12x96xf32, #tpu.memory_space<vmem>>, vector<8x96xf32>
    %145 = arith.truncf %144 : vector<8x96xf32> to vector<8x96xbf16>
    %c0_130 = arith.constant 0 : index
    %c4_131 = arith.constant 4 : index
    %c0_132 = arith.constant 0 : index
    %c0_133 = arith.constant 0 : index
    %146 = vector.load %arg4[%c0_130, %c4_131, %c0_132, %c0_133] : memref<2x5x96x64xbf16, #tpu.memory_space<vmem>>, vector<1x1x96x64xbf16>
    %147 = vector.shape_cast %146 : vector<1x1x96x64xbf16> to vector<96x64xbf16>
    %cst_134 = arith.constant dense<0.000000e+00> : vector<8x64xf32>
    %148 = tpu.matmul %145, %147, %cst_134 {dimension_numbers = #tpu.dot_dimension_numbers<[1], [0], [0], [1], [0, 0, 1, 1], [], []>} : vector<8x96xbf16>, vector<96x64xbf16>, vector<8x64xf32> -> vector<8x64xf32>
    %149 = arith.addf %139, %148 : vector<8x64xf32>
    %c1_135 = arith.constant 1 : index
    %c4_136 = arith.constant 4 : index
    %c0_137 = arith.constant 0 : index
    %c0_138 = arith.constant 0 : index
    %150 = vector.load %arg4[%c1_135, %c4_136, %c0_137, %c0_138] : memref<2x5x96x64xbf16, #tpu.memory_space<vmem>>, vector<1x1x96x64xbf16>
    %151 = vector.shape_cast %150 : vector<1x1x96x64xbf16> to vector<96x64xbf16>
    %cst_139 = arith.constant dense<0.000000e+00> : vector<8x64xf32>
    %152 = tpu.matmul %145, %151, %cst_139 {dimension_numbers = #tpu.dot_dimension_numbers<[1], [0], [0], [1], [0, 0, 1, 1], [], []>} : vector<8x96xbf16>, vector<96x64xbf16>, vector<8x64xf32> -> vector<8x64xf32>
    %153 = arith.addf %143, %152 : vector<8x64xf32>
    %154 = vector.broadcast %29 : vector<1x64xf32> to vector<8x64xf32>
    %155 = arith.addf %149, %154 : vector<8x64xf32>
    %cst_140 = arith.constant 0.000000e+00 : f32
    %156 = vector.broadcast %cst_140 : f32 to vector<8x64xf32>
    %157 = arith.maximumf %155, %156 : vector<8x64xf32>
    %158 = vector.broadcast %29 : vector<1x64xf32> to vector<8x64xf32>
    %159 = arith.addf %153, %158 : vector<8x64xf32>
    %cst_141 = arith.constant 0.000000e+00 : f32
    %160 = vector.broadcast %cst_141 : f32 to vector<8x64xf32>
    %161 = arith.maximumf %159, %160 : vector<8x64xf32>
    %162 = arith.maximumf %157, %161 : vector<8x64xf32>
    %cst_142 = arith.constant dense<0.000000e+00> : vector<4x64xf32>
    %163 = tpu.matmul %20, %162, %cst_142 {dimension_numbers = #tpu.dot_dimension_numbers<[1], [0], [0], [1], [0, 0, 1, 1], [], []>} : vector<4x8xf32>, vector<8x64xf32>, vector<4x64xf32> -> vector<4x64xf32>
    %cst_143 = arith.constant dense<0.000000e+00> : vector<4x64xf32>
    %164 = tpu.matmul %27, %162, %cst_143 {dimension_numbers = #tpu.dot_dimension_numbers<[1], [0], [0], [1], [0, 0, 1, 1], [], []>} : vector<4x8xf32>, vector<8x64xf32>, vector<4x64xf32> -> vector<4x64xf32>
    %165 = arith.maximumf %163, %164 : vector<4x64xf32>
    %166 = vector.extract_strided_slice %165 {offsets = [0, 0], sizes = [1, 64], strides = [1, 1]} : vector<4x64xf32> to vector<1x64xf32>
    %c0_144 = arith.constant 0 : index
    %c0_145 = arith.constant 0 : index
    %167 = vector.load %arg14[%c0_144, %c0_145] : memref<8x256xf32, #tpu.memory_space<vmem>>, vector<1x64xf32>
    tpu.vector_store %arg14[%c0_144, %c0_145], %166 {strides = array<i32>} : memref<8x256xf32, #tpu.memory_space<vmem>>, vector<1x64xf32>,
    %168 = vector.extract_strided_slice %165 {offsets = [1, 0], sizes = [1, 64], strides = [1, 1]} : vector<4x64xf32> to vector<1x64xf32>
    %c0_146 = arith.constant 0 : index
    %c64 = arith.constant 64 : index
    %169 = vector.load %arg14[%c0_146, %c64] : memref<8x256xf32, #tpu.memory_space<vmem>>, vector<1x64xf32>
    tpu.vector_store %arg14[%c0_146, %c64], %168 {strides = array<i32>} : memref<8x256xf32, #tpu.memory_space<vmem>>, vector<1x64xf32>,
    %170 = vector.extract_strided_slice %165 {offsets = [2, 0], sizes = [1, 64], strides = [1, 1]} : vector<4x64xf32> to vector<1x64xf32>
    %c0_147 = arith.constant 0 : index
    %c128 = arith.constant 128 : index
    %171 = vector.load %arg14[%c0_147, %c128] : memref<8x256xf32, #tpu.memory_space<vmem>>, vector<1x64xf32>
    tpu.vector_store %arg14[%c0_147, %c128], %170 {strides = array<i32>} : memref<8x256xf32, #tpu.memory_space<vmem>>, vector<1x64xf32>,
    %172 = vector.extract_strided_slice %165 {offsets = [3, 0], sizes = [1, 64], strides = [1, 1]} : vector<4x64xf32> to vector<1x64xf32>
    %c0_148 = arith.constant 0 : index
    %c192 = arith.constant 192 : index
    %173 = vector.load %arg14[%c0_148, %c192] : memref<8x256xf32, #tpu.memory_space<vmem>>, vector<1x64xf32>
    tpu.vector_store %arg14[%c0_148, %c192], %172 {strides = array<i32>} : memref<8x256xf32, #tpu.memory_space<vmem>>, vector<1x64xf32>,
    %cst_149 = arith.constant 0.000000e+00 : f32
    %174 = vector.broadcast %cst_149 : f32 to vector<24x96xf32>
    %cst_150 = arith.constant 0.000000e+00 : f32
    %175 = vector.broadcast %cst_150 : f32 to vector<24x96xf32>
    %c1_151 = arith.constant 1 : index
    %c0_152 = arith.constant 0 : index
    %c0_153 = arith.constant 0 : index
    %176 = vector.load %arg1[%c1_151, %c0_152, %c0_153] : memref<2x28x32xf32, #tpu.memory_space<vmem>>, vector<1x24x32xf32>
    %177 = vector.shape_cast %176 : vector<1x24x32xf32> to vector<24x32xf32>
    %178 = arith.truncf %177 : vector<24x32xf32> to vector<24x32xbf16>
    %c0_154 = arith.constant 0 : index
    %c0_155 = arith.constant 0 : index
    %c0_156 = arith.constant 0 : index
    %c0_157 = arith.constant 0 : index
    %179 = vector.load %arg2[%c0_154, %c0_155, %c0_156, %c0_157] : memref<2x5x32x96xbf16, #tpu.memory_space<vmem>>, vector<1x1x32x96xbf16>
    %180 = vector.shape_cast %179 : vector<1x1x32x96xbf16> to vector<32x96xbf16>
    %cst_158 = arith.constant dense<0.000000e+00> : vector<24x96xf32>
    %181 = tpu.matmul %178, %180, %cst_158 {dimension_numbers = #tpu.dot_dimension_numbers<[1], [0], [0], [1], [0, 0, 1, 1], [], []>} : vector<24x32xbf16>, vector<32x96xbf16>, vector<24x96xf32> -> vector<24x96xf32>
    %182 = arith.addf %174, %181 : vector<24x96xf32>
    %c1_159 = arith.constant 1 : index
    %c0_160 = arith.constant 0 : index
    %c0_161 = arith.constant 0 : index
    %c0_162 = arith.constant 0 : index
    %183 = vector.load %arg2[%c1_159, %c0_160, %c0_161, %c0_162] : memref<2x5x32x96xbf16, #tpu.memory_space<vmem>>, vector<1x1x32x96xbf16>
    %184 = vector.shape_cast %183 : vector<1x1x32x96xbf16> to vector<32x96xbf16>
    %cst_163 = arith.constant dense<0.000000e+00> : vector<24x96xf32>
    %185 = tpu.matmul %178, %184, %cst_163 {dimension_numbers = #tpu.dot_dimension_numbers<[1], [0], [0], [1], [0, 0, 1, 1], [], []>} : vector<24x32xbf16>, vector<32x96xbf16>, vector<24x96xf32> -> vector<24x96xf32>
    %186 = arith.addf %175, %185 : vector<24x96xf32>
    %c1_164 = arith.constant 1 : index
    %c1_165 = arith.constant 1 : index
    %c0_166 = arith.constant 0 : index
    %187 = vector.load %arg1[%c1_164, %c1_165, %c0_166] : memref<2x28x32xf32, #tpu.memory_space<vmem>>, vector<1x24x32xf32>
    %188 = vector.shape_cast %187 : vector<1x24x32xf32> to vector<24x32xf32>
    %189 = arith.truncf %188 : vector<24x32xf32> to vector<24x32xbf16>
    %c0_167 = arith.constant 0 : index
    %c1_168 = arith.constant 1 : index
    %c0_169 = arith.constant 0 : index
    %c0_170 = arith.constant 0 : index
    %190 = vector.load %arg2[%c0_167, %c1_168, %c0_169, %c0_170] : memref<2x5x32x96xbf16, #tpu.memory_space<vmem>>, vector<1x1x32x96xbf16>
    %191 = vector.shape_cast %190 : vector<1x1x32x96xbf16> to vector<32x96xbf16>
    %cst_171 = arith.constant dense<0.000000e+00> : vector<24x96xf32>
    %192 = tpu.matmul %189, %191, %cst_171 {dimension_numbers = #tpu.dot_dimension_numbers<[1], [0], [0], [1], [0, 0, 1, 1], [], []>} : vector<24x32xbf16>, vector<32x96xbf16>, vector<24x96xf32> -> vector<24x96xf32>
    %193 = arith.addf %182, %192 : vector<24x96xf32>
    %c1_172 = arith.constant 1 : index
    %c1_173 = arith.constant 1 : index
    %c0_174 = arith.constant 0 : index
    %c0_175 = arith.constant 0 : index
    %194 = vector.load %arg2[%c1_172, %c1_173, %c0_174, %c0_175] : memref<2x5x32x96xbf16, #tpu.memory_space<vmem>>, vector<1x1x32x96xbf16>
    %195 = vector.shape_cast %194 : vector<1x1x32x96xbf16> to vector<32x96xbf16>
    %cst_176 = arith.constant dense<0.000000e+00> : vector<24x96xf32>
    %196 = tpu.matmul %189, %195, %cst_176 {dimension_numbers = #tpu.dot_dimension_numbers<[1], [0], [0], [1], [0, 0, 1, 1], [], []>} : vector<24x32xbf16>, vector<32x96xbf16>, vector<24x96xf32> -> vector<24x96xf32>
    %197 = arith.addf %186, %196 : vector<24x96xf32>
    %c1_177 = arith.constant 1 : index
    %c2_178 = arith.constant 2 : index
    %c0_179 = arith.constant 0 : index
    %198 = vector.load %arg1[%c1_177, %c2_178, %c0_179] : memref<2x28x32xf32, #tpu.memory_space<vmem>>, vector<1x24x32xf32>
    %199 = vector.shape_cast %198 : vector<1x24x32xf32> to vector<24x32xf32>
    %200 = arith.truncf %199 : vector<24x32xf32> to vector<24x32xbf16>
    %c0_180 = arith.constant 0 : index
    %c2_181 = arith.constant 2 : index
    %c0_182 = arith.constant 0 : index
    %c0_183 = arith.constant 0 : index
    %201 = vector.load %arg2[%c0_180, %c2_181, %c0_182, %c0_183] : memref<2x5x32x96xbf16, #tpu.memory_space<vmem>>, vector<1x1x32x96xbf16>
    %202 = vector.shape_cast %201 : vector<1x1x32x96xbf16> to vector<32x96xbf16>
    %cst_184 = arith.constant dense<0.000000e+00> : vector<24x96xf32>
    %203 = tpu.matmul %200, %202, %cst_184 {dimension_numbers = #tpu.dot_dimension_numbers<[1], [0], [0], [1], [0, 0, 1, 1], [], []>} : vector<24x32xbf16>, vector<32x96xbf16>, vector<24x96xf32> -> vector<24x96xf32>
    %204 = arith.addf %193, %203 : vector<24x96xf32>
    %c1_185 = arith.constant 1 : index
    %c2_186 = arith.constant 2 : index
    %c0_187 = arith.constant 0 : index
    %c0_188 = arith.constant 0 : index
    %205 = vector.load %arg2[%c1_185, %c2_186, %c0_187, %c0_188] : memref<2x5x32x96xbf16, #tpu.memory_space<vmem>>, vector<1x1x32x96xbf16>
    %206 = vector.shape_cast %205 : vector<1x1x32x96xbf16> to vector<32x96xbf16>
    %cst_189 = arith.constant dense<0.000000e+00> : vector<24x96xf32>
    %207 = tpu.matmul %200, %206, %cst_189 {dimension_numbers = #tpu.dot_dimension_numbers<[1], [0], [0], [1], [0, 0, 1, 1], [], []>} : vector<24x32xbf16>, vector<32x96xbf16>, vector<24x96xf32> -> vector<24x96xf32>
    %208 = arith.addf %197, %207 : vector<24x96xf32>
    %c1_190 = arith.constant 1 : index
    %c3_191 = arith.constant 3 : index
    %c0_192 = arith.constant 0 : index
    %209 = vector.load %arg1[%c1_190, %c3_191, %c0_192] : memref<2x28x32xf32, #tpu.memory_space<vmem>>, vector<1x24x32xf32>
    %210 = vector.shape_cast %209 : vector<1x24x32xf32> to vector<24x32xf32>
    %211 = arith.truncf %210 : vector<24x32xf32> to vector<24x32xbf16>
    %c0_193 = arith.constant 0 : index
    %c3_194 = arith.constant 3 : index
    %c0_195 = arith.constant 0 : index
    %c0_196 = arith.constant 0 : index
    %212 = vector.load %arg2[%c0_193, %c3_194, %c0_195, %c0_196] : memref<2x5x32x96xbf16, #tpu.memory_space<vmem>>, vector<1x1x32x96xbf16>
    %213 = vector.shape_cast %212 : vector<1x1x32x96xbf16> to vector<32x96xbf16>
    %cst_197 = arith.constant dense<0.000000e+00> : vector<24x96xf32>
    %214 = tpu.matmul %211, %213, %cst_197 {dimension_numbers = #tpu.dot_dimension_numbers<[1], [0], [0], [1], [0, 0, 1, 1], [], []>} : vector<24x32xbf16>, vector<32x96xbf16>, vector<24x96xf32> -> vector<24x96xf32>
    %215 = arith.addf %204, %214 : vector<24x96xf32>
    %c1_198 = arith.constant 1 : index
    %c3_199 = arith.constant 3 : index
    %c0_200 = arith.constant 0 : index
    %c0_201 = arith.constant 0 : index
    %216 = vector.load %arg2[%c1_198, %c3_199, %c0_200, %c0_201] : memref<2x5x32x96xbf16, #tpu.memory_space<vmem>>, vector<1x1x32x96xbf16>
    %217 = vector.shape_cast %216 : vector<1x1x32x96xbf16> to vector<32x96xbf16>
    %cst_202 = arith.constant dense<0.000000e+00> : vector<24x96xf32>
    %218 = tpu.matmul %211, %217, %cst_202 {dimension_numbers = #tpu.dot_dimension_numbers<[1], [0], [0], [1], [0, 0, 1, 1], [], []>} : vector<24x32xbf16>, vector<32x96xbf16>, vector<24x96xf32> -> vector<24x96xf32>
    %219 = arith.addf %208, %218 : vector<24x96xf32>
    %c1_203 = arith.constant 1 : index
    %c4_204 = arith.constant 4 : index
    %c0_205 = arith.constant 0 : index
    %220 = vector.load %arg1[%c1_203, %c4_204, %c0_205] : memref<2x28x32xf32, #tpu.memory_space<vmem>>, vector<1x24x32xf32>
    %221 = vector.shape_cast %220 : vector<1x24x32xf32> to vector<24x32xf32>
    %222 = arith.truncf %221 : vector<24x32xf32> to vector<24x32xbf16>
    %c0_206 = arith.constant 0 : index
    %c4_207 = arith.constant 4 : index
    %c0_208 = arith.constant 0 : index
    %c0_209 = arith.constant 0 : index
    %223 = vector.load %arg2[%c0_206, %c4_207, %c0_208, %c0_209] : memref<2x5x32x96xbf16, #tpu.memory_space<vmem>>, vector<1x1x32x96xbf16>
    %224 = vector.shape_cast %223 : vector<1x1x32x96xbf16> to vector<32x96xbf16>
    %cst_210 = arith.constant dense<0.000000e+00> : vector<24x96xf32>
    %225 = tpu.matmul %222, %224, %cst_210 {dimension_numbers = #tpu.dot_dimension_numbers<[1], [0], [0], [1], [0, 0, 1, 1], [], []>} : vector<24x32xbf16>, vector<32x96xbf16>, vector<24x96xf32> -> vector<24x96xf32>
    %226 = arith.addf %215, %225 : vector<24x96xf32>
    %c1_211 = arith.constant 1 : index
    %c4_212 = arith.constant 4 : index
    %c0_213 = arith.constant 0 : index
    %c0_214 = arith.constant 0 : index
    %227 = vector.load %arg2[%c1_211, %c4_212, %c0_213, %c0_214] : memref<2x5x32x96xbf16, #tpu.memory_space<vmem>>, vector<1x1x32x96xbf16>
    %228 = vector.shape_cast %227 : vector<1x1x32x96xbf16> to vector<32x96xbf16>
    %cst_215 = arith.constant dense<0.000000e+00> : vector<24x96xf32>
    %229 = tpu.matmul %222, %228, %cst_215 {dimension_numbers = #tpu.dot_dimension_numbers<[1], [0], [0], [1], [0, 0, 1, 1], [], []>} : vector<24x32xbf16>, vector<32x96xbf16>, vector<24x96xf32> -> vector<24x96xf32>
    %230 = arith.addf %219, %229 : vector<24x96xf32>
    %231 = vector.broadcast %28 : vector<1x96xf32> to vector<24x96xf32>
    %232 = arith.addf %226, %231 : vector<24x96xf32>
    %cst_216 = arith.constant 0.000000e+00 : f32
    %233 = vector.broadcast %cst_216 : f32 to vector<24x96xf32>
    %234 = arith.maximumf %232, %233 : vector<24x96xf32>
    %235 = vector.broadcast %28 : vector<1x96xf32> to vector<24x96xf32>
    %236 = arith.addf %230, %235 : vector<24x96xf32>
    %cst_217 = arith.constant 0.000000e+00 : f32
    %237 = vector.broadcast %cst_217 : f32 to vector<24x96xf32>
    %238 = arith.maximumf %236, %237 : vector<24x96xf32>
    %239 = arith.maximumf %234, %238 : vector<24x96xf32>
    %cst_218 = arith.constant dense<0.000000e+00> : vector<12x96xf32>
    %240 = tpu.matmul %6, %239, %cst_218 {dimension_numbers = #tpu.dot_dimension_numbers<[1], [0], [0], [1], [0, 0, 1, 1], [], []>} : vector<12x24xf32>, vector<24x96xf32>, vector<12x96xf32> -> vector<12x96xf32>
    %cst_219 = arith.constant dense<0.000000e+00> : vector<12x96xf32>
    %241 = tpu.matmul %13, %239, %cst_219 {dimension_numbers = #tpu.dot_dimension_numbers<[1], [0], [0], [1], [0, 0, 1, 1], [], []>} : vector<12x24xf32>, vector<24x96xf32>, vector<12x96xf32> -> vector<12x96xf32>
    %242 = arith.maximumf %240, %241 : vector<12x96xf32>
    %c0_220 = arith.constant 0 : index
    %c0_221 = arith.constant 0 : index
    %243 = vector.load %arg13[%c0_220, %c0_221] : memref<12x96xf32, #tpu.memory_space<vmem>>, vector<12x96xf32>
    tpu.vector_store %arg13[%c0_220, %c0_221], %242 {strides = array<i32>} : memref<12x96xf32, #tpu.memory_space<vmem>>, vector<12x96xf32>,
    %cst_222 = arith.constant 0.000000e+00 : f32
    %244 = vector.broadcast %cst_222 : f32 to vector<8x64xf32>
    %cst_223 = arith.constant 0.000000e+00 : f32
    %245 = vector.broadcast %cst_223 : f32 to vector<8x64xf32>
    %c0_224 = arith.constant 0 : index
    %c0_225 = arith.constant 0 : index
    %246 = vector.load %arg13[%c0_224, %c0_225] : memref<12x96xf32, #tpu.memory_space<vmem>>, vector<8x96xf32>
    %247 = arith.truncf %246 : vector<8x96xf32> to vector<8x96xbf16>
    %c0_226 = arith.constant 0 : index
    %c0_227 = arith.constant 0 : index
    %c0_228 = arith.constant 0 : index
    %c0_229 = arith.constant 0 : index
    %248 = vector.load %arg4[%c0_226, %c0_227, %c0_228, %c0_229] : memref<2x5x96x64xbf16, #tpu.memory_space<vmem>>, vector<1x1x96x64xbf16>
    %249 = vector.shape_cast %248 : vector<1x1x96x64xbf16> to vector<96x64xbf16>
    %cst_230 = arith.constant dense<0.000000e+00> : vector<8x64xf32>
    %250 = tpu.matmul %247, %249, %cst_230 {dimension_numbers = #tpu.dot_dimension_numbers<[1], [0], [0], [1], [0, 0, 1, 1], [], []>} : vector<8x96xbf16>, vector<96x64xbf16>, vector<8x64xf32> -> vector<8x64xf32>
    %251 = arith.addf %244, %250 : vector<8x64xf32>
    %c1_231 = arith.constant 1 : index
    %c0_232 = arith.constant 0 : index
    %c0_233 = arith.constant 0 : index
    %c0_234 = arith.constant 0 : index
    %252 = vector.load %arg4[%c1_231, %c0_232, %c0_233, %c0_234] : memref<2x5x96x64xbf16, #tpu.memory_space<vmem>>, vector<1x1x96x64xbf16>
    %253 = vector.shape_cast %252 : vector<1x1x96x64xbf16> to vector<96x64xbf16>
    %cst_235 = arith.constant dense<0.000000e+00> : vector<8x64xf32>
    %254 = tpu.matmul %247, %253, %cst_235 {dimension_numbers = #tpu.dot_dimension_numbers<[1], [0], [0], [1], [0, 0, 1, 1], [], []>} : vector<8x96xbf16>, vector<96x64xbf16>, vector<8x64xf32> -> vector<8x64xf32>
    %255 = arith.addf %245, %254 : vector<8x64xf32>
    %c1_236 = arith.constant 1 : index
    %c0_237 = arith.constant 0 : index
    %256 = vector.load %arg13[%c1_236, %c0_237] : memref<12x96xf32, #tpu.memory_space<vmem>>, vector<8x96xf32>
    %257 = arith.truncf %256 : vector<8x96xf32> to vector<8x96xbf16>
    %c0_238 = arith.constant 0 : index
    %c1_239 = arith.constant 1 : index
    %c0_240 = arith.constant 0 : index
    %c0_241 = arith.constant 0 : index
    %258 = vector.load %arg4[%c0_238, %c1_239, %c0_240, %c0_241] : memref<2x5x96x64xbf16, #tpu.memory_space<vmem>>, vector<1x1x96x64xbf16>
    %259 = vector.shape_cast %258 : vector<1x1x96x64xbf16> to vector<96x64xbf16>
    %cst_242 = arith.constant dense<0.000000e+00> : vector<8x64xf32>
    %260 = tpu.matmul %257, %259, %cst_242 {dimension_numbers = #tpu.dot_dimension_numbers<[1], [0], [0], [1], [0, 0, 1, 1], [], []>} : vector<8x96xbf16>, vector<96x64xbf16>, vector<8x64xf32> -> vector<8x64xf32>
    %261 = arith.addf %251, %260 : vector<8x64xf32>
    %c1_243 = arith.constant 1 : index
    %c1_244 = arith.constant 1 : index
    %c0_245 = arith.constant 0 : index
    %c0_246 = arith.constant 0 : index
    %262 = vector.load %arg4[%c1_243, %c1_244, %c0_245, %c0_246] : memref<2x5x96x64xbf16, #tpu.memory_space<vmem>>, vector<1x1x96x64xbf16>
    %263 = vector.shape_cast %262 : vector<1x1x96x64xbf16> to vector<96x64xbf16>
    %cst_247 = arith.constant dense<0.000000e+00> : vector<8x64xf32>
    %264 = tpu.matmul %257, %263, %cst_247 {dimension_numbers = #tpu.dot_dimension_numbers<[1], [0], [0], [1], [0, 0, 1, 1], [], []>} : vector<8x96xbf16>, vector<96x64xbf16>, vector<8x64xf32> -> vector<8x64xf32>
    %265 = arith.addf %255, %264 : vector<8x64xf32>
    %c2_248 = arith.constant 2 : index
    %c0_249 = arith.constant 0 : index
    %266 = vector.load %arg13[%c2_248, %c0_249] : memref<12x96xf32, #tpu.memory_space<vmem>>, vector<8x96xf32>
    %267 = arith.truncf %266 : vector<8x96xf32> to vector<8x96xbf16>
    %c0_250 = arith.constant 0 : index
    %c2_251 = arith.constant 2 : index
    %c0_252 = arith.constant 0 : index
    %c0_253 = arith.constant 0 : index
    %268 = vector.load %arg4[%c0_250, %c2_251, %c0_252, %c0_253] : memref<2x5x96x64xbf16, #tpu.memory_space<vmem>>, vector<1x1x96x64xbf16>
    %269 = vector.shape_cast %268 : vector<1x1x96x64xbf16> to vector<96x64xbf16>
    %cst_254 = arith.constant dense<0.000000e+00> : vector<8x64xf32>
    %270 = tpu.matmul %267, %269, %cst_254 {dimension_numbers = #tpu.dot_dimension_numbers<[1], [0], [0], [1], [0, 0, 1, 1], [], []>} : vector<8x96xbf16>, vector<96x64xbf16>, vector<8x64xf32> -> vector<8x64xf32>
    %271 = arith.addf %261, %270 : vector<8x64xf32>
    %c1_255 = arith.constant 1 : index
    %c2_256 = arith.constant 2 : index
    %c0_257 = arith.constant 0 : index
    %c0_258 = arith.constant 0 : index
    %272 = vector.load %arg4[%c1_255, %c2_256, %c0_257, %c0_258] : memref<2x5x96x64xbf16, #tpu.memory_space<vmem>>, vector<1x1x96x64xbf16>
    %273 = vector.shape_cast %272 : vector<1x1x96x64xbf16> to vector<96x64xbf16>
    %cst_259 = arith.constant dense<0.000000e+00> : vector<8x64xf32>
    %274 = tpu.matmul %267, %273, %cst_259 {dimension_numbers = #tpu.dot_dimension_numbers<[1], [0], [0], [1], [0, 0, 1, 1], [], []>} : vector<8x96xbf16>, vector<96x64xbf16>, vector<8x64xf32> -> vector<8x64xf32>
    %275 = arith.addf %265, %274 : vector<8x64xf32>
    %c3_260 = arith.constant 3 : index
    %c0_261 = arith.constant 0 : index
    %276 = vector.load %arg13[%c3_260, %c0_261] : memref<12x96xf32, #tpu.memory_space<vmem>>, vector<8x96xf32>
    %277 = arith.truncf %276 : vector<8x96xf32> to vector<8x96xbf16>
    %c0_262 = arith.constant 0 : index
    %c3_263 = arith.constant 3 : index
    %c0_264 = arith.constant 0 : index
    %c0_265 = arith.constant 0 : index
    %278 = vector.load %arg4[%c0_262, %c3_263, %c0_264, %c0_265] : memref<2x5x96x64xbf16, #tpu.memory_space<vmem>>, vector<1x1x96x64xbf16>
    %279 = vector.shape_cast %278 : vector<1x1x96x64xbf16> to vector<96x64xbf16>
    %cst_266 = arith.constant dense<0.000000e+00> : vector<8x64xf32>
    %280 = tpu.matmul %277, %279, %cst_266 {dimension_numbers = #tpu.dot_dimension_numbers<[1], [0], [0], [1], [0, 0, 1, 1], [], []>} : vector<8x96xbf16>, vector<96x64xbf16>, vector<8x64xf32> -> vector<8x64xf32>
    %281 = arith.addf %271, %280 : vector<8x64xf32>
    %c1_267 = arith.constant 1 : index
    %c3_268 = arith.constant 3 : index
    %c0_269 = arith.constant 0 : index
    %c0_270 = arith.constant 0 : index
    %282 = vector.load %arg4[%c1_267, %c3_268, %c0_269, %c0_270] : memref<2x5x96x64xbf16, #tpu.memory_space<vmem>>, vector<1x1x96x64xbf16>
    %283 = vector.shape_cast %282 : vector<1x1x96x64xbf16> to vector<96x64xbf16>
    %cst_271 = arith.constant dense<0.000000e+00> : vector<8x64xf32>
    %284 = tpu.matmul %277, %283, %cst_271 {dimension_numbers = #tpu.dot_dimension_numbers<[1], [0], [0], [1], [0, 0, 1, 1], [], []>} : vector<8x96xbf16>, vector<96x64xbf16>, vector<8x64xf32> -> vector<8x64xf32>
    %285 = arith.addf %275, %284 : vector<8x64xf32>
    %c4_272 = arith.constant 4 : index
    %c0_273 = arith.constant 0 : index
    %286 = vector.load %arg13[%c4_272, %c0_273] : memref<12x96xf32, #tpu.memory_space<vmem>>, vector<8x96xf32>
    %287 = arith.truncf %286 : vector<8x96xf32> to vector<8x96xbf16>
    %c0_274 = arith.constant 0 : index
    %c4_275 = arith.constant 4 : index
    %c0_276 = arith.constant 0 : index
    %c0_277 = arith.constant 0 : index
    %288 = vector.load %arg4[%c0_274, %c4_275, %c0_276, %c0_277] : memref<2x5x96x64xbf16, #tpu.memory_space<vmem>>, vector<1x1x96x64xbf16>
    %289 = vector.shape_cast %288 : vector<1x1x96x64xbf16> to vector<96x64xbf16>
    %cst_278 = arith.constant dense<0.000000e+00> : vector<8x64xf32>
    %290 = tpu.matmul %287, %289, %cst_278 {dimension_numbers = #tpu.dot_dimension_numbers<[1], [0], [0], [1], [0, 0, 1, 1], [], []>} : vector<8x96xbf16>, vector<96x64xbf16>, vector<8x64xf32> -> vector<8x64xf32>
    %291 = arith.addf %281, %290 : vector<8x64xf32>
    %c1_279 = arith.constant 1 : index
    %c4_280 = arith.constant 4 : index
    %c0_281 = arith.constant 0 : index
    %c0_282 = arith.constant 0 : index
    %292 = vector.load %arg4[%c1_279, %c4_280, %c0_281, %c0_282] : memref<2x5x96x64xbf16, #tpu.memory_space<vmem>>, vector<1x1x96x64xbf16>
    %293 = vector.shape_cast %292 : vector<1x1x96x64xbf16> to vector<96x64xbf16>
    %cst_283 = arith.constant dense<0.000000e+00> : vector<8x64xf32>
    %294 = tpu.matmul %287, %293, %cst_283 {dimension_numbers = #tpu.dot_dimension_numbers<[1], [0], [0], [1], [0, 0, 1, 1], [], []>} : vector<8x96xbf16>, vector<96x64xbf16>, vector<8x64xf32> -> vector<8x64xf32>
    %295 = arith.addf %285, %294 : vector<8x64xf32>
    %296 = vector.broadcast %29 : vector<1x64xf32> to vector<8x64xf32>
    %297 = arith.addf %291, %296 : vector<8x64xf32>
    %cst_284 = arith.constant 0.000000e+00 : f32
    %298 = vector.broadcast %cst_284 : f32 to vector<8x64xf32>
    %299 = arith.maximumf %297, %298 : vector<8x64xf32>
    %300 = vector.broadcast %29 : vector<1x64xf32> to vector<8x64xf32>
    %301 = arith.addf %295, %300 : vector<8x64xf32>
    %cst_285 = arith.constant 0.000000e+00 : f32
    %302 = vector.broadcast %cst_285 : f32 to vector<8x64xf32>
    %303 = arith.maximumf %301, %302 : vector<8x64xf32>
    %304 = arith.maximumf %299, %303 : vector<8x64xf32>
    %cst_286 = arith.constant dense<0.000000e+00> : vector<4x64xf32>
    %305 = tpu.matmul %20, %304, %cst_286 {dimension_numbers = #tpu.dot_dimension_numbers<[1], [0], [0], [1], [0, 0, 1, 1], [], []>} : vector<4x8xf32>, vector<8x64xf32>, vector<4x64xf32> -> vector<4x64xf32>
    %cst_287 = arith.constant dense<0.000000e+00> : vector<4x64xf32>
    %306 = tpu.matmul %27, %304, %cst_287 {dimension_numbers = #tpu.dot_dimension_numbers<[1], [0], [0], [1], [0, 0, 1, 1], [], []>} : vector<4x8xf32>, vector<8x64xf32>, vector<4x64xf32> -> vector<4x64xf32>
    %307 = arith.maximumf %305, %306 : vector<4x64xf32>
    %308 = vector.extract_strided_slice %307 {offsets = [0, 0], sizes = [1, 64], strides = [1, 1]} : vector<4x64xf32> to vector<1x64xf32>
    %c1_288 = arith.constant 1 : index
    %c0_289 = arith.constant 0 : index
    %309 = vector.load %arg14[%c1_288, %c0_289] : memref<8x256xf32, #tpu.memory_space<vmem>>, vector<1x64xf32>
    tpu.vector_store %arg14[%c1_288, %c0_289], %308 {strides = array<i32>} : memref<8x256xf32, #tpu.memory_space<vmem>>, vector<1x64xf32>,
    %310 = vector.extract_strided_slice %307 {offsets = [1, 0], sizes = [1, 64], strides = [1, 1]} : vector<4x64xf32> to vector<1x64xf32>
    %c1_290 = arith.constant 1 : index
    %c64_291 = arith.constant 64 : index
    %311 = vector.load %arg14[%c1_290, %c64_291] : memref<8x256xf32, #tpu.memory_space<vmem>>, vector<1x64xf32>
    tpu.vector_store %arg14[%c1_290, %c64_291], %310 {strides = array<i32>} : memref<8x256xf32, #tpu.memory_space<vmem>>, vector<1x64xf32>,
    %312 = vector.extract_strided_slice %307 {offsets = [2, 0], sizes = [1, 64], strides = [1, 1]} : vector<4x64xf32> to vector<1x64xf32>
    %c1_292 = arith.constant 1 : index
    %c128_293 = arith.constant 128 : index
    %313 = vector.load %arg14[%c1_292, %c128_293] : memref<8x256xf32, #tpu.memory_space<vmem>>, vector<1x64xf32>
    tpu.vector_store %arg14[%c1_292, %c128_293], %312 {strides = array<i32>} : memref<8x256xf32, #tpu.memory_space<vmem>>, vector<1x64xf32>,
    %314 = vector.extract_strided_slice %307 {offsets = [3, 0], sizes = [1, 64], strides = [1, 1]} : vector<4x64xf32> to vector<1x64xf32>
    %c1_294 = arith.constant 1 : index
    %c192_295 = arith.constant 192 : index
    %315 = vector.load %arg14[%c1_294, %c192_295] : memref<8x256xf32, #tpu.memory_space<vmem>>, vector<1x64xf32>
    tpu.vector_store %arg14[%c1_294, %c192_295], %314 {strides = array<i32>} : memref<8x256xf32, #tpu.memory_space<vmem>>, vector<1x64xf32>,
    %c0_296 = arith.constant 0 : index
    %c0_297 = arith.constant 0 : index
    %316 = vector.load %arg14[%c0_296, %c0_297] : memref<8x256xf32, #tpu.memory_space<vmem>>, vector<8x256xf32>
    %317 = arith.truncf %316 : vector<8x256xf32> to vector<8x256xbf16>
    %c0_298 = arith.constant 0 : index
    %c0_299 = arith.constant 0 : index
    %318 = vector.load %arg6[%c0_298, %c0_299] : memref<256x128xbf16, #tpu.memory_space<vmem>>, vector<256x128xbf16>
    %cst_300 = arith.constant dense<0.000000e+00> : vector<8x128xf32>
    %319 = tpu.matmul %317, %318, %cst_300 {dimension_numbers = #tpu.dot_dimension_numbers<[1], [0], [0], [1], [0, 0, 1, 1], [], []>} : vector<8x256xbf16>, vector<256x128xbf16>, vector<8x128xf32> -> vector<8x128xf32>
    %c0_301 = arith.constant 0 : index
    %c0_302 = arith.constant 0 : index
    %320 = vector.load %arg7[%c0_301, %c0_302] : memref<1x128xf32, #tpu.memory_space<vmem>>, vector<1x128xf32>
    %321 = vector.broadcast %320 : vector<1x128xf32> to vector<8x128xf32>
    %322 = arith.addf %319, %321 : vector<8x128xf32>
    %cst_303 = arith.constant 0.000000e+00 : f32
    %323 = vector.broadcast %cst_303 : f32 to vector<8x128xf32>
    %324 = arith.maximumf %322, %323 : vector<8x128xf32>
    %325 = arith.truncf %324 : vector<8x128xf32> to vector<8x128xbf16>
    %c0_304 = arith.constant 0 : index
    %c0_305 = arith.constant 0 : index
    %326 = vector.load %arg8[%c0_304, %c0_305] : memref<128x128xbf16, #tpu.memory_space<vmem>>, vector<128x128xbf16>
    %cst_306 = arith.constant dense<0.000000e+00> : vector<8x128xf32>
    %327 = tpu.matmul %325, %326, %cst_306 {dimension_numbers = #tpu.dot_dimension_numbers<[1], [0], [0], [1], [0, 0, 1, 1], [], []>} : vector<8x128xbf16>, vector<128x128xbf16>, vector<8x128xf32> -> vector<8x128xf32>
    %c0_307 = arith.constant 0 : index
    %c0_308 = arith.constant 0 : index
    %328 = vector.load %arg9[%c0_307, %c0_308] : memref<1x128xf32, #tpu.memory_space<vmem>>, vector<1x128xf32>
    %329 = vector.broadcast %328 : vector<1x128xf32> to vector<8x128xf32>
    %330 = arith.addf %327, %329 : vector<8x128xf32>
    %cst_309 = arith.constant 0.000000e+00 : f32
    %331 = vector.broadcast %cst_309 : f32 to vector<8x128xf32>
    %332 = arith.maximumf %330, %331 : vector<8x128xf32>
    %333 = arith.truncf %332 : vector<8x128xf32> to vector<8x128xbf16>
    %c0_310 = arith.constant 0 : index
    %c0_311 = arith.constant 0 : index
    %334 = vector.load %arg10[%c0_310, %c0_311] : memref<128x128xbf16, #tpu.memory_space<vmem>>, vector<128x128xbf16>
    %cst_312 = arith.constant dense<0.000000e+00> : vector<8x128xf32>
    %335 = tpu.matmul %333, %334, %cst_312 {dimension_numbers = #tpu.dot_dimension_numbers<[1], [0], [0], [1], [0, 0, 1, 1], [], []>} : vector<8x128xbf16>, vector<128x128xbf16>, vector<8x128xf32> -> vector<8x128xf32>
    %c0_313 = arith.constant 0 : index
    %c0_314 = arith.constant 0 : index
    %336 = vector.load %arg11[%c0_313, %c0_314] : memref<1x128xf32, #tpu.memory_space<vmem>>, vector<1x128xf32>
    %337 = vector.broadcast %336 : vector<1x128xf32> to vector<8x128xf32>
    %338 = arith.addf %335, %337 : vector<8x128xf32>
    %c0_315 = arith.constant 0 : index
    %c0_316 = arith.constant 0 : index
    %339 = vector.load %arg12[%c0_315, %c0_316] : memref<8x128xf32, #tpu.memory_space<vmem>>, vector<8x128xf32>
    tpu.vector_store %arg12[%c0_315, %c0_316], %338 {strides = array<i32>} : memref<8x128xf32, #tpu.memory_space<vmem>>, vector<8x128xf32>,
    return
  }
  func.func @transform_0(%arg0: i32) -> (i32, i32, i32) {
    %c0_i32 = arith.constant 0 : i32
    %c0_i32_0 = arith.constant 0 : i32
    %c0_i32_1 = arith.constant 0 : i32
    %c0_i32_2 = arith.constant 0 : i32
    return %c0_i32, %c0_i32_0, %c0_i32_1 : i32, i32, i32
  }
  func.func @transform_1(%arg0: i32) -> (i32, i32, i32, i32) {
    %c0_i32 = arith.constant 0 : i32
    %c0_i32_0 = arith.constant 0 : i32
    %c0_i32_1 = arith.constant 0 : i32
    %c0_i32_2 = arith.constant 0 : i32
    %c0_i32_3 = arith.constant 0 : i32
    return %c0_i32, %c0_i32_0, %c0_i32_1, %c0_i32_2 : i32, i32, i32, i32
  }
  func.func @transform_2(%arg0: i32) -> (i32, i32) {
    %c0_i32 = arith.constant 0 : i32
    %c0_i32_0 = arith.constant 0 : i32
    %c0_i32_1 = arith.constant 0 : i32
    return %c0_i32, %c0_i32_0 : i32, i32
  }
  func.func @transform_3(%arg0: i32) -> (i32, i32, i32, i32) {
    %c0_i32 = arith.constant 0 : i32
    %c0_i32_0 = arith.constant 0 : i32
    %c0_i32_1 = arith.constant 0 : i32
    %c0_i32_2 = arith.constant 0 : i32
    %c0_i32_3 = arith.constant 0 : i32
    return %c0_i32, %c0_i32_0, %c0_i32_1, %c0_i32_2 : i32, i32, i32, i32
  }
  func.func @transform_4(%arg0: i32) -> (i32, i32) {
    %c0_i32 = arith.constant 0 : i32
    %c0_i32_0 = arith.constant 0 : i32
    %c0_i32_1 = arith.constant 0 : i32
    return %c0_i32, %c0_i32_0 : i32, i32
  }
  func.func @transform_5(%arg0: i32) -> (i32, i32) {
    %c0_i32 = arith.constant 0 : i32
    %c0_i32_0 = arith.constant 0 : i32
    %c0_i32_1 = arith.constant 0 : i32
    return %c0_i32, %c0_i32_0 : i32, i32
  }
  func.func @transform_6(%arg0: i32) -> (i32, i32) {
    %c0_i32 = arith.constant 0 : i32
    %c0_i32_0 = arith.constant 0 : i32
    %c0_i32_1 = arith.constant 0 : i32
    return %c0_i32, %c0_i32_0 : i32, i32
  }
  func.func @transform_7(%arg0: i32) -> (i32, i32) {
    %c0_i32 = arith.constant 0 : i32
    %c0_i32_0 = arith.constant 0 : i32
    %c0_i32_1 = arith.constant 0 : i32
    return %c0_i32, %c0_i32_0 : i32, i32
  }
  func.func @transform_8(%arg0: i32) -> (i32, i32) {
    %c0_i32 = arith.constant 0 : i32
    %c0_i32_0 = arith.constant 0 : i32
    %c0_i32_1 = arith.constant 0 : i32
    return %c0_i32, %c0_i32_0 : i32, i32
  }
  func.func @transform_9(%arg0: i32) -> (i32, i32) {
    %c0_i32 = arith.constant 0 : i32
    %c0_i32_0 = arith.constant 0 : i32
    %c0_i32_1 = arith.constant 0 : i32
    return %c0_i32, %c0_i32_0 : i32, i32
  }
  func.func @transform_10(%arg0: i32) -> (i32, i32) {
    %c0_i32 = arith.constant 0 : i32
    %c0_i32_0 = arith.constant 0 : i32
    %c0_i32_1 = arith.constant 0 : i32
    return %c0_i32, %c0_i32_0 : i32, i32
  }
  func.func @transform_11(%arg0: i32) -> (i32, i32) {
    %c0_i32 = arith.constant 0 : i32
    %c0_i32_0 = arith.constant 0 : i32
    %c0_i32_1 = arith.constant 0 : i32
    return %c0_i32, %c0_i32_0 : i32, i32
  }
}

</mosaic_0001>

<llo_original>
// kernel: lenet5_forward.1
$region0: #{lenet5_forward.1}
  #allocation0 [shape = 'u32[]', space=smem, size = 0x4, offset = 0x4, fixed_abs, tag = 'smem constant byte address 0x4 - core index']
  #allocation1 [shape = 'u32[72,128]{1,0:T(1,128)}', space=vmem, size = 0x9000, scoped, tag = 'internal scratch']
  #allocation2 [shape = 'f32[12,96]{1,0:T(8,128)}', space=vmem, size = 0x2000, scoped, tag = 'scratch operand']
  #allocation3 [shape = 'f32[8,256]{1,0:T(8,128)}', space=vmem, size = 0x2000, scoped, tag = 'scratch operand']
  %s0 = inlined_call_operand.vmem [shape: f32[2,28,32], index: 0, kind: input, shape index: {}]
  %s1 = inlined_call_operand.vmem [shape: bf16[2,5,32,96], index: 1, kind: input, shape index: {}]
  %s2 = inlined_call_operand.vmem [shape: f32[1,96], index: 2, kind: input, shape index: {}]
  %s3 = inlined_call_operand.vmem [shape: bf16[2,5,96,64], index: 3, kind: input, shape index: {}]
  %s4 = inlined_call_operand.vmem [shape: f32[1,64], index: 4, kind: input, shape index: {}]
  %s5 = inlined_call_operand.vmem [shape: bf16[256,128], index: 5, kind: input, shape index: {}]
  %s6 = inlined_call_operand.vmem [shape: f32[1,128], index: 6, kind: input, shape index: {}]
  %s7 = inlined_call_operand.vmem [shape: bf16[128,128], index: 7, kind: input, shape index: {}]
  %s8 = inlined_call_operand.vmem [shape: f32[1,128], index: 8, kind: input, shape index: {}]
  %s9 = inlined_call_operand.vmem [shape: bf16[128,128], index: 9, kind: input, shape index: {}]
  %s10 = inlined_call_operand.vmem [shape: f32[1,128], index: 10, kind: input, shape index: {}]
  %s11 = inlined_call_operand.vmem [shape: f32[8,128], index: 11, kind: output, shape index: {}]
  %s12 = sld [smem:[#allocation0]]
  $region54: #{lenet5_forward.1} parent=0
    _
  %s14 = ssub.s32 1, %s12
  %s15 = scalar_select 0, %s14, %s12
  // Predicated region
  $region2: #{lenet5_forward.1} parent=0 // pred_check
    _
  $region3: #{lenet5_forward.1} parent=0 // pred_check_branch
    %17 = sbr.rel (0) target = $region5
  $region4: #{lenet5_forward.1} parent=0 // pred_region
    _
  $region5: #{lenet5_forward.1} parent=0 // pred_fallthru
    _
  // Predicated region
  $region6: #{lenet5_forward.1} parent=0 // pred_check
    _
  $region7: #{lenet5_forward.1} parent=0 // pred_check_branch
    %19 = sbr.rel (0) target = $region9
  $region8: #{lenet5_forward.1} parent=0 // pred_region
    _
  $region9: #{lenet5_forward.1} parent=0 // pred_fallthru
    _
  // Predicated region
  $region10: #{lenet5_forward.1} parent=0 // pred_check
    _
  $region11: #{lenet5_forward.1} parent=0 // pred_check_branch
    %21 = sbr.rel (0) target = $region13
  $region12: #{lenet5_forward.1} parent=0 // pred_region
    _
  $region13: #{lenet5_forward.1} parent=0 // pred_fallthru
    _
  // Predicated region
  $region14: #{lenet5_forward.1} parent=0 // pred_check
    _
  $region15: #{lenet5_forward.1} parent=0 // pred_check_branch
    %23 = sbr.rel (0) target = $region17
  $region16: #{lenet5_forward.1} parent=0 // pred_region
    _
  $region17: #{lenet5_forward.1} parent=0 // pred_fallthru
    _
  // Predicated region
  $region18: #{lenet5_forward.1} parent=0 // pred_check
    _
  $region19: #{lenet5_forward.1} parent=0 // pred_check_branch
    %25 = sbr.rel (0) target = $region21
  $region20: #{lenet5_forward.1} parent=0 // pred_region
    _
  $region21: #{lenet5_forward.1} parent=0 // pred_fallthru
    _
  // Predicated region
  $region22: #{lenet5_forward.1} parent=0 // pred_check
    _
  $region23: #{lenet5_forward.1} parent=0 // pred_check_branch
    %27 = sbr.rel (0) target = $region25
  $region24: #{lenet5_forward.1} parent=0 // pred_region
    _
  $region25: #{lenet5_forward.1} parent=0 // pred_fallthru
    _
  // Predicated region
  $region26: #{lenet5_forward.1} parent=0 // pred_check
    _
  $region27: #{lenet5_forward.1} parent=0 // pred_check_branch
    %29 = sbr.rel (0) target = $region29
  $region28: #{lenet5_forward.1} parent=0 // pred_region
    _
  $region29: #{lenet5_forward.1} parent=0 // pred_fallthru
    _
  // Predicated region
  $region30: #{lenet5_forward.1} parent=0 // pred_check
    _
  $region31: #{lenet5_forward.1} parent=0 // pred_check_branch
    %31 = sbr.rel (0) target = $region33
  $region32: #{lenet5_forward.1} parent=0 // pred_region
    _
  $region33: #{lenet5_forward.1} parent=0 // pred_fallthru
    _
  // Predicated region
  $region34: #{lenet5_forward.1} parent=0 // pred_check
    _
  $region35: #{lenet5_forward.1} parent=0 // pred_check_branch
    %33 = sbr.rel (0) target = $region37
  $region36: #{lenet5_forward.1} parent=0 // pred_region
    _
  $region37: #{lenet5_forward.1} parent=0 // pred_fallthru
    _
  // Predicated region
  $region38: #{lenet5_forward.1} parent=0 // pred_check
    _
  $region39: #{lenet5_forward.1} parent=0 // pred_check_branch
    %35 = sbr.rel (0) target = $region41
  $region40: #{lenet5_forward.1} parent=0 // pred_region
    _
  $region41: #{lenet5_forward.1} parent=0 // pred_fallthru
    _
  // Predicated region
  $region42: #{lenet5_forward.1} parent=0 // pred_check
    _
  $region43: #{lenet5_forward.1} parent=0 // pred_check_branch
    %37 = sbr.rel (0) target = $region45
  $region44: #{lenet5_forward.1} parent=0 // pred_region
    _
  $region45: #{lenet5_forward.1} parent=0 // pred_fallthru
    _
  %v39 = vlaneseq
  %v40 = vshrl.u32 %v39, 7
  %v41 = vadd.s32 %v40, 8
  %v42 = vlaneseq
  %v43 = vand.u32 %v42, 127
  %v44 = vmul.u32 %v40, 2
  %v45 = vmul.u32 %v41, 2
  %vm46 = vcmp.eq.s32.totalorder %v43, %v44
  %vm47 = vcmp.eq.s32.totalorder %v43, %v45
  %v48 = vsel %vm46, 1, 0
  %v49 = vsel %vm47, 1, 0
  %v50 = vcvt.s32.f32 %v48
  %v51 = vcvt.s32.f32 %v49
  %v52 = vadd.s32 %v44, 1
  %v53 = vadd.s32 %v45, 1
  %vm54 = vcmp.eq.s32.totalorder %v43, %v52
  %vm55 = vcmp.eq.s32.totalorder %v43, %v53
  %v56 = vsel %vm54, 1, 0
  %v57 = vsel %vm55, 1, 0
  %v58 = vcvt.s32.f32 %v56
  %v59 = vcvt.s32.f32 %v57
  %v60 = vld [vmem:[%s2] sm:$0x1]
  %v61 = vld [vmem:[%s4] sm:$0x1]
  %62 = vst [vmem:[#allocation3] sm:$0xff] 0.0
  %63 = vst [vmem:[#allocation3 + $0x8] sm:$0xff] 0.0
  %v64 = vld [vmem:[%s0] sm:$0xff]
  %v65 = vld [vmem:[%s0 + $0x8] sm:$0xff]
  %v66 = vld [vmem:[%s0 + $0x10] sm:$0xff]
  %v67 = vpack.c.bf16 %v65, %v64
  %v68 = vpack.c.bf16 %v66, %v66
  %v69 = vld [vmem:[%s1] sm:$0xf]
  %v70 = vld [vmem:[%s1 + $0x4] sm:$0xf]
  %v71 = vld [vmem:[%s1 + $0x8] sm:$0xf]
  %v72 = vld [vmem:[%s1 + $0xc] sm:$0xf]
  %s73 = scalar_lea.vmem %s1, 80
  %v74 = vld [vmem:[%s73] sm:$0xf]
  %v75 = vld [vmem:[%s73 + $0x4] sm:$0xf]
  %v76 = vld [vmem:[%s73 + $0x8] sm:$0xf]
  %v77 = vld [vmem:[%s73 + $0xc] sm:$0xf]
  %v78 = vld [vmem:[%s0 + $0x1] sm:$0xff]
  %v79 = vld [vmem:[%s0 + $0x9] sm:$0xff]
  %v80 = vld [vmem:[%s0 + $0x11] sm:$0xff]
  %v81 = vpack.c.bf16 %v79, %v78
  %v82 = vpack.c.bf16 %v80, %v80
  %s83 = scalar_lea.vmem %s1, 16
  %v84 = vld [vmem:[%s83] sm:$0xf]
  %v85 = vld [vmem:[%s83 + $0x4] sm:$0xf]
  %v86 = vld [vmem:[%s83 + $0x8] sm:$0xf]
  %v87 = vld [vmem:[%s83 + $0xc] sm:$0xf]
  %v92 = vunpack.c.l.b16 %v84
  %v93 = vunpack.c.l.b16 %v85
  %v94 = vunpack.c.l.b16 %v86
  %v95 = vunpack.c.l.b16 %v87
  %v96 = vpack.c.b16 %v93, %v92
  %v97 = vpack.c.b16 %v95, %v94
  %vm100 = vcmask 261120
  %v102 = vsel %vm100, %v81, 0
  %v105 = vsel %vm100, %v82, 0
  %107 = vmatpush.bf16.msra.mxu0 0
  %108 = vmatpush.bf16.msra.mxu0 0
  %109 = vmatpush.bf16.msra.mxu0 0
  %110 = vmatpush.bf16.msra.mxu0 0
  %111 = vmatpush.bf16.msra.mxu0 0
  %112 = vmatpush.bf16.msra.mxu0 0
  %113 = vmatpush.bf16.msra.mxu0 %v97
  %114 = vmatpush.bf16.msra.mxu0 %v96
  %115 = vmatmul.bf16.gmra.mxu0 %v102
  %v116 = vpop.f32.mrf.mxu0
  %v117 = vadd.f32 0.0, %v116
  %v118 = vpop.f32.mrf.mxu0
  %v119 = vadd.f32 0.0, %v118
  %120 = vmatmul.bf16.gmra.mxu0 %v105
  %v121 = vpop.f32.mrf.mxu0
  %v122 = vadd.f32 0.0, %v121
  %v123 = vpop.f32.mrf.mxu0
  %124 = vdwg.mxu0
  %v129 = vunpack.c.l.b16 %v69
  %v130 = vunpack.c.l.b16 %v70
  %v131 = vunpack.c.l.b16 %v71
  %v132 = vunpack.c.l.b16 %v72
  %v133 = vpack.c.b16 %v130, %v129
  %v134 = vpack.c.b16 %v132, %v131
  %v138 = vsel %vm100, %v67, 0
  %v141 = vsel %vm100, %v68, 0
  %143 = vmatpush.bf16.msra.mxu0 0
  %144 = vmatpush.bf16.msra.mxu0 0
  %145 = vmatpush.bf16.msra.mxu0 0
  %146 = vmatpush.bf16.msra.mxu0 0
  %147 = vmatpush.bf16.msra.mxu0 0
  %148 = vmatpush.bf16.msra.mxu0 0
  %149 = vmatpush.bf16.msra.mxu0 %v134
  %150 = vmatpush.bf16.msra.mxu0 %v133
  %151 = vmatmul.bf16.gmra.mxu0 %v138
  %v152 = vpop.f32.mrf.mxu0
  %v153 = vadd.f32 %v117, %v152
  %v154 = vpop.f32.mrf.mxu0
  %v155 = vadd.f32 %v119, %v154
  %156 = vmatmul.bf16.gmra.mxu0 %v141
  %v157 = vpop.f32.mrf.mxu0
  %v158 = vadd.f32 %v122, %v157
  %v159 = vpop.f32.mrf.mxu0
  %160 = vdwg.mxu0
  %s161 = scalar_lea.vmem %s1, 96
  %v162 = vld [vmem:[%s161] sm:$0xf]
  %v163 = vld [vmem:[%s161 + $0x4] sm:$0xf]
  %v164 = vld [vmem:[%s161 + $0x8] sm:$0xf]
  %v165 = vld [vmem:[%s161 + $0xc] sm:$0xf]
  %v170 = vunpack.c.l.b16 %v162
  %v171 = vunpack.c.l.b16 %v163
  %v172 = vunpack.c.l.b16 %v164
  %v173 = vunpack.c.l.b16 %v165
  %v174 = vpack.c.b16 %v171, %v170
  %v175 = vpack.c.b16 %v173, %v172
  %178 = vmatpush.bf16.msra.mxu0 0
  %179 = vmatpush.bf16.msra.mxu0 0
  %180 = vmatpush.bf16.msra.mxu0 0
  %181 = vmatpush.bf16.msra.mxu0 0
  %182 = vmatpush.bf16.msra.mxu0 0
  %183 = vmatpush.bf16.msra.mxu0 0
  %184 = vmatpush.bf16.msra.mxu0 %v175
  %185 = vmatpush.bf16.msra.mxu0 %v174
  %186 = vmatmul.bf16.gmra.mxu0 %v102
  %v187 = vpop.f32.mrf.mxu0
  %v188 = vadd.f32 0.0, %v187
  %v189 = vpop.f32.mrf.mxu0
  %v190 = vadd.f32 0.0, %v189
  %191 = vmatmul.bf16.gmra.mxu0 %v105
  %v192 = vpop.f32.mrf.mxu0
  %v193 = vadd.f32 0.0, %v192
  %v194 = vpop.f32.mrf.mxu0
  %195 = vdwg.mxu0
  %v200 = vunpack.c.l.b16 %v74
  %v201 = vunpack.c.l.b16 %v75
  %v202 = vunpack.c.l.b16 %v76
  %v203 = vunpack.c.l.b16 %v77
  %v204 = vpack.c.b16 %v201, %v200
  %v205 = vpack.c.b16 %v203, %v202
  %208 = vmatpush.bf16.msra.mxu0 0
  %209 = vmatpush.bf16.msra.mxu0 0
  %210 = vmatpush.bf16.msra.mxu0 0
  %211 = vmatpush.bf16.msra.mxu0 0
  %212 = vmatpush.bf16.msra.mxu0 0
  %213 = vmatpush.bf16.msra.mxu0 0
  %214 = vmatpush.bf16.msra.mxu0 %v205
  %215 = vmatpush.bf16.msra.mxu0 %v204
  %216 = vmatmul.bf16.gmra.mxu0 %v138
  %v217 = vpop.f32.mrf.mxu0
  %v218 = vadd.f32 %v188, %v217
  %v219 = vpop.f32.mrf.mxu0
  %v220 = vadd.f32 %v190, %v219
  %221 = vmatmul.bf16.gmra.mxu0 %v141
  %v222 = vpop.f32.mrf.mxu0
  %v223 = vadd.f32 %v193, %v222
  %v224 = vpop.f32.mrf.mxu0
  %225 = vdwg.mxu0
  %v226 = vld [vmem:[%s0 + $0x2] sm:$0xff]
  %v227 = vld [vmem:[%s0 + $0xa] sm:$0xff]
  %v228 = vld [vmem:[%s0 + $0x12] sm:$0xff]
  %v229 = vpack.c.bf16 %v227, %v226
  %v230 = vpack.c.bf16 %v228, %v228
  %s231 = scalar_lea.vmem %s1, 32
  %v232 = vld [vmem:[%s231] sm:$0xf]
  %v233 = vld [vmem:[%s231 + $0x4] sm:$0xf]
  %v234 = vld [vmem:[%s231 + $0x8] sm:$0xf]
  %v235 = vld [vmem:[%s231 + $0xc] sm:$0xf]
  %v240 = vunpack.c.l.b16 %v232
  %v241 = vunpack.c.l.b16 %v233
  %v242 = vunpack.c.l.b16 %v234
  %v243 = vunpack.c.l.b16 %v235
  %v244 = vpack.c.b16 %v241, %v240
  %v245 = vpack.c.b16 %v243, %v242
  %v249 = vsel %vm100, %v229, 0
  %v252 = vsel %vm100, %v230, 0
  %254 = vmatpush.bf16.msra.mxu0 0
  %255 = vmatpush.bf16.msra.mxu0 0
  %256 = vmatpush.bf16.msra.mxu0 0
  %257 = vmatpush.bf16.msra.mxu0 0
  %258 = vmatpush.bf16.msra.mxu0 0
  %259 = vmatpush.bf16.msra.mxu0 0
  %260 = vmatpush.bf16.msra.mxu0 %v245
  %261 = vmatpush.bf16.msra.mxu0 %v244
  %262 = vmatmul.bf16.gmra.mxu0 %v249
  %v263 = vpop.f32.mrf.mxu0
  %v264 = vadd.f32 0.0, %v263
  %v265 = vpop.f32.mrf.mxu0
  %v266 = vadd.f32 0.0, %v265
  %267 = vmatmul.bf16.gmra.mxu0 %v252
  %v268 = vpop.f32.mrf.mxu0
  %v269 = vadd.f32 0.0, %v268
  %v270 = vpop.f32.mrf.mxu0
  %271 = vdwg.mxu0
  %v272 = vadd.f32 %v153, %v264
  %v273 = vadd.f32 %v155, %v266
  %v274 = vadd.f32 %v158, %v269
  %s275 = scalar_lea.vmem %s1, 112
  %v276 = vld [vmem:[%s275] sm:$0xf]
  %v277 = vld [vmem:[%s275 + $0x4] sm:$0xf]
  %v278 = vld [vmem:[%s275 + $0x8] sm:$0xf]
  %v279 = vld [vmem:[%s275 + $0xc] sm:$0xf]
  %v284 = vunpack.c.l.b16 %v276
  %v285 = vunpack.c.l.b16 %v277
  %v286 = vunpack.c.l.b16 %v278
  %v287 = vunpack.c.l.b16 %v279
  %v288 = vpack.c.b16 %v285, %v284
  %v289 = vpack.c.b16 %v287, %v286
  %292 = vmatpush.bf16.msra.mxu0 0
  %293 = vmatpush.bf16.msra.mxu0 0
  %294 = vmatpush.bf16.msra.mxu0 0
  %295 = vmatpush.bf16.msra.mxu0 0
  %296 = vmatpush.bf16.msra.mxu0 0
  %297 = vmatpush.bf16.msra.mxu0 0
  %298 = vmatpush.bf16.msra.mxu0 %v289
  %299 = vmatpush.bf16.msra.mxu0 %v288
  %300 = vmatmul.bf16.gmra.mxu0 %v249
  %v301 = vpop.f32.mrf.mxu0
  %v302 = vadd.f32 0.0, %v301
  %v303 = vpop.f32.mrf.mxu0
  %v304 = vadd.f32 0.0, %v303
  %305 = vmatmul.bf16.gmra.mxu0 %v252
  %v306 = vpop.f32.mrf.mxu0
  %v307 = vadd.f32 0.0, %v306
  %v308 = vpop.f32.mrf.mxu0
  %309 = vdwg.mxu0
  %v310 = vadd.f32 %v218, %v302
  %v311 = vadd.f32 %v220, %v304
  %v312 = vadd.f32 %v223, %v307
  %v313 = vld [vmem:[%s0 + $0x3] sm:$0xff]
  %v314 = vld [vmem:[%s0 + $0xb] sm:$0xff]
  %v315 = vld [vmem:[%s0 + $0x13] sm:$0xff]
  %v316 = vpack.c.bf16 %v314, %v313
  %v317 = vpack.c.bf16 %v315, %v315
  %s318 = scalar_lea.vmem %s1, 48
  %v319 = vld [vmem:[%s318] sm:$0xf]
  %v320 = vld [vmem:[%s318 + $0x4] sm:$0xf]
  %v321 = vld [vmem:[%s318 + $0x8] sm:$0xf]
  %v322 = vld [vmem:[%s318 + $0xc] sm:$0xf]
  %v327 = vunpack.c.l.b16 %v319
  %v328 = vunpack.c.l.b16 %v320
  %v329 = vunpack.c.l.b16 %v321
  %v330 = vunpack.c.l.b16 %v322
  %v331 = vpack.c.b16 %v328, %v327
  %v332 = vpack.c.b16 %v330, %v329
  %v336 = vsel %vm100, %v316, 0
  %v339 = vsel %vm100, %v317, 0
  %341 = vmatpush.bf16.msra.mxu0 0
  %342 = vmatpush.bf16.msra.mxu0 0
  %343 = vmatpush.bf16.msra.mxu0 0
  %344 = vmatpush.bf16.msra.mxu0 0
  %345 = vmatpush.bf16.msra.mxu0 0
  %346 = vmatpush.bf16.msra.mxu0 0
  %347 = vmatpush.bf16.msra.mxu0 %v332
  %348 = vmatpush.bf16.msra.mxu0 %v331
  %349 = vmatmul.bf16.gmra.mxu0 %v336
  %v350 = vpop.f32.mrf.mxu0
  %v351 = vadd.f32 0.0, %v350
  %v352 = vpop.f32.mrf.mxu0
  %v353 = vadd.f32 0.0, %v352
  %354 = vmatmul.bf16.gmra.mxu0 %v339
  %v355 = vpop.f32.mrf.mxu0
  %v356 = vadd.f32 0.0, %v355
  %v357 = vpop.f32.mrf.mxu0
  %358 = vdwg.mxu0
  %v359 = vadd.f32 %v272, %v351
  %v360 = vadd.f32 %v273, %v353
  %v361 = vadd.f32 %v274, %v356
  %s362 = scalar_lea.vmem %s1, 128
  %v363 = vld [vmem:[%s362] sm:$0xf]
  %v364 = vld [vmem:[%s362 + $0x4] sm:$0xf]
  %v365 = vld [vmem:[%s362 + $0x8] sm:$0xf]
  %v366 = vld [vmem:[%s362 + $0xc] sm:$0xf]
  %v371 = vunpack.c.l.b16 %v363
  %v372 = vunpack.c.l.b16 %v364
  %v373 = vunpack.c.l.b16 %v365
  %v374 = vunpack.c.l.b16 %v366
  %v375 = vpack.c.b16 %v372, %v371
  %v376 = vpack.c.b16 %v374, %v373
  %379 = vmatpush.bf16.msra.mxu0 0
  %380 = vmatpush.bf16.msra.mxu0 0
  %381 = vmatpush.bf16.msra.mxu0 0
  %382 = vmatpush.bf16.msra.mxu0 0
  %383 = vmatpush.bf16.msra.mxu0 0
  %384 = vmatpush.bf16.msra.mxu0 0
  %385 = vmatpush.bf16.msra.mxu0 %v376
  %386 = vmatpush.bf16.msra.mxu0 %v375
  %387 = vmatmul.bf16.gmra.mxu0 %v336
  %v388 = vpop.f32.mrf.mxu0
  %v389 = vadd.f32 0.0, %v388
  %v390 = vpop.f32.mrf.mxu0
  %v391 = vadd.f32 0.0, %v390
  %392 = vmatmul.bf16.gmra.mxu0 %v339
  %v393 = vpop.f32.mrf.mxu0
  %v394 = vadd.f32 0.0, %v393
  %v395 = vpop.f32.mrf.mxu0
  %396 = vdwg.mxu0
  %v397 = vadd.f32 %v310, %v389
  %v398 = vadd.f32 %v311, %v391
  %v399 = vadd.f32 %v312, %v394
  %v400 = vld [vmem:[%s0 + $0x4] sm:$0xff]
  %v401 = vld [vmem:[%s0 + $0xc] sm:$0xff]
  %v402 = vld [vmem:[%s0 + $0x14] sm:$0xff]
  %v403 = vpack.c.bf16 %v401, %v400
  %v404 = vpack.c.bf16 %v402, %v402
  %s405 = scalar_lea.vmem %s1, 64
  %v406 = vld [vmem:[%s405] sm:$0xf]
  %v407 = vld [vmem:[%s405 + $0x4] sm:$0xf]
  %v408 = vld [vmem:[%s405 + $0x8] sm:$0xf]
  %v409 = vld [vmem:[%s405 + $0xc] sm:$0xf]
  %v414 = vunpack.c.l.b16 %v406
  %v415 = vunpack.c.l.b16 %v407
  %v416 = vunpack.c.l.b16 %v408
  %v417 = vunpack.c.l.b16 %v409
  %v418 = vpack.c.b16 %v415, %v414
  %v419 = vpack.c.b16 %v417, %v416
  %v423 = vsel %vm100, %v403, 0
  %v426 = vsel %vm100, %v404, 0
  %428 = vmatpush.bf16.msra.mxu0 0
  %429 = vmatpush.bf16.msra.mxu0 0
  %430 = vmatpush.bf16.msra.mxu0 0
  %431 = vmatpush.bf16.msra.mxu0 0
  %432 = vmatpush.bf16.msra.mxu0 0
  %433 = vmatpush.bf16.msra.mxu0 0
  %434 = vmatpush.bf16.msra.mxu0 %v419
  %435 = vmatpush.bf16.msra.mxu0 %v418
  %436 = vmatmul.bf16.gmra.mxu0 %v423
  %v437 = vpop.f32.mrf.mxu0
  %v438 = vadd.f32 0.0, %v437
  %v439 = vpop.f32.mrf.mxu0
  %v440 = vadd.f32 0.0, %v439
  %441 = vmatmul.bf16.gmra.mxu0 %v426
  %v442 = vpop.f32.mrf.mxu0
  %v443 = vadd.f32 0.0, %v442
  %v444 = vpop.f32.mrf.mxu0
  %445 = vdwg.mxu0
  %v446 = vadd.f32 %v359, %v438
  %v447 = vadd.f32 %v360, %v440
  %v448 = vadd.f32 %v361, %v443
  %s449 = scalar_lea.vmem %s1, 144
  %v450 = vld [vmem:[%s449] sm:$0xf]
  %v451 = vld [vmem:[%s449 + $0x4] sm:$0xf]
  %v452 = vld [vmem:[%s449 + $0x8] sm:$0xf]
  %v453 = vld [vmem:[%s449 + $0xc] sm:$0xf]
  %v458 = vunpack.c.l.b16 %v450
  %v459 = vunpack.c.l.b16 %v451
  %v460 = vunpack.c.l.b16 %v452
  %v461 = vunpack.c.l.b16 %v453
  %v462 = vpack.c.b16 %v459, %v458
  %v463 = vpack.c.b16 %v461, %v460
  %466 = vmatpush.bf16.msra.mxu0 0
  %467 = vmatpush.bf16.msra.mxu0 0
  %468 = vmatpush.bf16.msra.mxu0 0
  %469 = vmatpush.bf16.msra.mxu0 0
  %470 = vmatpush.bf16.msra.mxu0 0
  %471 = vmatpush.bf16.msra.mxu0 0
  %472 = vmatpush.bf16.msra.mxu0 %v463
  %473 = vmatpush.bf16.msra.mxu0 %v462
  %474 = vmatmul.bf16.gmra.mxu0 %v423
  %v475 = vpop.f32.mrf.mxu0
  %v476 = vadd.f32 0.0, %v475
  %v477 = vpop.f32.mrf.mxu0
  %v478 = vadd.f32 0.0, %v477
  %479 = vmatmul.bf16.gmra.mxu0 %v426
  %v480 = vpop.f32.mrf.mxu0
  %v481 = vadd.f32 0.0, %v480
  %v482 = vpop.f32.mrf.mxu0
  %483 = vdwg.mxu0
  %v484 = vadd.f32 %v397, %v476
  %v485 = vadd.f32 %v398, %v478
  %v486 = vadd.f32 %v399, %v481
  %v488 = vperm.slane %v60, 0
  %v490 = vadd.f32 %v446, %v488
  %v491 = vadd.f32 %v447, %v488
  %v492 = vadd.f32 %v448, %v488
  %v493 = vmax.f32 %v490, 0.0
  %v494 = vmax.f32 %v491, 0.0
  %v495 = vmax.f32 %v492, 0.0
  %v496 = vadd.f32 %v484, %v488
  %v497 = vadd.f32 %v485, %v488
  %v498 = vadd.f32 %v486, %v488
  %v499 = vmax.f32 %v496, 0.0
  %v500 = vmax.f32 %v497, 0.0
  %v501 = vmax.f32 %v498, 0.0
  %v502 = vmax.f32 %v493, %v499
  %v503 = vmax.f32 %v494, %v500
  %v504 = vmax.f32 %v495, %v501
  %vm505 = vcmask 195584
  %v507 = vsel %vm505, %v50, 0
  %v510 = vsel %vm505, %v51, 0
  %512 = vmatpush.msra.mxu0 0.0
  %513 = vmatpush.msra.mxu0 0.0
  %514 = vmatpush.msra.mxu0 0.0
  %515 = vmatpush.msra.mxu0 0.0
  %516 = vmatpush.msra.mxu0 0.0
  %517 = vmatpush.msra.mxu0 0.0
  %518 = vmatpush.msra.mxu0 0.0
  %519 = vmatpush.msra.mxu0 0.0
  %520 = vmatpush.msra.mxu0 0.0
  %521 = vmatpush.msra.mxu0 0.0
  %522 = vmatpush.msra.mxu0 0.0
  %523 = vmatpush.msra.mxu0 0.0
  %524 = vmatpush.msra.mxu0 0.0
  %525 = vmatpush.msra.mxu0 %v504
  %526 = vmatpush.msra.mxu0 %v503
  %527 = vmatpush.msra.mxu0 %v502
  %528 = vmatmul.f32.gmra.mxu0 %v507
  %v529 = vpop.f32.mrf.mxu0
  %v530 = vadd.f32 0.0, %v529
  %531 = vmatmul.f32.gmra.mxu0 %v510
  %v532 = vpop.f32.mrf.mxu0
  %v533 = vadd.f32 0.0, %v532
  %534 = vdwg.mxu0
  %v536 = vsel %vm505, %v58, 0
  %v539 = vsel %vm505, %v59, 0
  %541 = vmatpush.msra.mxu0 0.0
  %542 = vmatpush.msra.mxu0 0.0
  %543 = vmatpush.msra.mxu0 0.0
  %544 = vmatpush.msra.mxu0 0.0
  %545 = vmatpush.msra.mxu0 0.0
  %546 = vmatpush.msra.mxu0 0.0
  %547 = vmatpush.msra.mxu0 0.0
  %548 = vmatpush.msra.mxu0 0.0
  %549 = vmatpush.msra.mxu0 0.0
  %550 = vmatpush.msra.mxu0 0.0
  %551 = vmatpush.msra.mxu0 0.0
  %552 = vmatpush.msra.mxu0 0.0
  %553 = vmatpush.msra.mxu0 0.0
  %554 = vmatpush.msra.mxu0 %v504
  %555 = vmatpush.msra.mxu0 %v503
  %556 = vmatpush.msra.mxu0 %v502
  %557 = vmatmul.f32.gmra.mxu0 %v536
  %v558 = vpop.f32.mrf.mxu0
  %v559 = vadd.f32 0.0, %v558
  %560 = vmatmul.f32.gmra.mxu0 %v539
  %v561 = vpop.f32.mrf.mxu0
  %v562 = vadd.f32 0.0, %v561
  %563 = vdwg.mxu0
  %v564 = vmax.f32 %v530, %v559
  %v565 = vmax.f32 %v533, %v562
  %vm566 = vcmask 785408
  %567 = vst.msk [vmem:[#allocation2] sm:$0xff] %vm566, %v564
  %vm568 = vcmask 781312
  %569 = vst.msk [vmem:[#allocation2 + $0x8] sm:$0xf] %vm568, %v565
  %v570 = vld [vmem:[#allocation2] sm:$0xff]
  %v571 = vpack.c.bf16 %v570, %v570
  %v572 = vld [vmem:[%s3] sm:$0xf]
  %v573 = vld [vmem:[%s3 + $0x4] sm:$0xf]
  %v574 = vld [vmem:[%s3 + $0x8] sm:$0xf]
  %v575 = vld [vmem:[%s3 + $0xc] sm:$0xf]
  %v576 = vld [vmem:[%s3 + $0x10] sm:$0xf]
  %v577 = vld [vmem:[%s3 + $0x14] sm:$0xf]
  %v578 = vld [vmem:[%s3 + $0x18] sm:$0xf]
  %v579 = vld [vmem:[%s3 + $0x1c] sm:$0xf]
  %v580 = vld [vmem:[%s3 + $0x20] sm:$0xf]
  %v581 = vld [vmem:[%s3 + $0x24] sm:$0xf]
  %v582 = vld [vmem:[%s3 + $0x28] sm:$0xf]
  %v583 = vld [vmem:[%s3 + $0x2c] sm:$0xf]
  %s584 = scalar_lea.vmem %s3, 240
  %v585 = vld [vmem:[%s584] sm:$0xf]
  %v586 = vld [vmem:[%s584 + $0x4] sm:$0xf]
  %v587 = vld [vmem:[%s584 + $0x8] sm:$0xf]
  %v588 = vld [vmem:[%s584 + $0xc] sm:$0xf]
  %v589 = vld [vmem:[%s584 + $0x10] sm:$0xf]
  %v590 = vld [vmem:[%s584 + $0x14] sm:$0xf]
  %v591 = vld [vmem:[%s584 + $0x18] sm:$0xf]
  %v592 = vld [vmem:[%s584 + $0x1c] sm:$0xf]
  %v593 = vld [vmem:[%s584 + $0x20] sm:$0xf]
  %v594 = vld [vmem:[%s584 + $0x24] sm:$0xf]
  %v595 = vld [vmem:[%s584 + $0x28] sm:$0xf]
  %v596 = vld [vmem:[%s584 + $0x2c] sm:$0xf]
  %v597 = vld [vmem:[#allocation2 + $0x1] sm:$0xff]
  %v598 = vpack.c.bf16 %v597, %v597
  %s599 = scalar_lea.vmem %s3, 48
  %v600 = vld [vmem:[%s599] sm:$0xf]
  %v601 = vld [vmem:[%s599 + $0x4] sm:$0xf]
  %v602 = vld [vmem:[%s599 + $0x8] sm:$0xf]
  %v603 = vld [vmem:[%s599 + $0xc] sm:$0xf]
  %v604 = vld [vmem:[%s599 + $0x10] sm:$0xf]
  %v605 = vld [vmem:[%s599 + $0x14] sm:$0xf]
  %v606 = vld [vmem:[%s599 + $0x18] sm:$0xf]
  %v607 = vld [vmem:[%s599 + $0x1c] sm:$0xf]
  %v608 = vld [vmem:[%s599 + $0x20] sm:$0xf]
  %v609 = vld [vmem:[%s599 + $0x24] sm:$0xf]
  %v610 = vld [vmem:[%s599 + $0x28] sm:$0xf]
  %v611 = vld [vmem:[%s599 + $0x2c] sm:$0xf]
  %v624 = vunpack.c.l.b16 %v600
  %v625 = vunpack.c.l.b16 %v601
  %v626 = vunpack.c.l.b16 %v602
  %v627 = vunpack.c.l.b16 %v603
  %v628 = vunpack.c.l.b16 %v604
  %v629 = vunpack.c.l.b16 %v605
  %v630 = vunpack.c.l.b16 %v606
  %v631 = vunpack.c.l.b16 %v607
  %v632 = vunpack.c.l.b16 %v608
  %v633 = vunpack.c.l.b16 %v609
  %v634 = vunpack.c.l.b16 %v610
  %v635 = vunpack.c.l.b16 %v611
  %v636 = vpack.c.b16 %v625, %v624
  %v637 = vpack.c.b16 %v627, %v626
  %v638 = vpack.c.b16 %v629, %v628
  %v639 = vpack.c.b16 %v631, %v630
  %v640 = vpack.c.b16 %v633, %v632
  %v641 = vpack.c.b16 %v635, %v634
  %v649 = vsel %vm566, %v598, 0
  %651 = vmatpush.bf16.msra.mxu0 0
  %652 = vmatpush.bf16.msra.mxu0 0
  %653 = vmatpush.bf16.msra.mxu0 %v641
  %654 = vmatpush.bf16.msra.mxu0 %v640
  %655 = vmatpush.bf16.msra.mxu0 %v639
  %656 = vmatpush.bf16.msra.mxu0 %v638
  %657 = vmatpush.bf16.msra.mxu0 %v637
  %658 = vmatpush.bf16.msra.mxu0 %v636
  %659 = vmatmul.bf16.gmra.mxu0 %v649
  %v660 = vpop.f32.mrf.mxu0
  %v661 = vadd.f32 0.0, %v660
  %v662 = vpop.f32.mrf.mxu0
  %663 = vdwg.mxu0
  %v676 = vunpack.c.l.b16 %v572
  %v677 = vunpack.c.l.b16 %v573
  %v678 = vunpack.c.l.b16 %v574
  %v679 = vunpack.c.l.b16 %v575
  %v680 = vunpack.c.l.b16 %v576
  %v681 = vunpack.c.l.b16 %v577
  %v682 = vunpack.c.l.b16 %v578
  %v683 = vunpack.c.l.b16 %v579
  %v684 = vunpack.c.l.b16 %v580
  %v685 = vunpack.c.l.b16 %v581
  %v686 = vunpack.c.l.b16 %v582
  %v687 = vunpack.c.l.b16 %v583
  %v688 = vpack.c.b16 %v677, %v676
  %v689 = vpack.c.b16 %v679, %v678
  %v690 = vpack.c.b16 %v681, %v680
  %v691 = vpack.c.b16 %v683, %v682
  %v692 = vpack.c.b16 %v685, %v684
  %v693 = vpack.c.b16 %v687, %v686
  %v701 = vsel %vm566, %v571, 0
  %703 = vmatpush.bf16.msra.mxu0 0
  %704 = vmatpush.bf16.msra.mxu0 0
  %705 = vmatpush.bf16.msra.mxu0 %v693
  %706 = vmatpush.bf16.msra.mxu0 %v692
  %707 = vmatpush.bf16.msra.mxu0 %v691
  %708 = vmatpush.bf16.msra.mxu0 %v690
  %709 = vmatpush.bf16.msra.mxu0 %v689
  %710 = vmatpush.bf16.msra.mxu0 %v688
  %711 = vmatmul.bf16.gmra.mxu0 %v701
  %v712 = vpop.f32.mrf.mxu0
  %v713 = vadd.f32 %v661, %v712
  %v714 = vpop.f32.mrf.mxu0
  %715 = vdwg.mxu0
  %s716 = scalar_lea.vmem %s3, 288
  %v717 = vld [vmem:[%s716] sm:$0xf]
  %v718 = vld [vmem:[%s716 + $0x4] sm:$0xf]
  %v719 = vld [vmem:[%s716 + $0x8] sm:$0xf]
  %v720 = vld [vmem:[%s716 + $0xc] sm:$0xf]
  %v721 = vld [vmem:[%s716 + $0x10] sm:$0xf]
  %v722 = vld [vmem:[%s716 + $0x14] sm:$0xf]
  %v723 = vld [vmem:[%s716 + $0x18] sm:$0xf]
  %v724 = vld [vmem:[%s716 + $0x1c] sm:$0xf]
  %v725 = vld [vmem:[%s716 + $0x20] sm:$0xf]
  %v726 = vld [vmem:[%s716 + $0x24] sm:$0xf]
  %v727 = vld [vmem:[%s716 + $0x28] sm:$0xf]
  %v728 = vld [vmem:[%s716 + $0x2c] sm:$0xf]
  %v741 = vunpack.c.l.b16 %v717
  %v742 = vunpack.c.l.b16 %v718
  %v743 = vunpack.c.l.b16 %v719
  %v744 = vunpack.c.l.b16 %v720
  %v745 = vunpack.c.l.b16 %v721
  %v746 = vunpack.c.l.b16 %v722
  %v747 = vunpack.c.l.b16 %v723
  %v748 = vunpack.c.l.b16 %v724
  %v749 = vunpack.c.l.b16 %v725
  %v750 = vunpack.c.l.b16 %v726
  %v751 = vunpack.c.l.b16 %v727
  %v752 = vunpack.c.l.b16 %v728
  %v753 = vpack.c.b16 %v742, %v741
  %v754 = vpack.c.b16 %v744, %v743
  %v755 = vpack.c.b16 %v746, %v745
  %v756 = vpack.c.b16 %v748, %v747
  %v757 = vpack.c.b16 %v750, %v749
  %v758 = vpack.c.b16 %v752, %v751
  %765 = vmatpush.bf16.msra.mxu0 0
  %766 = vmatpush.bf16.msra.mxu0 0
  %767 = vmatpush.bf16.msra.mxu0 %v758
  %768 = vmatpush.bf16.msra.mxu0 %v757
  %769 = vmatpush.bf16.msra.mxu0 %v756
  %770 = vmatpush.bf16.msra.mxu0 %v755
  %771 = vmatpush.bf16.msra.mxu0 %v754
  %772 = vmatpush.bf16.msra.mxu0 %v753
  %773 = vmatmul.bf16.gmra.mxu0 %v649
  %v774 = vpop.f32.mrf.mxu0
  %v775 = vadd.f32 0.0, %v774
  %v776 = vpop.f32.mrf.mxu0
  %777 = vdwg.mxu0
  %v790 = vunpack.c.l.b16 %v585
  %v791 = vunpack.c.l.b16 %v586
  %v792 = vunpack.c.l.b16 %v587
  %v793 = vunpack.c.l.b16 %v588
  %v794 = vunpack.c.l.b16 %v589
  %v795 = vunpack.c.l.b16 %v590
  %v796 = vunpack.c.l.b16 %v591
  %v797 = vunpack.c.l.b16 %v592
  %v798 = vunpack.c.l.b16 %v593
  %v799 = vunpack.c.l.b16 %v594
  %v800 = vunpack.c.l.b16 %v595
  %v801 = vunpack.c.l.b16 %v596
  %v802 = vpack.c.b16 %v791, %v790
  %v803 = vpack.c.b16 %v793, %v792
  %v804 = vpack.c.b16 %v795, %v794
  %v805 = vpack.c.b16 %v797, %v796
  %v806 = vpack.c.b16 %v799, %v798
  %v807 = vpack.c.b16 %v801, %v800
  %814 = vmatpush.bf16.msra.mxu0 0
  %815 = vmatpush.bf16.msra.mxu0 0
  %816 = vmatpush.bf16.msra.mxu0 %v807
  %817 = vmatpush.bf16.msra.mxu0 %v806
  %818 = vmatpush.bf16.msra.mxu0 %v805
  %819 = vmatpush.bf16.msra.mxu0 %v804
  %820 = vmatpush.bf16.msra.mxu0 %v803
  %821 = vmatpush.bf16.msra.mxu0 %v802
  %822 = vmatmul.bf16.gmra.mxu0 %v701
  %v823 = vpop.f32.mrf.mxu0
  %v824 = vadd.f32 %v775, %v823
  %v825 = vpop.f32.mrf.mxu0
  %826 = vdwg.mxu0
  %v827 = vld [vmem:[#allocation2 + $0x2] sm:$0xff]
  %v828 = vpack.c.bf16 %v827, %v827
  %s829 = scalar_lea.vmem %s3, 96
  %v830 = vld [vmem:[%s829] sm:$0xf]
  %v831 = vld [vmem:[%s829 + $0x4] sm:$0xf]
  %v832 = vld [vmem:[%s829 + $0x8] sm:$0xf]
  %v833 = vld [vmem:[%s829 + $0xc] sm:$0xf]
  %v834 = vld [vmem:[%s829 + $0x10] sm:$0xf]
  %v835 = vld [vmem:[%s829 + $0x14] sm:$0xf]
  %v836 = vld [vmem:[%s829 + $0x18] sm:$0xf]
  %v837 = vld [vmem:[%s829 + $0x1c] sm:$0xf]
  %v838 = vld [vmem:[%s829 + $0x20] sm:$0xf]
  %v839 = vld [vmem:[%s829 + $0x24] sm:$0xf]
  %v840 = vld [vmem:[%s829 + $0x28] sm:$0xf]
  %v841 = vld [vmem:[%s829 + $0x2c] sm:$0xf]
  %v854 = vunpack.c.l.b16 %v830
  %v855 = vunpack.c.l.b16 %v831
  %v856 = vunpack.c.l.b16 %v832
  %v857 = vunpack.c.l.b16 %v833
  %v858 = vunpack.c.l.b16 %v834
  %v859 = vunpack.c.l.b16 %v835
  %v860 = vunpack.c.l.b16 %v836
  %v861 = vunpack.c.l.b16 %v837
  %v862 = vunpack.c.l.b16 %v838
  %v863 = vunpack.c.l.b16 %v839
  %v864 = vunpack.c.l.b16 %v840
  %v865 = vunpack.c.l.b16 %v841
  %v866 = vpack.c.b16 %v855, %v854
  %v867 = vpack.c.b16 %v857, %v856
  %v868 = vpack.c.b16 %v859, %v858
  %v869 = vpack.c.b16 %v861, %v860
  %v870 = vpack.c.b16 %v863, %v862
  %v871 = vpack.c.b16 %v865, %v864
  %v879 = vsel %vm566, %v828, 0
  %881 = vmatpush.bf16.msra.mxu0 0
  %882 = vmatpush.bf16.msra.mxu0 0
  %883 = vmatpush.bf16.msra.mxu0 %v871
  %884 = vmatpush.bf16.msra.mxu0 %v870
  %885 = vmatpush.bf16.msra.mxu0 %v869
  %886 = vmatpush.bf16.msra.mxu0 %v868
  %887 = vmatpush.bf16.msra.mxu0 %v867
  %888 = vmatpush.bf16.msra.mxu0 %v866
  %889 = vmatmul.bf16.gmra.mxu0 %v879
  %v890 = vpop.f32.mrf.mxu0
  %v891 = vadd.f32 0.0, %v890
  %v892 = vpop.f32.mrf.mxu0
  %893 = vdwg.mxu0
  %v894 = vadd.f32 %v713, %v891
  %s895 = scalar_lea.vmem %s3, 336
  %v896 = vld [vmem:[%s895] sm:$0xf]
  %v897 = vld [vmem:[%s895 + $0x4] sm:$0xf]
  %v898 = vld [vmem:[%s895 + $0x8] sm:$0xf]
  %v899 = vld [vmem:[%s895 + $0xc] sm:$0xf]
  %v900 = vld [vmem:[%s895 + $0x10] sm:$0xf]
  %v901 = vld [vmem:[%s895 + $0x14] sm:$0xf]
  %v902 = vld [vmem:[%s895 + $0x18] sm:$0xf]
  %v903 = vld [vmem:[%s895 + $0x1c] sm:$0xf]
  %v904 = vld [vmem:[%s895 + $0x20] sm:$0xf]
  %v905 = vld [vmem:[%s895 + $0x24] sm:$0xf]
  %v906 = vld [vmem:[%s895 + $0x28] sm:$0xf]
  %v907 = vld [vmem:[%s895 + $0x2c] sm:$0xf]
  %v920 = vunpack.c.l.b16 %v896
  %v921 = vunpack.c.l.b16 %v897
  %v922 = vunpack.c.l.b16 %v898
  %v923 = vunpack.c.l.b16 %v899
  %v924 = vunpack.c.l.b16 %v900
  %v925 = vunpack.c.l.b16 %v901
  %v926 = vunpack.c.l.b16 %v902
  %v927 = vunpack.c.l.b16 %v903
  %v928 = vunpack.c.l.b16 %v904
  %v929 = vunpack.c.l.b16 %v905
  %v930 = vunpack.c.l.b16 %v906
  %v931 = vunpack.c.l.b16 %v907
  %v932 = vpack.c.b16 %v921, %v920
  %v933 = vpack.c.b16 %v923, %v922
  %v934 = vpack.c.b16 %v925, %v924
  %v935 = vpack.c.b16 %v927, %v926
  %v936 = vpack.c.b16 %v929, %v928
  %v937 = vpack.c.b16 %v931, %v930
  %944 = vmatpush.bf16.msra.mxu0 0
  %945 = vmatpush.bf16.msra.mxu0 0
  %946 = vmatpush.bf16.msra.mxu0 %v937
  %947 = vmatpush.bf16.msra.mxu0 %v936
  %948 = vmatpush.bf16.msra.mxu0 %v935
  %949 = vmatpush.bf16.msra.mxu0 %v934
  %950 = vmatpush.bf16.msra.mxu0 %v933
  %951 = vmatpush.bf16.msra.mxu0 %v932
  %952 = vmatmul.bf16.gmra.mxu0 %v879
  %v953 = vpop.f32.mrf.mxu0
  %v954 = vadd.f32 0.0, %v953
  %v955 = vpop.f32.mrf.mxu0
  %956 = vdwg.mxu0
  %v957 = vadd.f32 %v824, %v954
  %v958 = vld [vmem:[#allocation2 + $0x3] sm:$0xff]
  %v959 = vpack.c.bf16 %v958, %v958
  %s960 = scalar_lea.vmem %s3, 144
  %v961 = vld [vmem:[%s960] sm:$0xf]
  %v962 = vld [vmem:[%s960 + $0x4] sm:$0xf]
  %v963 = vld [vmem:[%s960 + $0x8] sm:$0xf]
  %v964 = vld [vmem:[%s960 + $0xc] sm:$0xf]
  %v965 = vld [vmem:[%s960 + $0x10] sm:$0xf]
  %v966 = vld [vmem:[%s960 + $0x14] sm:$0xf]
  %v967 = vld [vmem:[%s960 + $0x18] sm:$0xf]
  %v968 = vld [vmem:[%s960 + $0x1c] sm:$0xf]
  %v969 = vld [vmem:[%s960 + $0x20] sm:$0xf]
  %v970 = vld [vmem:[%s960 + $0x24] sm:$0xf]
  %v971 = vld [vmem:[%s960 + $0x28] sm:$0xf]
  %v972 = vld [vmem:[%s960 + $0x2c] sm:$0xf]
  %v985 = vunpack.c.l.b16 %v961
  %v986 = vunpack.c.l.b16 %v962
  %v987 = vunpack.c.l.b16 %v963
  %v988 = vunpack.c.l.b16 %v964
  %v989 = vunpack.c.l.b16 %v965
  %v990 = vunpack.c.l.b16 %v966
  %v991 = vunpack.c.l.b16 %v967
  %v992 = vunpack.c.l.b16 %v968
  %v993 = vunpack.c.l.b16 %v969
  %v994 = vunpack.c.l.b16 %v970
  %v995 = vunpack.c.l.b16 %v971
  %v996 = vunpack.c.l.b16 %v972
  %v997 = vpack.c.b16 %v986, %v985
  %v998 = vpack.c.b16 %v988, %v987
  %v999 = vpack.c.b16 %v990, %v989
  %v1000 = vpack.c.b16 %v992, %v991
  %v1001 = vpack.c.b16 %v994, %v993
  %v1002 = vpack.c.b16 %v996, %v995
  %v1010 = vsel %vm566, %v959, 0
  %1012 = vmatpush.bf16.msra.mxu0 0
  %1013 = vmatpush.bf16.msra.mxu0 0
  %1014 = vmatpush.bf16.msra.mxu0 %v1002
  %1015 = vmatpush.bf16.msra.mxu0 %v1001
  %1016 = vmatpush.bf16.msra.mxu0 %v1000
  %1017 = vmatpush.bf16.msra.mxu0 %v999
  %1018 = vmatpush.bf16.msra.mxu0 %v998
  %1019 = vmatpush.bf16.msra.mxu0 %v997
  %1020 = vmatmul.bf16.gmra.mxu0 %v1010
  %v1021 = vpop.f32.mrf.mxu0
  %v1022 = vadd.f32 0.0, %v1021
  %v1023 = vpop.f32.mrf.mxu0
  %1024 = vdwg.mxu0
  %v1025 = vadd.f32 %v894, %v1022
  %s1026 = scalar_lea.vmem %s3, 384
  %v1027 = vld [vmem:[%s1026] sm:$0xf]
  %v1028 = vld [vmem:[%s1026 + $0x4] sm:$0xf]
  %v1029 = vld [vmem:[%s1026 + $0x8] sm:$0xf]
  %v1030 = vld [vmem:[%s1026 + $0xc] sm:$0xf]
  %v1031 = vld [vmem:[%s1026 + $0x10] sm:$0xf]
  %v1032 = vld [vmem:[%s1026 + $0x14] sm:$0xf]
  %v1033 = vld [vmem:[%s1026 + $0x18] sm:$0xf]
  %v1034 = vld [vmem:[%s1026 + $0x1c] sm:$0xf]
  %v1035 = vld [vmem:[%s1026 + $0x20] sm:$0xf]
  %v1036 = vld [vmem:[%s1026 + $0x24] sm:$0xf]
  %v1037 = vld [vmem:[%s1026 + $0x28] sm:$0xf]
  %v1038 = vld [vmem:[%s1026 + $0x2c] sm:$0xf]
  %v1051 = vunpack.c.l.b16 %v1027
  %v1052 = vunpack.c.l.b16 %v1028
  %v1053 = vunpack.c.l.b16 %v1029
  %v1054 = vunpack.c.l.b16 %v1030
  %v1055 = vunpack.c.l.b16 %v1031
  %v1056 = vunpack.c.l.b16 %v1032
  %v1057 = vunpack.c.l.b16 %v1033
  %v1058 = vunpack.c.l.b16 %v1034
  %v1059 = vunpack.c.l.b16 %v1035
  %v1060 = vunpack.c.l.b16 %v1036
  %v1061 = vunpack.c.l.b16 %v1037
  %v1062 = vunpack.c.l.b16 %v1038
  %v1063 = vpack.c.b16 %v1052, %v1051
  %v1064 = vpack.c.b16 %v1054, %v1053
  %v1065 = vpack.c.b16 %v1056, %v1055
  %v1066 = vpack.c.b16 %v1058, %v1057
  %v1067 = vpack.c.b16 %v1060, %v1059
  %v1068 = vpack.c.b16 %v1062, %v1061
  %1075 = vmatpush.bf16.msra.mxu0 0
  %1076 = vmatpush.bf16.msra.mxu0 0
  %1077 = vmatpush.bf16.msra.mxu0 %v1068
  %1078 = vmatpush.bf16.msra.mxu0 %v1067
  %1079 = vmatpush.bf16.msra.mxu0 %v1066
  %1080 = vmatpush.bf16.msra.mxu0 %v1065
  %1081 = vmatpush.bf16.msra.mxu0 %v1064
  %1082 = vmatpush.bf16.msra.mxu0 %v1063
  %1083 = vmatmul.bf16.gmra.mxu0 %v1010
  %v1084 = vpop.f32.mrf.mxu0
  %v1085 = vadd.f32 0.0, %v1084
  %v1086 = vpop.f32.mrf.mxu0
  %1087 = vdwg.mxu0
  %v1088 = vadd.f32 %v957, %v1085
  %v1089 = vld [vmem:[#allocation2 + $0x4] sm:$0xff]
  %v1090 = vpack.c.bf16 %v1089, %v1089
  %s1091 = scalar_lea.vmem %s3, 192
  %v1092 = vld [vmem:[%s1091] sm:$0xf]
  %v1093 = vld [vmem:[%s1091 + $0x4] sm:$0xf]
  %v1094 = vld [vmem:[%s1091 + $0x8] sm:$0xf]
  %v1095 = vld [vmem:[%s1091 + $0xc] sm:$0xf]
  %v1096 = vld [vmem:[%s1091 + $0x10] sm:$0xf]
  %v1097 = vld [vmem:[%s1091 + $0x14] sm:$0xf]
  %v1098 = vld [vmem:[%s1091 + $0x18] sm:$0xf]
  %v1099 = vld [vmem:[%s1091 + $0x1c] sm:$0xf]
  %v1100 = vld [vmem:[%s1091 + $0x20] sm:$0xf]
  %v1101 = vld [vmem:[%s1091 + $0x24] sm:$0xf]
  %v1102 = vld [vmem:[%s1091 + $0x28] sm:$0xf]
  %v1103 = vld [vmem:[%s1091 + $0x2c] sm:$0xf]
  %v1116 = vunpack.c.l.b16 %v1092
  %v1117 = vunpack.c.l.b16 %v1093
  %v1118 = vunpack.c.l.b16 %v1094
  %v1119 = vunpack.c.l.b16 %v1095
  %v1120 = vunpack.c.l.b16 %v1096
  %v1121 = vunpack.c.l.b16 %v1097
  %v1122 = vunpack.c.l.b16 %v1098
  %v1123 = vunpack.c.l.b16 %v1099
  %v1124 = vunpack.c.l.b16 %v1100
  %v1125 = vunpack.c.l.b16 %v1101
  %v1126 = vunpack.c.l.b16 %v1102
  %v1127 = vunpack.c.l.b16 %v1103
  %v1128 = vpack.c.b16 %v1117, %v1116
  %v1129 = vpack.c.b16 %v1119, %v1118
  %v1130 = vpack.c.b16 %v1121, %v1120
  %v1131 = vpack.c.b16 %v1123, %v1122
  %v1132 = vpack.c.b16 %v1125, %v1124
  %v1133 = vpack.c.b16 %v1127, %v1126
  %v1141 = vsel %vm566, %v1090, 0
  %1143 = vmatpush.bf16.msra.mxu0 0
  %1144 = vmatpush.bf16.msra.mxu0 0
  %1145 = vmatpush.bf16.msra.mxu0 %v1133
  %1146 = vmatpush.bf16.msra.mxu0 %v1132
  %1147 = vmatpush.bf16.msra.mxu0 %v1131
  %1148 = vmatpush.bf16.msra.mxu0 %v1130
  %1149 = vmatpush.bf16.msra.mxu0 %v1129
  %1150 = vmatpush.bf16.msra.mxu0 %v1128
  %1151 = vmatmul.bf16.gmra.mxu0 %v1141
  %v1152 = vpop.f32.mrf.mxu0
  %v1153 = vadd.f32 0.0, %v1152
  %v1154 = vpop.f32.mrf.mxu0
  %1155 = vdwg.mxu0
  %v1156 = vadd.f32 %v1025, %v1153
  %s1157 = scalar_lea.vmem %s3, 432
  %v1158 = vld [vmem:[%s1157] sm:$0xf]
  %v1159 = vld [vmem:[%s1157 + $0x4] sm:$0xf]
  %v1160 = vld [vmem:[%s1157 + $0x8] sm:$0xf]
  %v1161 = vld [vmem:[%s1157 + $0xc] sm:$0xf]
  %v1162 = vld [vmem:[%s1157 + $0x10] sm:$0xf]
  %v1163 = vld [vmem:[%s1157 + $0x14] sm:$0xf]
  %v1164 = vld [vmem:[%s1157 + $0x18] sm:$0xf]
  %v1165 = vld [vmem:[%s1157 + $0x1c] sm:$0xf]
  %v1166 = vld [vmem:[%s1157 + $0x20] sm:$0xf]
  %v1167 = vld [vmem:[%s1157 + $0x24] sm:$0xf]
  %v1168 = vld [vmem:[%s1157 + $0x28] sm:$0xf]
  %v1169 = vld [vmem:[%s1157 + $0x2c] sm:$0xf]
  %v1182 = vunpack.c.l.b16 %v1158
  %v1183 = vunpack.c.l.b16 %v1159
  %v1184 = vunpack.c.l.b16 %v1160
  %v1185 = vunpack.c.l.b16 %v1161
  %v1186 = vunpack.c.l.b16 %v1162
  %v1187 = vunpack.c.l.b16 %v1163
  %v1188 = vunpack.c.l.b16 %v1164
  %v1189 = vunpack.c.l.b16 %v1165
  %v1190 = vunpack.c.l.b16 %v1166
  %v1191 = vunpack.c.l.b16 %v1167
  %v1192 = vunpack.c.l.b16 %v1168
  %v1193 = vunpack.c.l.b16 %v1169
  %v1194 = vpack.c.b16 %v1183, %v1182
  %v1195 = vpack.c.b16 %v1185, %v1184
  %v1196 = vpack.c.b16 %v1187, %v1186
  %v1197 = vpack.c.b16 %v1189, %v1188
  %v1198 = vpack.c.b16 %v1191, %v1190
  %v1199 = vpack.c.b16 %v1193, %v1192
  %1206 = vmatpush.bf16.msra.mxu0 0
  %1207 = vmatpush.bf16.msra.mxu0 0
  %1208 = vmatpush.bf16.msra.mxu0 %v1199
  %1209 = vmatpush.bf16.msra.mxu0 %v1198
  %1210 = vmatpush.bf16.msra.mxu0 %v1197
  %1211 = vmatpush.bf16.msra.mxu0 %v1196
  %1212 = vmatpush.bf16.msra.mxu0 %v1195
  %1213 = vmatpush.bf16.msra.mxu0 %v1194
  %1214 = vmatmul.bf16.gmra.mxu0 %v1141
  %v1215 = vpop.f32.mrf.mxu0
  %v1216 = vadd.f32 0.0, %v1215
  %v1217 = vpop.f32.mrf.mxu0
  %1218 = vdwg.mxu0
  %v1219 = vadd.f32 %v1088, %v1216
  %v1221 = vperm.slane %v61, 0
  %v1223 = vadd.f32 %v1156, %v1221
  %v1224 = vmax.f32 %v1223, 0.0
  %v1225 = vadd.f32 %v1219, %v1221
  %v1226 = vmax.f32 %v1225, 0.0
  %v1227 = vmax.f32 %v1224, %v1226
  %vm1228 = vcmask 64512
  %v1229 = vsel %vm1228, %v50, 0
  %1231 = vmatpush.msra.mxu0 0.0
  %1232 = vmatpush.msra.mxu0 0.0
  %1233 = vmatpush.msra.mxu0 0.0
  %1234 = vmatpush.msra.mxu0 0.0
  %1235 = vmatpush.msra.mxu0 0.0
  %1236 = vmatpush.msra.mxu0 0.0
  %1237 = vmatpush.msra.mxu0 0.0
  %1238 = vmatpush.msra.mxu0 0.0
  %1239 = vmatpush.msra.mxu0 0.0
  %1240 = vmatpush.msra.mxu0 0.0
  %1241 = vmatpush.msra.mxu0 0.0
  %1242 = vmatpush.msra.mxu0 0.0
  %1243 = vmatpush.msra.mxu0 0.0
  %1244 = vmatpush.msra.mxu0 0.0
  %1245 = vmatpush.msra.mxu0 0.0
  %1246 = vmatpush.msra.mxu0 %v1227
  %1247 = vmatmul.f32.gmra.mxu0 %v1229
  %v1248 = vpop.f32.mrf.mxu0
  %v1249 = vadd.f32 0.0, %v1248
  %1250 = vdwg.mxu0
  %v1251 = vsel %vm1228, %v58, 0
  %1253 = vmatpush.msra.mxu0 0.0
  %1254 = vmatpush.msra.mxu0 0.0
  %1255 = vmatpush.msra.mxu0 0.0
  %1256 = vmatpush.msra.mxu0 0.0
  %1257 = vmatpush.msra.mxu0 0.0
  %1258 = vmatpush.msra.mxu0 0.0
  %1259 = vmatpush.msra.mxu0 0.0
  %1260 = vmatpush.msra.mxu0 0.0
  %1261 = vmatpush.msra.mxu0 0.0
  %1262 = vmatpush.msra.mxu0 0.0
  %1263 = vmatpush.msra.mxu0 0.0
  %1264 = vmatpush.msra.mxu0 0.0
  %1265 = vmatpush.msra.mxu0 0.0
  %1266 = vmatpush.msra.mxu0 0.0
  %1267 = vmatpush.msra.mxu0 0.0
  %1268 = vmatpush.msra.mxu0 %v1227
  %1269 = vmatmul.f32.gmra.mxu0 %v1251
  %v1270 = vpop.f32.mrf.mxu0
  %v1271 = vadd.f32 0.0, %v1270
  %1272 = vdwg.mxu0
  %v1273 = vmax.f32 %v1249, %v1271
  %vm1274 = vcmask 516096
  %1275 = vst.msk [vmem:[#allocation3] sm:$0x1] %vm1274, %v1273
  %v1277 = vrot.slane %v1273, 1
  %1278 = vrot.lane.b32.xlu0 %v1277, 64
  %v1279 = vpop.permute.xlu0 %1278
  %vm1281 = vcmask 1040896
  %1282 = vst.msk [vmem:[#allocation3] sm:$0x1] %vm1281, %v1279
  %v1283 = vrot.slane %v1273, 2
  %1285 = vst.msk [vmem:[#allocation3 + $0x8] sm:$0x1] %vm1274, %v1283
  %v1286 = vrot.slane %v1273, 3
  %1287 = vrot.lane.b32.xlu0 %v1286, 64
  %v1288 = vpop.permute.xlu0 %1287
  %1290 = vst.msk [vmem:[#allocation3 + $0x8] sm:$0x1] %vm1281, %v1288
  %s1291 = scalar_lea.vmem %s0, 32
  %v1292 = vld [vmem:[%s1291] sm:$0xff]
  %v1293 = vld [vmem:[%s1291 + $0x8] sm:$0xff]
  %v1294 = vld [vmem:[%s1291 + $0x10] sm:$0xff]
  %v1295 = vpack.c.bf16 %v1293, %v1292
  %v1296 = vpack.c.bf16 %v1294, %v1294
  %v1297 = vld [vmem:[%s1] sm:$0xf]
  %v1298 = vld [vmem:[%s1 + $0x4] sm:$0xf]
  %v1299 = vld [vmem:[%s1 + $0x8] sm:$0xf]
  %v1300 = vld [vmem:[%s1 + $0xc] sm:$0xf]
  %v1301 = vld [vmem:[%s73] sm:$0xf]
  %v1302 = vld [vmem:[%s73 + $0x4] sm:$0xf]
  %v1303 = vld [vmem:[%s73 + $0x8] sm:$0xf]
  %v1304 = vld [vmem:[%s73 + $0xc] sm:$0xf]
  %v1305 = vld [vmem:[%s1291 + $0x1] sm:$0xff]
  %v1306 = vld [vmem:[%s1291 + $0x9] sm:$0xff]
  %v1307 = vld [vmem:[%s1291 + $0x11] sm:$0xff]
  %v1308 = vpack.c.bf16 %v1306, %v1305
  %v1309 = vpack.c.bf16 %v1307, %v1307
  %v1310 = vld [vmem:[%s83] sm:$0xf]
  %v1311 = vld [vmem:[%s83 + $0x4] sm:$0xf]
  %v1312 = vld [vmem:[%s83 + $0x8] sm:$0xf]
  %v1313 = vld [vmem:[%s83 + $0xc] sm:$0xf]
  %v1318 = vunpack.c.l.b16 %v1310
  %v1319 = vunpack.c.l.b16 %v1311
  %v1320 = vunpack.c.l.b16 %v1312
  %v1321 = vunpack.c.l.b16 %v1313
  %v1322 = vpack.c.b16 %v1319, %v1318
  %v1323 = vpack.c.b16 %v1321, %v1320
  %v1327 = vsel %vm100, %v1308, 0
  %v1330 = vsel %vm100, %v1309, 0
  %1332 = vmatpush.bf16.msra.mxu0 0
  %1333 = vmatpush.bf16.msra.mxu0 0
  %1334 = vmatpush.bf16.msra.mxu0 0
  %1335 = vmatpush.bf16.msra.mxu0 0
  %1336 = vmatpush.bf16.msra.mxu0 0
  %1337 = vmatpush.bf16.msra.mxu0 0
  %1338 = vmatpush.bf16.msra.mxu0 %v1323
  %1339 = vmatpush.bf16.msra.mxu0 %v1322
  %1340 = vmatmul.bf16.gmra.mxu0 %v1327
  %v1341 = vpop.f32.mrf.mxu0
  %v1342 = vadd.f32 0.0, %v1341
  %v1343 = vpop.f32.mrf.mxu0
  %v1344 = vadd.f32 0.0, %v1343
  %1345 = vmatmul.bf16.gmra.mxu0 %v1330
  %v1346 = vpop.f32.mrf.mxu0
  %v1347 = vadd.f32 0.0, %v1346
  %v1348 = vpop.f32.mrf.mxu0
  %1349 = vdwg.mxu0
  %v1354 = vunpack.c.l.b16 %v1297
  %v1355 = vunpack.c.l.b16 %v1298
  %v1356 = vunpack.c.l.b16 %v1299
  %v1357 = vunpack.c.l.b16 %v1300
  %v1358 = vpack.c.b16 %v1355, %v1354
  %v1359 = vpack.c.b16 %v1357, %v1356
  %v1363 = vsel %vm100, %v1295, 0
  %v1366 = vsel %vm100, %v1296, 0
  %1368 = vmatpush.bf16.msra.mxu0 0
  %1369 = vmatpush.bf16.msra.mxu0 0
  %1370 = vmatpush.bf16.msra.mxu0 0
  %1371 = vmatpush.bf16.msra.mxu0 0
  %1372 = vmatpush.bf16.msra.mxu0 0
  %1373 = vmatpush.bf16.msra.mxu0 0
  %1374 = vmatpush.bf16.msra.mxu0 %v1359
  %1375 = vmatpush.bf16.msra.mxu0 %v1358
  %1376 = vmatmul.bf16.gmra.mxu0 %v1363
  %v1377 = vpop.f32.mrf.mxu0
  %v1378 = vadd.f32 %v1342, %v1377
  %v1379 = vpop.f32.mrf.mxu0
  %v1380 = vadd.f32 %v1344, %v1379
  %1381 = vmatmul.bf16.gmra.mxu0 %v1366
  %v1382 = vpop.f32.mrf.mxu0
  %v1383 = vadd.f32 %v1347, %v1382
  %v1384 = vpop.f32.mrf.mxu0
  %1385 = vdwg.mxu0
  %v1386 = vld [vmem:[%s161] sm:$0xf]
  %v1387 = vld [vmem:[%s161 + $0x4] sm:$0xf]
  %v1388 = vld [vmem:[%s161 + $0x8] sm:$0xf]
  %v1389 = vld [vmem:[%s161 + $0xc] sm:$0xf]
  %v1394 = vunpack.c.l.b16 %v1386
  %v1395 = vunpack.c.l.b16 %v1387
  %v1396 = vunpack.c.l.b16 %v1388
  %v1397 = vunpack.c.l.b16 %v1389
  %v1398 = vpack.c.b16 %v1395, %v1394
  %v1399 = vpack.c.b16 %v1397, %v1396
  %1402 = vmatpush.bf16.msra.mxu0 0
  %1403 = vmatpush.bf16.msra.mxu0 0
  %1404 = vmatpush.bf16.msra.mxu0 0
  %1405 = vmatpush.bf16.msra.mxu0 0
  %1406 = vmatpush.bf16.msra.mxu0 0
  %1407 = vmatpush.bf16.msra.mxu0 0
  %1408 = vmatpush.bf16.msra.mxu0 %v1399
  %1409 = vmatpush.bf16.msra.mxu0 %v1398
  %1410 = vmatmul.bf16.gmra.mxu0 %v1327
  %v1411 = vpop.f32.mrf.mxu0
  %v1412 = vadd.f32 0.0, %v1411
  %v1413 = vpop.f32.mrf.mxu0
  %v1414 = vadd.f32 0.0, %v1413
  %1415 = vmatmul.bf16.gmra.mxu0 %v1330
  %v1416 = vpop.f32.mrf.mxu0
  %v1417 = vadd.f32 0.0, %v1416
  %v1418 = vpop.f32.mrf.mxu0
  %1419 = vdwg.mxu0
  %v1424 = vunpack.c.l.b16 %v1301
  %v1425 = vunpack.c.l.b16 %v1302
  %v1426 = vunpack.c.l.b16 %v1303
  %v1427 = vunpack.c.l.b16 %v1304
  %v1428 = vpack.c.b16 %v1425, %v1424
  %v1429 = vpack.c.b16 %v1427, %v1426
  %1432 = vmatpush.bf16.msra.mxu0 0
  %1433 = vmatpush.bf16.msra.mxu0 0
  %1434 = vmatpush.bf16.msra.mxu0 0
  %1435 = vmatpush.bf16.msra.mxu0 0
  %1436 = vmatpush.bf16.msra.mxu0 0
  %1437 = vmatpush.bf16.msra.mxu0 0
  %1438 = vmatpush.bf16.msra.mxu0 %v1429
  %1439 = vmatpush.bf16.msra.mxu0 %v1428
  %1440 = vmatmul.bf16.gmra.mxu0 %v1363
  %v1441 = vpop.f32.mrf.mxu0
  %v1442 = vadd.f32 %v1412, %v1441
  %v1443 = vpop.f32.mrf.mxu0
  %v1444 = vadd.f32 %v1414, %v1443
  %1445 = vmatmul.bf16.gmra.mxu0 %v1366
  %v1446 = vpop.f32.mrf.mxu0
  %v1447 = vadd.f32 %v1417, %v1446
  %v1448 = vpop.f32.mrf.mxu0
  %1449 = vdwg.mxu0
  %v1450 = vld [vmem:[%s1291 + $0x2] sm:$0xff]
  %v1451 = vld [vmem:[%s1291 + $0xa] sm:$0xff]
  %v1452 = vld [vmem:[%s1291 + $0x12] sm:$0xff]
  %v1453 = vpack.c.bf16 %v1451, %v1450
  %v1454 = vpack.c.bf16 %v1452, %v1452
  %v1455 = vld [vmem:[%s231] sm:$0xf]
  %v1456 = vld [vmem:[%s231 + $0x4] sm:$0xf]
  %v1457 = vld [vmem:[%s231 + $0x8] sm:$0xf]
  %v1458 = vld [vmem:[%s231 + $0xc] sm:$0xf]
  %v1463 = vunpack.c.l.b16 %v1455
  %v1464 = vunpack.c.l.b16 %v1456
  %v1465 = vunpack.c.l.b16 %v1457
  %v1466 = vunpack.c.l.b16 %v1458
  %v1467 = vpack.c.b16 %v1464, %v1463
  %v1468 = vpack.c.b16 %v1466, %v1465
  %v1472 = vsel %vm100, %v1453, 0
  %v1475 = vsel %vm100, %v1454, 0
  %1477 = vmatpush.bf16.msra.mxu0 0
  %1478 = vmatpush.bf16.msra.mxu0 0
  %1479 = vmatpush.bf16.msra.mxu0 0
  %1480 = vmatpush.bf16.msra.mxu0 0
  %1481 = vmatpush.bf16.msra.mxu0 0
  %1482 = vmatpush.bf16.msra.mxu0 0
  %1483 = vmatpush.bf16.msra.mxu0 %v1468
  %1484 = vmatpush.bf16.msra.mxu0 %v1467
  %1485 = vmatmul.bf16.gmra.mxu0 %v1472
  %v1486 = vpop.f32.mrf.mxu0
  %v1487 = vadd.f32 0.0, %v1486
  %v1488 = vpop.f32.mrf.mxu0
  %v1489 = vadd.f32 0.0, %v1488
  %1490 = vmatmul.bf16.gmra.mxu0 %v1475
  %v1491 = vpop.f32.mrf.mxu0
  %v1492 = vadd.f32 0.0, %v1491
  %v1493 = vpop.f32.mrf.mxu0
  %1494 = vdwg.mxu0
  %v1495 = vadd.f32 %v1378, %v1487
  %v1496 = vadd.f32 %v1380, %v1489
  %v1497 = vadd.f32 %v1383, %v1492
  %v1498 = vld [vmem:[%s275] sm:$0xf]
  %v1499 = vld [vmem:[%s275 + $0x4] sm:$0xf]
  %v1500 = vld [vmem:[%s275 + $0x8] sm:$0xf]
  %v1501 = vld [vmem:[%s275 + $0xc] sm:$0xf]
  %v1506 = vunpack.c.l.b16 %v1498
  %v1507 = vunpack.c.l.b16 %v1499
  %v1508 = vunpack.c.l.b16 %v1500
  %v1509 = vunpack.c.l.b16 %v1501
  %v1510 = vpack.c.b16 %v1507, %v1506
  %v1511 = vpack.c.b16 %v1509, %v1508
  %1514 = vmatpush.bf16.msra.mxu0 0
  %1515 = vmatpush.bf16.msra.mxu0 0
  %1516 = vmatpush.bf16.msra.mxu0 0
  %1517 = vmatpush.bf16.msra.mxu0 0
  %1518 = vmatpush.bf16.msra.mxu0 0
  %1519 = vmatpush.bf16.msra.mxu0 0
  %1520 = vmatpush.bf16.msra.mxu0 %v1511
  %1521 = vmatpush.bf16.msra.mxu0 %v1510
  %1522 = vmatmul.bf16.gmra.mxu0 %v1472
  %v1523 = vpop.f32.mrf.mxu0
  %v1524 = vadd.f32 0.0, %v1523
  %v1525 = vpop.f32.mrf.mxu0
  %v1526 = vadd.f32 0.0, %v1525
  %1527 = vmatmul.bf16.gmra.mxu0 %v1475
  %v1528 = vpop.f32.mrf.mxu0
  %v1529 = vadd.f32 0.0, %v1528
  %v1530 = vpop.f32.mrf.mxu0
  %1531 = vdwg.mxu0
  %v1532 = vadd.f32 %v1442, %v1524
  %v1533 = vadd.f32 %v1444, %v1526
  %v1534 = vadd.f32 %v1447, %v1529
  %v1535 = vld [vmem:[%s1291 + $0x3] sm:$0xff]
  %v1536 = vld [vmem:[%s1291 + $0xb] sm:$0xff]
  %v1537 = vld [vmem:[%s1291 + $0x13] sm:$0xff]
  %v1538 = vpack.c.bf16 %v1536, %v1535
  %v1539 = vpack.c.bf16 %v1537, %v1537
  %v1540 = vld [vmem:[%s318] sm:$0xf]
  %v1541 = vld [vmem:[%s318 + $0x4] sm:$0xf]
  %v1542 = vld [vmem:[%s318 + $0x8] sm:$0xf]
  %v1543 = vld [vmem:[%s318 + $0xc] sm:$0xf]
  %v1548 = vunpack.c.l.b16 %v1540
  %v1549 = vunpack.c.l.b16 %v1541
  %v1550 = vunpack.c.l.b16 %v1542
  %v1551 = vunpack.c.l.b16 %v1543
  %v1552 = vpack.c.b16 %v1549, %v1548
  %v1553 = vpack.c.b16 %v1551, %v1550
  %v1557 = vsel %vm100, %v1538, 0
  %v1560 = vsel %vm100, %v1539, 0
  %1562 = vmatpush.bf16.msra.mxu0 0
  %1563 = vmatpush.bf16.msra.mxu0 0
  %1564 = vmatpush.bf16.msra.mxu0 0
  %1565 = vmatpush.bf16.msra.mxu0 0
  %1566 = vmatpush.bf16.msra.mxu0 0
  %1567 = vmatpush.bf16.msra.mxu0 0
  %1568 = vmatpush.bf16.msra.mxu0 %v1553
  %1569 = vmatpush.bf16.msra.mxu0 %v1552
  %1570 = vmatmul.bf16.gmra.mxu0 %v1557
  %v1571 = vpop.f32.mrf.mxu0
  %v1572 = vadd.f32 0.0, %v1571
  %v1573 = vpop.f32.mrf.mxu0
  %v1574 = vadd.f32 0.0, %v1573
  %1575 = vmatmul.bf16.gmra.mxu0 %v1560
  %v1576 = vpop.f32.mrf.mxu0
  %v1577 = vadd.f32 0.0, %v1576
  %v1578 = vpop.f32.mrf.mxu0
  %1579 = vdwg.mxu0
  %v1580 = vadd.f32 %v1495, %v1572
  %v1581 = vadd.f32 %v1496, %v1574
  %v1582 = vadd.f32 %v1497, %v1577
  %v1583 = vld [vmem:[%s362] sm:$0xf]
  %v1584 = vld [vmem:[%s362 + $0x4] sm:$0xf]
  %v1585 = vld [vmem:[%s362 + $0x8] sm:$0xf]
  %v1586 = vld [vmem:[%s362 + $0xc] sm:$0xf]
  %v1591 = vunpack.c.l.b16 %v1583
  %v1592 = vunpack.c.l.b16 %v1584
  %v1593 = vunpack.c.l.b16 %v1585
  %v1594 = vunpack.c.l.b16 %v1586
  %v1595 = vpack.c.b16 %v1592, %v1591
  %v1596 = vpack.c.b16 %v1594, %v1593
  %1599 = vmatpush.bf16.msra.mxu0 0
  %1600 = vmatpush.bf16.msra.mxu0 0
  %1601 = vmatpush.bf16.msra.mxu0 0
  %1602 = vmatpush.bf16.msra.mxu0 0
  %1603 = vmatpush.bf16.msra.mxu0 0
  %1604 = vmatpush.bf16.msra.mxu0 0
  %1605 = vmatpush.bf16.msra.mxu0 %v1596
  %1606 = vmatpush.bf16.msra.mxu0 %v1595
  %1607 = vmatmul.bf16.gmra.mxu0 %v1557
  %v1608 = vpop.f32.mrf.mxu0
  %v1609 = vadd.f32 0.0, %v1608
  %v1610 = vpop.f32.mrf.mxu0
  %v1611 = vadd.f32 0.0, %v1610
  %1612 = vmatmul.bf16.gmra.mxu0 %v1560
  %v1613 = vpop.f32.mrf.mxu0
  %v1614 = vadd.f32 0.0, %v1613
  %v1615 = vpop.f32.mrf.mxu0
  %1616 = vdwg.mxu0
  %v1617 = vadd.f32 %v1532, %v1609
  %v1618 = vadd.f32 %v1533, %v1611
  %v1619 = vadd.f32 %v1534, %v1614
  %v1620 = vld [vmem:[%s1291 + $0x4] sm:$0xff]
  %v1621 = vld [vmem:[%s1291 + $0xc] sm:$0xff]
  %v1622 = vld [vmem:[%s1291 + $0x14] sm:$0xff]
  %v1623 = vpack.c.bf16 %v1621, %v1620
  %v1624 = vpack.c.bf16 %v1622, %v1622
  %v1625 = vld [vmem:[%s405] sm:$0xf]
  %v1626 = vld [vmem:[%s405 + $0x4] sm:$0xf]
  %v1627 = vld [vmem:[%s405 + $0x8] sm:$0xf]
  %v1628 = vld [vmem:[%s405 + $0xc] sm:$0xf]
  %v1633 = vunpack.c.l.b16 %v1625
  %v1634 = vunpack.c.l.b16 %v1626
  %v1635 = vunpack.c.l.b16 %v1627
  %v1636 = vunpack.c.l.b16 %v1628
  %v1637 = vpack.c.b16 %v1634, %v1633
  %v1638 = vpack.c.b16 %v1636, %v1635
  %v1642 = vsel %vm100, %v1623, 0
  %v1645 = vsel %vm100, %v1624, 0
  %1647 = vmatpush.bf16.msra.mxu0 0
  %1648 = vmatpush.bf16.msra.mxu0 0
  %1649 = vmatpush.bf16.msra.mxu0 0
  %1650 = vmatpush.bf16.msra.mxu0 0
  %1651 = vmatpush.bf16.msra.mxu0 0
  %1652 = vmatpush.bf16.msra.mxu0 0
  %1653 = vmatpush.bf16.msra.mxu0 %v1638
  %1654 = vmatpush.bf16.msra.mxu0 %v1637
  %1655 = vmatmul.bf16.gmra.mxu0 %v1642
  %v1656 = vpop.f32.mrf.mxu0
  %v1657 = vadd.f32 0.0, %v1656
  %v1658 = vpop.f32.mrf.mxu0
  %v1659 = vadd.f32 0.0, %v1658
  %1660 = vmatmul.bf16.gmra.mxu0 %v1645
  %v1661 = vpop.f32.mrf.mxu0
  %v1662 = vadd.f32 0.0, %v1661
  %v1663 = vpop.f32.mrf.mxu0
  %1664 = vdwg.mxu0
  %v1665 = vadd.f32 %v1580, %v1657
  %v1666 = vadd.f32 %v1581, %v1659
  %v1667 = vadd.f32 %v1582, %v1662
  %v1668 = vld [vmem:[%s449] sm:$0xf]
  %v1669 = vld [vmem:[%s449 + $0x4] sm:$0xf]
  %v1670 = vld [vmem:[%s449 + $0x8] sm:$0xf]
  %v1671 = vld [vmem:[%s449 + $0xc] sm:$0xf]
  %v1676 = vunpack.c.l.b16 %v1668
  %v1677 = vunpack.c.l.b16 %v1669
  %v1678 = vunpack.c.l.b16 %v1670
  %v1679 = vunpack.c.l.b16 %v1671
  %v1680 = vpack.c.b16 %v1677, %v1676
  %v1681 = vpack.c.b16 %v1679, %v1678
  %1684 = vmatpush.bf16.msra.mxu0 0
  %1685 = vmatpush.bf16.msra.mxu0 0
  %1686 = vmatpush.bf16.msra.mxu0 0
  %1687 = vmatpush.bf16.msra.mxu0 0
  %1688 = vmatpush.bf16.msra.mxu0 0
  %1689 = vmatpush.bf16.msra.mxu0 0
  %1690 = vmatpush.bf16.msra.mxu0 %v1681
  %1691 = vmatpush.bf16.msra.mxu0 %v1680
  %1692 = vmatmul.bf16.gmra.mxu0 %v1642
  %v1693 = vpop.f32.mrf.mxu0
  %v1694 = vadd.f32 0.0, %v1693
  %v1695 = vpop.f32.mrf.mxu0
  %v1696 = vadd.f32 0.0, %v1695
  %1697 = vmatmul.bf16.gmra.mxu0 %v1645
  %v1698 = vpop.f32.mrf.mxu0
  %v1699 = vadd.f32 0.0, %v1698
  %v1700 = vpop.f32.mrf.mxu0
  %1701 = vdwg.mxu0
  %v1702 = vadd.f32 %v1617, %v1694
  %v1703 = vadd.f32 %v1618, %v1696
  %v1704 = vadd.f32 %v1619, %v1699
  %v1705 = vadd.f32 %v1665, %v488
  %v1706 = vadd.f32 %v1666, %v488
  %v1707 = vadd.f32 %v1667, %v488
  %v1708 = vmax.f32 %v1705, 0.0
  %v1709 = vmax.f32 %v1706, 0.0
  %v1710 = vmax.f32 %v1707, 0.0
  %v1711 = vadd.f32 %v1702, %v488
  %v1712 = vadd.f32 %v1703, %v488
  %v1713 = vadd.f32 %v1704, %v488
  %v1714 = vmax.f32 %v1711, 0.0
  %v1715 = vmax.f32 %v1712, 0.0
  %v1716 = vmax.f32 %v1713, 0.0
  %v1717 = vmax.f32 %v1708, %v1714
  %v1718 = vmax.f32 %v1709, %v1715
  %v1719 = vmax.f32 %v1710, %v1716
  %1720 = vmatpush.msra.mxu0 0.0
  %1721 = vmatpush.msra.mxu0 0.0
  %1722 = vmatpush.msra.mxu0 0.0
  %1723 = vmatpush.msra.mxu0 0.0
  %1724 = vmatpush.msra.mxu0 0.0
  %1725 = vmatpush.msra.mxu0 0.0
  %1726 = vmatpush.msra.mxu0 0.0
  %1727 = vmatpush.msra.mxu0 0.0
  %1728 = vmatpush.msra.mxu0 0.0
  %1729 = vmatpush.msra.mxu0 0.0
  %1730 = vmatpush.msra.mxu0 0.0
  %1731 = vmatpush.msra.mxu0 0.0
  %1732 = vmatpush.msra.mxu0 0.0
  %1733 = vmatpush.msra.mxu0 %v1719
  %1734 = vmatpush.msra.mxu0 %v1718
  %1735 = vmatpush.msra.mxu0 %v1717
  %1736 = vmatmul.f32.gmra.mxu0 %v507
  %v1737 = vpop.f32.mrf.mxu0
  %v1738 = vadd.f32 0.0, %v1737
  %1739 = vmatmul.f32.gmra.mxu0 %v510
  %v1740 = vpop.f32.mrf.mxu0
  %v1741 = vadd.f32 0.0, %v1740
  %1742 = vdwg.mxu0
  %1743 = vmatpush.msra.mxu0 0.0
  %1744 = vmatpush.msra.mxu0 0.0
  %1745 = vmatpush.msra.mxu0 0.0
  %1746 = vmatpush.msra.mxu0 0.0
  %1747 = vmatpush.msra.mxu0 0.0
  %1748 = vmatpush.msra.mxu0 0.0
  %1749 = vmatpush.msra.mxu0 0.0
  %1750 = vmatpush.msra.mxu0 0.0
  %1751 = vmatpush.msra.mxu0 0.0
  %1752 = vmatpush.msra.mxu0 0.0
  %1753 = vmatpush.msra.mxu0 0.0
  %1754 = vmatpush.msra.mxu0 0.0
  %1755 = vmatpush.msra.mxu0 0.0
  %1756 = vmatpush.msra.mxu0 %v1719
  %1757 = vmatpush.msra.mxu0 %v1718
  %1758 = vmatpush.msra.mxu0 %v1717
  %1759 = vmatmul.f32.gmra.mxu0 %v536
  %v1760 = vpop.f32.mrf.mxu0
  %v1761 = vadd.f32 0.0, %v1760
  %1762 = vmatmul.f32.gmra.mxu0 %v539
  %v1763 = vpop.f32.mrf.mxu0
  %v1764 = vadd.f32 0.0, %v1763
  %1765 = vdwg.mxu0
  %v1766 = vmax.f32 %v1738, %v1761
  %v1767 = vmax.f32 %v1741, %v1764
  %1768 = vst.msk [vmem:[#allocation2] sm:$0xff] %vm566, %v1766
  %1769 = vst.msk [vmem:[#allocation2 + $0x8] sm:$0xf] %vm568, %v1767
  %v1770 = vld [vmem:[#allocation2] sm:$0xff]
  %v1771 = vpack.c.bf16 %v1770, %v1770
  %v1772 = vld [vmem:[%s3] sm:$0xf]
  %v1773 = vld [vmem:[%s3 + $0x4] sm:$0xf]
  %v1774 = vld [vmem:[%s3 + $0x8] sm:$0xf]
  %v1775 = vld [vmem:[%s3 + $0xc] sm:$0xf]
  %v1776 = vld [vmem:[%s3 + $0x10] sm:$0xf]
  %v1777 = vld [vmem:[%s3 + $0x14] sm:$0xf]
  %v1778 = vld [vmem:[%s3 + $0x18] sm:$0xf]
  %v1779 = vld [vmem:[%s3 + $0x1c] sm:$0xf]
  %v1780 = vld [vmem:[%s3 + $0x20] sm:$0xf]
  %v1781 = vld [vmem:[%s3 + $0x24] sm:$0xf]
  %v1782 = vld [vmem:[%s3 + $0x28] sm:$0xf]
  %v1783 = vld [vmem:[%s3 + $0x2c] sm:$0xf]
  %v1784 = vld [vmem:[%s584] sm:$0xf]
  %v1785 = vld [vmem:[%s584 + $0x4] sm:$0xf]
  %v1786 = vld [vmem:[%s584 + $0x8] sm:$0xf]
  %v1787 = vld [vmem:[%s584 + $0xc] sm:$0xf]
  %v1788 = vld [vmem:[%s584 + $0x10] sm:$0xf]
  %v1789 = vld [vmem:[%s584 + $0x14] sm:$0xf]
  %v1790 = vld [vmem:[%s584 + $0x18] sm:$0xf]
  %v1791 = vld [vmem:[%s584 + $0x1c] sm:$0xf]
  %v1792 = vld [vmem:[%s584 + $0x20] sm:$0xf]
  %v1793 = vld [vmem:[%s584 + $0x24] sm:$0xf]
  %v1794 = vld [vmem:[%s584 + $0x28] sm:$0xf]
  %v1795 = vld [vmem:[%s584 + $0x2c] sm:$0xf]
  %v1796 = vld [vmem:[#allocation2 + $0x1] sm:$0xff]
  %v1797 = vpack.c.bf16 %v1796, %v1796
  %v1798 = vld [vmem:[%s599] sm:$0xf]
  %v1799 = vld [vmem:[%s599 + $0x4] sm:$0xf]
  %v1800 = vld [vmem:[%s599 + $0x8] sm:$0xf]
  %v1801 = vld [vmem:[%s599 + $0xc] sm:$0xf]
  %v1802 = vld [vmem:[%s599 + $0x10] sm:$0xf]
  %v1803 = vld [vmem:[%s599 + $0x14] sm:$0xf]
  %v1804 = vld [vmem:[%s599 + $0x18] sm:$0xf]
  %v1805 = vld [vmem:[%s599 + $0x1c] sm:$0xf]
  %v1806 = vld [vmem:[%s599 + $0x20] sm:$0xf]
  %v1807 = vld [vmem:[%s599 + $0x24] sm:$0xf]
  %v1808 = vld [vmem:[%s599 + $0x28] sm:$0xf]
  %v1809 = vld [vmem:[%s599 + $0x2c] sm:$0xf]
  %v1822 = vunpack.c.l.b16 %v1798
  %v1823 = vunpack.c.l.b16 %v1799
  %v1824 = vunpack.c.l.b16 %v1800
  %v1825 = vunpack.c.l.b16 %v1801
  %v1826 = vunpack.c.l.b16 %v1802
  %v1827 = vunpack.c.l.b16 %v1803
  %v1828 = vunpack.c.l.b16 %v1804
  %v1829 = vunpack.c.l.b16 %v1805
  %v1830 = vunpack.c.l.b16 %v1806
  %v1831 = vunpack.c.l.b16 %v1807
  %v1832 = vunpack.c.l.b16 %v1808
  %v1833 = vunpack.c.l.b16 %v1809
  %v1834 = vpack.c.b16 %v1823, %v1822
  %v1835 = vpack.c.b16 %v1825, %v1824
  %v1836 = vpack.c.b16 %v1827, %v1826
  %v1837 = vpack.c.b16 %v1829, %v1828
  %v1838 = vpack.c.b16 %v1831, %v1830
  %v1839 = vpack.c.b16 %v1833, %v1832
  %v1847 = vsel %vm566, %v1797, 0
  %1849 = vmatpush.bf16.msra.mxu0 0
  %1850 = vmatpush.bf16.msra.mxu0 0
  %1851 = vmatpush.bf16.msra.mxu0 %v1839
  %1852 = vmatpush.bf16.msra.mxu0 %v1838
  %1853 = vmatpush.bf16.msra.mxu0 %v1837
  %1854 = vmatpush.bf16.msra.mxu0 %v1836
  %1855 = vmatpush.bf16.msra.mxu0 %v1835
  %1856 = vmatpush.bf16.msra.mxu0 %v1834
  %1857 = vmatmul.bf16.gmra.mxu0 %v1847
  %v1858 = vpop.f32.mrf.mxu0
  %v1859 = vadd.f32 0.0, %v1858
  %v1860 = vpop.f32.mrf.mxu0
  %1861 = vdwg.mxu0
  %v1874 = vunpack.c.l.b16 %v1772
  %v1875 = vunpack.c.l.b16 %v1773
  %v1876 = vunpack.c.l.b16 %v1774
  %v1877 = vunpack.c.l.b16 %v1775
  %v1878 = vunpack.c.l.b16 %v1776
  %v1879 = vunpack.c.l.b16 %v1777
  %v1880 = vunpack.c.l.b16 %v1778
  %v1881 = vunpack.c.l.b16 %v1779
  %v1882 = vunpack.c.l.b16 %v1780
  %v1883 = vunpack.c.l.b16 %v1781
  %v1884 = vunpack.c.l.b16 %v1782
  %v1885 = vunpack.c.l.b16 %v1783
  %v1886 = vpack.c.b16 %v1875, %v1874
  %v1887 = vpack.c.b16 %v1877, %v1876
  %v1888 = vpack.c.b16 %v1879, %v1878
  %v1889 = vpack.c.b16 %v1881, %v1880
  %v1890 = vpack.c.b16 %v1883, %v1882
  %v1891 = vpack.c.b16 %v1885, %v1884
  %v1899 = vsel %vm566, %v1771, 0
  %1901 = vmatpush.bf16.msra.mxu0 0
  %1902 = vmatpush.bf16.msra.mxu0 0
  %1903 = vmatpush.bf16.msra.mxu0 %v1891
  %1904 = vmatpush.bf16.msra.mxu0 %v1890
  %1905 = vmatpush.bf16.msra.mxu0 %v1889
  %1906 = vmatpush.bf16.msra.mxu0 %v1888
  %1907 = vmatpush.bf16.msra.mxu0 %v1887
  %1908 = vmatpush.bf16.msra.mxu0 %v1886
  %1909 = vmatmul.bf16.gmra.mxu0 %v1899
  %v1910 = vpop.f32.mrf.mxu0
  %v1911 = vadd.f32 %v1859, %v1910
  %v1912 = vpop.f32.mrf.mxu0
  %1913 = vdwg.mxu0
  %v1914 = vld [vmem:[%s716] sm:$0xf]
  %v1915 = vld [vmem:[%s716 + $0x4] sm:$0xf]
  %v1916 = vld [vmem:[%s716 + $0x8] sm:$0xf]
  %v1917 = vld [vmem:[%s716 + $0xc] sm:$0xf]
  %v1918 = vld [vmem:[%s716 + $0x10] sm:$0xf]
  %v1919 = vld [vmem:[%s716 + $0x14] sm:$0xf]
  %v1920 = vld [vmem:[%s716 + $0x18] sm:$0xf]
  %v1921 = vld [vmem:[%s716 + $0x1c] sm:$0xf]
  %v1922 = vld [vmem:[%s716 + $0x20] sm:$0xf]
  %v1923 = vld [vmem:[%s716 + $0x24] sm:$0xf]
  %v1924 = vld [vmem:[%s716 + $0x28] sm:$0xf]
  %v1925 = vld [vmem:[%s716 + $0x2c] sm:$0xf]
  %v1938 = vunpack.c.l.b16 %v1914
  %v1939 = vunpack.c.l.b16 %v1915
  %v1940 = vunpack.c.l.b16 %v1916
  %v1941 = vunpack.c.l.b16 %v1917
  %v1942 = vunpack.c.l.b16 %v1918
  %v1943 = vunpack.c.l.b16 %v1919
  %v1944 = vunpack.c.l.b16 %v1920
  %v1945 = vunpack.c.l.b16 %v1921
  %v1946 = vunpack.c.l.b16 %v1922
  %v1947 = vunpack.c.l.b16 %v1923
  %v1948 = vunpack.c.l.b16 %v1924
  %v1949 = vunpack.c.l.b16 %v1925
  %v1950 = vpack.c.b16 %v1939, %v1938
  %v1951 = vpack.c.b16 %v1941, %v1940
  %v1952 = vpack.c.b16 %v1943, %v1942
  %v1953 = vpack.c.b16 %v1945, %v1944
  %v1954 = vpack.c.b16 %v1947, %v1946
  %v1955 = vpack.c.b16 %v1949, %v1948
  %1962 = vmatpush.bf16.msra.mxu0 0
  %1963 = vmatpush.bf16.msra.mxu0 0
  %1964 = vmatpush.bf16.msra.mxu0 %v1955
  %1965 = vmatpush.bf16.msra.mxu0 %v1954
  %1966 = vmatpush.bf16.msra.mxu0 %v1953
  %1967 = vmatpush.bf16.msra.mxu0 %v1952
  %1968 = vmatpush.bf16.msra.mxu0 %v1951
  %1969 = vmatpush.bf16.msra.mxu0 %v1950
  %1970 = vmatmul.bf16.gmra.mxu0 %v1847
  %v1971 = vpop.f32.mrf.mxu0
  %v1972 = vadd.f32 0.0, %v1971
  %v1973 = vpop.f32.mrf.mxu0
  %1974 = vdwg.mxu0
  %v1987 = vunpack.c.l.b16 %v1784
  %v1988 = vunpack.c.l.b16 %v1785
  %v1989 = vunpack.c.l.b16 %v1786
  %v1990 = vunpack.c.l.b16 %v1787
  %v1991 = vunpack.c.l.b16 %v1788
  %v1992 = vunpack.c.l.b16 %v1789
  %v1993 = vunpack.c.l.b16 %v1790
  %v1994 = vunpack.c.l.b16 %v1791
  %v1995 = vunpack.c.l.b16 %v1792
  %v1996 = vunpack.c.l.b16 %v1793
  %v1997 = vunpack.c.l.b16 %v1794
  %v1998 = vunpack.c.l.b16 %v1795
  %v1999 = vpack.c.b16 %v1988, %v1987
  %v2000 = vpack.c.b16 %v1990, %v1989
  %v2001 = vpack.c.b16 %v1992, %v1991
  %v2002 = vpack.c.b16 %v1994, %v1993
  %v2003 = vpack.c.b16 %v1996, %v1995
  %v2004 = vpack.c.b16 %v1998, %v1997
  %2011 = vmatpush.bf16.msra.mxu0 0
  %2012 = vmatpush.bf16.msra.mxu0 0
  %2013 = vmatpush.bf16.msra.mxu0 %v2004
  %2014 = vmatpush.bf16.msra.mxu0 %v2003
  %2015 = vmatpush.bf16.msra.mxu0 %v2002
  %2016 = vmatpush.bf16.msra.mxu0 %v2001
  %2017 = vmatpush.bf16.msra.mxu0 %v2000
  %2018 = vmatpush.bf16.msra.mxu0 %v1999
  %2019 = vmatmul.bf16.gmra.mxu0 %v1899
  %v2020 = vpop.f32.mrf.mxu0
  %v2021 = vadd.f32 %v1972, %v2020
  %v2022 = vpop.f32.mrf.mxu0
  %2023 = vdwg.mxu0
  %v2024 = vld [vmem:[#allocation2 + $0x2] sm:$0xff]
  %v2025 = vpack.c.bf16 %v2024, %v2024
  %v2026 = vld [vmem:[%s829] sm:$0xf]
  %v2027 = vld [vmem:[%s829 + $0x4] sm:$0xf]
  %v2028 = vld [vmem:[%s829 + $0x8] sm:$0xf]
  %v2029 = vld [vmem:[%s829 + $0xc] sm:$0xf]
  %v2030 = vld [vmem:[%s829 + $0x10] sm:$0xf]
  %v2031 = vld [vmem:[%s829 + $0x14] sm:$0xf]
  %v2032 = vld [vmem:[%s829 + $0x18] sm:$0xf]
  %v2033 = vld [vmem:[%s829 + $0x1c] sm:$0xf]
  %v2034 = vld [vmem:[%s829 + $0x20] sm:$0xf]
  %v2035 = vld [vmem:[%s829 + $0x24] sm:$0xf]
  %v2036 = vld [vmem:[%s829 + $0x28] sm:$0xf]
  %v2037 = vld [vmem:[%s829 + $0x2c] sm:$0xf]
  %v2050 = vunpack.c.l.b16 %v2026
  %v2051 = vunpack.c.l.b16 %v2027
  %v2052 = vunpack.c.l.b16 %v2028
  %v2053 = vunpack.c.l.b16 %v2029
  %v2054 = vunpack.c.l.b16 %v2030
  %v2055 = vunpack.c.l.b16 %v2031
  %v2056 = vunpack.c.l.b16 %v2032
  %v2057 = vunpack.c.l.b16 %v2033
  %v2058 = vunpack.c.l.b16 %v2034
  %v2059 = vunpack.c.l.b16 %v2035
  %v2060 = vunpack.c.l.b16 %v2036
  %v2061 = vunpack.c.l.b16 %v2037
  %v2062 = vpack.c.b16 %v2051, %v2050
  %v2063 = vpack.c.b16 %v2053, %v2052
  %v2064 = vpack.c.b16 %v2055, %v2054
  %v2065 = vpack.c.b16 %v2057, %v2056
  %v2066 = vpack.c.b16 %v2059, %v2058
  %v2067 = vpack.c.b16 %v2061, %v2060
  %v2075 = vsel %vm566, %v2025, 0
  %2077 = vmatpush.bf16.msra.mxu0 0
  %2078 = vmatpush.bf16.msra.mxu0 0
  %2079 = vmatpush.bf16.msra.mxu0 %v2067
  %2080 = vmatpush.bf16.msra.mxu0 %v2066
  %2081 = vmatpush.bf16.msra.mxu0 %v2065
  %2082 = vmatpush.bf16.msra.mxu0 %v2064
  %2083 = vmatpush.bf16.msra.mxu0 %v2063
  %2084 = vmatpush.bf16.msra.mxu0 %v2062
  %2085 = vmatmul.bf16.gmra.mxu0 %v2075
  %v2086 = vpop.f32.mrf.mxu0
  %v2087 = vadd.f32 0.0, %v2086
  %v2088 = vpop.f32.mrf.mxu0
  %2089 = vdwg.mxu0
  %v2090 = vadd.f32 %v1911, %v2087
  %v2091 = vld [vmem:[%s895] sm:$0xf]
  %v2092 = vld [vmem:[%s895 + $0x4] sm:$0xf]
  %v2093 = vld [vmem:[%s895 + $0x8] sm:$0xf]
  %v2094 = vld [vmem:[%s895 + $0xc] sm:$0xf]
  %v2095 = vld [vmem:[%s895 + $0x10] sm:$0xf]
  %v2096 = vld [vmem:[%s895 + $0x14] sm:$0xf]
  %v2097 = vld [vmem:[%s895 + $0x18] sm:$0xf]
  %v2098 = vld [vmem:[%s895 + $0x1c] sm:$0xf]
  %v2099 = vld [vmem:[%s895 + $0x20] sm:$0xf]
  %v2100 = vld [vmem:[%s895 + $0x24] sm:$0xf]
  %v2101 = vld [vmem:[%s895 + $0x28] sm:$0xf]
  %v2102 = vld [vmem:[%s895 + $0x2c] sm:$0xf]
  %v2115 = vunpack.c.l.b16 %v2091
  %v2116 = vunpack.c.l.b16 %v2092
  %v2117 = vunpack.c.l.b16 %v2093
  %v2118 = vunpack.c.l.b16 %v2094
  %v2119 = vunpack.c.l.b16 %v2095
  %v2120 = vunpack.c.l.b16 %v2096
  %v2121 = vunpack.c.l.b16 %v2097
  %v2122 = vunpack.c.l.b16 %v2098
  %v2123 = vunpack.c.l.b16 %v2099
  %v2124 = vunpack.c.l.b16 %v2100
  %v2125 = vunpack.c.l.b16 %v2101
  %v2126 = vunpack.c.l.b16 %v2102
  %v2127 = vpack.c.b16 %v2116, %v2115
  %v2128 = vpack.c.b16 %v2118, %v2117
  %v2129 = vpack.c.b16 %v2120, %v2119
  %v2130 = vpack.c.b16 %v2122, %v2121
  %v2131 = vpack.c.b16 %v2124, %v2123
  %v2132 = vpack.c.b16 %v2126, %v2125
  %2139 = vmatpush.bf16.msra.mxu0 0
  %2140 = vmatpush.bf16.msra.mxu0 0
  %2141 = vmatpush.bf16.msra.mxu0 %v2132
  %2142 = vmatpush.bf16.msra.mxu0 %v2131
  %2143 = vmatpush.bf16.msra.mxu0 %v2130
  %2144 = vmatpush.bf16.msra.mxu0 %v2129
  %2145 = vmatpush.bf16.msra.mxu0 %v2128
  %2146 = vmatpush.bf16.msra.mxu0 %v2127
  %2147 = vmatmul.bf16.gmra.mxu0 %v2075
  %v2148 = vpop.f32.mrf.mxu0
  %v2149 = vadd.f32 0.0, %v2148
  %v2150 = vpop.f32.mrf.mxu0
  %2151 = vdwg.mxu0
  %v2152 = vadd.f32 %v2021, %v2149
  %v2153 = vld [vmem:[#allocation2 + $0x3] sm:$0xff]
  %v2154 = vpack.c.bf16 %v2153, %v2153
  %v2155 = vld [vmem:[%s960] sm:$0xf]
  %v2156 = vld [vmem:[%s960 + $0x4] sm:$0xf]
  %v2157 = vld [vmem:[%s960 + $0x8] sm:$0xf]
  %v2158 = vld [vmem:[%s960 + $0xc] sm:$0xf]
  %v2159 = vld [vmem:[%s960 + $0x10] sm:$0xf]
  %v2160 = vld [vmem:[%s960 + $0x14] sm:$0xf]
  %v2161 = vld [vmem:[%s960 + $0x18] sm:$0xf]
  %v2162 = vld [vmem:[%s960 + $0x1c] sm:$0xf]
  %v2163 = vld [vmem:[%s960 + $0x20] sm:$0xf]
  %v2164 = vld [vmem:[%s960 + $0x24] sm:$0xf]
  %v2165 = vld [vmem:[%s960 + $0x28] sm:$0xf]
  %v2166 = vld [vmem:[%s960 + $0x2c] sm:$0xf]
  %v2179 = vunpack.c.l.b16 %v2155
  %v2180 = vunpack.c.l.b16 %v2156
  %v2181 = vunpack.c.l.b16 %v2157
  %v2182 = vunpack.c.l.b16 %v2158
  %v2183 = vunpack.c.l.b16 %v2159
  %v2184 = vunpack.c.l.b16 %v2160
  %v2185 = vunpack.c.l.b16 %v2161
  %v2186 = vunpack.c.l.b16 %v2162
  %v2187 = vunpack.c.l.b16 %v2163
  %v2188 = vunpack.c.l.b16 %v2164
  %v2189 = vunpack.c.l.b16 %v2165
  %v2190 = vunpack.c.l.b16 %v2166
  %v2191 = vpack.c.b16 %v2180, %v2179
  %v2192 = vpack.c.b16 %v2182, %v2181
  %v2193 = vpack.c.b16 %v2184, %v2183
  %v2194 = vpack.c.b16 %v2186, %v2185
  %v2195 = vpack.c.b16 %v2188, %v2187
  %v2196 = vpack.c.b16 %v2190, %v2189
  %v2204 = vsel %vm566, %v2154, 0
  %2206 = vmatpush.bf16.msra.mxu0 0
  %2207 = vmatpush.bf16.msra.mxu0 0
  %2208 = vmatpush.bf16.msra.mxu0 %v2196
  %2209 = vmatpush.bf16.msra.mxu0 %v2195
  %2210 = vmatpush.bf16.msra.mxu0 %v2194
  %2211 = vmatpush.bf16.msra.mxu0 %v2193
  %2212 = vmatpush.bf16.msra.mxu0 %v2192
  %2213 = vmatpush.bf16.msra.mxu0 %v2191
  %2214 = vmatmul.bf16.gmra.mxu0 %v2204
  %v2215 = vpop.f32.mrf.mxu0
  %v2216 = vadd.f32 0.0, %v2215
  %v2217 = vpop.f32.mrf.mxu0
  %2218 = vdwg.mxu0
  %v2219 = vadd.f32 %v2090, %v2216
  %v2220 = vld [vmem:[%s1026] sm:$0xf]
  %v2221 = vld [vmem:[%s1026 + $0x4] sm:$0xf]
  %v2222 = vld [vmem:[%s1026 + $0x8] sm:$0xf]
  %v2223 = vld [vmem:[%s1026 + $0xc] sm:$0xf]
  %v2224 = vld [vmem:[%s1026 + $0x10] sm:$0xf]
  %v2225 = vld [vmem:[%s1026 + $0x14] sm:$0xf]
  %v2226 = vld [vmem:[%s1026 + $0x18] sm:$0xf]
  %v2227 = vld [vmem:[%s1026 + $0x1c] sm:$0xf]
  %v2228 = vld [vmem:[%s1026 + $0x20] sm:$0xf]
  %v2229 = vld [vmem:[%s1026 + $0x24] sm:$0xf]
  %v2230 = vld [vmem:[%s1026 + $0x28] sm:$0xf]
  %v2231 = vld [vmem:[%s1026 + $0x2c] sm:$0xf]
  %v2244 = vunpack.c.l.b16 %v2220
  %v2245 = vunpack.c.l.b16 %v2221
  %v2246 = vunpack.c.l.b16 %v2222
  %v2247 = vunpack.c.l.b16 %v2223
  %v2248 = vunpack.c.l.b16 %v2224
  %v2249 = vunpack.c.l.b16 %v2225
  %v2250 = vunpack.c.l.b16 %v2226
  %v2251 = vunpack.c.l.b16 %v2227
  %v2252 = vunpack.c.l.b16 %v2228
  %v2253 = vunpack.c.l.b16 %v2229
  %v2254 = vunpack.c.l.b16 %v2230
  %v2255 = vunpack.c.l.b16 %v2231
  %v2256 = vpack.c.b16 %v2245, %v2244
  %v2257 = vpack.c.b16 %v2247, %v2246
  %v2258 = vpack.c.b16 %v2249, %v2248
  %v2259 = vpack.c.b16 %v2251, %v2250
  %v2260 = vpack.c.b16 %v2253, %v2252
  %v2261 = vpack.c.b16 %v2255, %v2254
  %2268 = vmatpush.bf16.msra.mxu0 0
  %2269 = vmatpush.bf16.msra.mxu0 0
  %2270 = vmatpush.bf16.msra.mxu0 %v2261
  %2271 = vmatpush.bf16.msra.mxu0 %v2260
  %2272 = vmatpush.bf16.msra.mxu0 %v2259
  %2273 = vmatpush.bf16.msra.mxu0 %v2258
  %2274 = vmatpush.bf16.msra.mxu0 %v2257
  %2275 = vmatpush.bf16.msra.mxu0 %v2256
  %2276 = vmatmul.bf16.gmra.mxu0 %v2204
  %v2277 = vpop.f32.mrf.mxu0
  %v2278 = vadd.f32 0.0, %v2277
  %v2279 = vpop.f32.mrf.mxu0
  %2280 = vdwg.mxu0
  %v2281 = vadd.f32 %v2152, %v2278
  %v2282 = vld [vmem:[#allocation2 + $0x4] sm:$0xff]
  %v2283 = vpack.c.bf16 %v2282, %v2282
  %v2284 = vld [vmem:[%s1091] sm:$0xf]
  %v2285 = vld [vmem:[%s1091 + $0x4] sm:$0xf]
  %v2286 = vld [vmem:[%s1091 + $0x8] sm:$0xf]
  %v2287 = vld [vmem:[%s1091 + $0xc] sm:$0xf]
  %v2288 = vld [vmem:[%s1091 + $0x10] sm:$0xf]
  %v2289 = vld [vmem:[%s1091 + $0x14] sm:$0xf]
  %v2290 = vld [vmem:[%s1091 + $0x18] sm:$0xf]
  %v2291 = vld [vmem:[%s1091 + $0x1c] sm:$0xf]
  %v2292 = vld [vmem:[%s1091 + $0x20] sm:$0xf]
  %v2293 = vld [vmem:[%s1091 + $0x24] sm:$0xf]
  %v2294 = vld [vmem:[%s1091 + $0x28] sm:$0xf]
  %v2295 = vld [vmem:[%s1091 + $0x2c] sm:$0xf]
  %v2308 = vunpack.c.l.b16 %v2284
  %v2309 = vunpack.c.l.b16 %v2285
  %v2310 = vunpack.c.l.b16 %v2286
  %v2311 = vunpack.c.l.b16 %v2287
  %v2312 = vunpack.c.l.b16 %v2288
  %v2313 = vunpack.c.l.b16 %v2289
  %v2314 = vunpack.c.l.b16 %v2290
  %v2315 = vunpack.c.l.b16 %v2291
  %v2316 = vunpack.c.l.b16 %v2292
  %v2317 = vunpack.c.l.b16 %v2293
  %v2318 = vunpack.c.l.b16 %v2294
  %v2319 = vunpack.c.l.b16 %v2295
  %v2320 = vpack.c.b16 %v2309, %v2308
  %v2321 = vpack.c.b16 %v2311, %v2310
  %v2322 = vpack.c.b16 %v2313, %v2312
  %v2323 = vpack.c.b16 %v2315, %v2314
  %v2324 = vpack.c.b16 %v2317, %v2316
  %v2325 = vpack.c.b16 %v2319, %v2318
  %v2333 = vsel %vm566, %v2283, 0
  %2335 = vmatpush.bf16.msra.mxu0 0
  %2336 = vmatpush.bf16.msra.mxu0 0
  %2337 = vmatpush.bf16.msra.mxu0 %v2325
  %2338 = vmatpush.bf16.msra.mxu0 %v2324
  %2339 = vmatpush.bf16.msra.mxu0 %v2323
  %2340 = vmatpush.bf16.msra.mxu0 %v2322
  %2341 = vmatpush.bf16.msra.mxu0 %v2321
  %2342 = vmatpush.bf16.msra.mxu0 %v2320
  %2343 = vmatmul.bf16.gmra.mxu0 %v2333
  %v2344 = vpop.f32.mrf.mxu0
  %v2345 = vadd.f32 0.0, %v2344
  %v2346 = vpop.f32.mrf.mxu0
  %2347 = vdwg.mxu0
  %v2348 = vadd.f32 %v2219, %v2345
  %v2349 = vld [vmem:[%s1157] sm:$0xf]
  %v2350 = vld [vmem:[%s1157 + $0x4] sm:$0xf]
  %v2351 = vld [vmem:[%s1157 + $0x8] sm:$0xf]
  %v2352 = vld [vmem:[%s1157 + $0xc] sm:$0xf]
  %v2353 = vld [vmem:[%s1157 + $0x10] sm:$0xf]
  %v2354 = vld [vmem:[%s1157 + $0x14] sm:$0xf]
  %v2355 = vld [vmem:[%s1157 + $0x18] sm:$0xf]
  %v2356 = vld [vmem:[%s1157 + $0x1c] sm:$0xf]
  %v2357 = vld [vmem:[%s1157 + $0x20] sm:$0xf]
  %v2358 = vld [vmem:[%s1157 + $0x24] sm:$0xf]
  %v2359 = vld [vmem:[%s1157 + $0x28] sm:$0xf]
  %v2360 = vld [vmem:[%s1157 + $0x2c] sm:$0xf]
  %v2373 = vunpack.c.l.b16 %v2349
  %v2374 = vunpack.c.l.b16 %v2350
  %v2375 = vunpack.c.l.b16 %v2351
  %v2376 = vunpack.c.l.b16 %v2352
  %v2377 = vunpack.c.l.b16 %v2353
  %v2378 = vunpack.c.l.b16 %v2354
  %v2379 = vunpack.c.l.b16 %v2355
  %v2380 = vunpack.c.l.b16 %v2356
  %v2381 = vunpack.c.l.b16 %v2357
  %v2382 = vunpack.c.l.b16 %v2358
  %v2383 = vunpack.c.l.b16 %v2359
  %v2384 = vunpack.c.l.b16 %v2360
  %v2385 = vpack.c.b16 %v2374, %v2373
  %v2386 = vpack.c.b16 %v2376, %v2375
  %v2387 = vpack.c.b16 %v2378, %v2377
  %v2388 = vpack.c.b16 %v2380, %v2379
  %v2389 = vpack.c.b16 %v2382, %v2381
  %v2390 = vpack.c.b16 %v2384, %v2383
  %2397 = vmatpush.bf16.msra.mxu0 0
  %2398 = vmatpush.bf16.msra.mxu0 0
  %2399 = vmatpush.bf16.msra.mxu0 %v2390
  %2400 = vmatpush.bf16.msra.mxu0 %v2389
  %2401 = vmatpush.bf16.msra.mxu0 %v2388
  %2402 = vmatpush.bf16.msra.mxu0 %v2387
  %2403 = vmatpush.bf16.msra.mxu0 %v2386
  %2404 = vmatpush.bf16.msra.mxu0 %v2385
  %2405 = vmatmul.bf16.gmra.mxu0 %v2333
  %v2406 = vpop.f32.mrf.mxu0
  %v2407 = vadd.f32 0.0, %v2406
  %v2408 = vpop.f32.mrf.mxu0
  %2409 = vdwg.mxu0
  %v2410 = vadd.f32 %v2281, %v2407
  %v2411 = vadd.f32 %v2348, %v1221
  %v2412 = vmax.f32 %v2411, 0.0
  %v2413 = vadd.f32 %v2410, %v1221
  %v2414 = vmax.f32 %v2413, 0.0
  %v2415 = vmax.f32 %v2412, %v2414
  %2416 = vmatpush.msra.mxu0 0.0
  %2417 = vmatpush.msra.mxu0 0.0
  %2418 = vmatpush.msra.mxu0 0.0
  %2419 = vmatpush.msra.mxu0 0.0
  %2420 = vmatpush.msra.mxu0 0.0
  %2421 = vmatpush.msra.mxu0 0.0
  %2422 = vmatpush.msra.mxu0 0.0
  %2423 = vmatpush.msra.mxu0 0.0
  %2424 = vmatpush.msra.mxu0 0.0
  %2425 = vmatpush.msra.mxu0 0.0
  %2426 = vmatpush.msra.mxu0 0.0
  %2427 = vmatpush.msra.mxu0 0.0
  %2428 = vmatpush.msra.mxu0 0.0
  %2429 = vmatpush.msra.mxu0 0.0
  %2430 = vmatpush.msra.mxu0 0.0
  %2431 = vmatpush.msra.mxu0 %v2415
  %2432 = vmatmul.f32.gmra.mxu0 %v1229
  %v2433 = vpop.f32.mrf.mxu0
  %v2434 = vadd.f32 0.0, %v2433
  %2435 = vdwg.mxu0
  %2436 = vmatpush.msra.mxu0 0.0
  %2437 = vmatpush.msra.mxu0 0.0
  %2438 = vmatpush.msra.mxu0 0.0
  %2439 = vmatpush.msra.mxu0 0.0
  %2440 = vmatpush.msra.mxu0 0.0
  %2441 = vmatpush.msra.mxu0 0.0
  %2442 = vmatpush.msra.mxu0 0.0
  %2443 = vmatpush.msra.mxu0 0.0
  %2444 = vmatpush.msra.mxu0 0.0
  %2445 = vmatpush.msra.mxu0 0.0
  %2446 = vmatpush.msra.mxu0 0.0
  %2447 = vmatpush.msra.mxu0 0.0
  %2448 = vmatpush.msra.mxu0 0.0
  %2449 = vmatpush.msra.mxu0 0.0
  %2450 = vmatpush.msra.mxu0 0.0
  %2451 = vmatpush.msra.mxu0 %v2415
  %2452 = vmatmul.f32.gmra.mxu0 %v1251
  %v2453 = vpop.f32.mrf.mxu0
  %v2454 = vadd.f32 0.0, %v2453
  %2455 = vdwg.mxu0
  %v2456 = vmax.f32 %v2434, %v2454
  %2457 = vst.msk [vmem:[#allocation3 + $0x1] sm:$0x1] %vm1274, %v2456
  %v2459 = vrot.slane %v2456, 1
  %2460 = vrot.lane.b32.xlu0 %v2459, 64
  %v2461 = vpop.permute.xlu0 %2460
  %2463 = vst.msk [vmem:[#allocation3 + $0x1] sm:$0x1] %vm1281, %v2461
  %v2464 = vrot.slane %v2456, 2
  %2466 = vst.msk [vmem:[#allocation3 + $0x9] sm:$0x1] %vm1274, %v2464
  %v2467 = vrot.slane %v2456, 3
  %2468 = vrot.lane.b32.xlu0 %v2467, 64
  %v2469 = vpop.permute.xlu0 %2468
  %2471 = vst.msk [vmem:[#allocation3 + $0x9] sm:$0x1] %vm1281, %v2469
  %v2472 = vld [vmem:[#allocation3] sm:$0xff]
  %v2473 = vld [vmem:[#allocation3 + $0x8] sm:$0xff]
  %v2474 = vpack.c.bf16 %v2472, %v2472
  %v2475 = vpack.c.bf16 %v2473, %v2473
  %v2476 = vld [vmem:[%s5] sm:$0xf]
  %v2477 = vld [vmem:[%s5 + $0x4] sm:$0xf]
  %v2478 = vld [vmem:[%s5 + $0x8] sm:$0xf]
  %v2479 = vld [vmem:[%s5 + $0xc] sm:$0xf]
  %v2480 = vld [vmem:[%s5 + $0x10] sm:$0xf]
  %v2481 = vld [vmem:[%s5 + $0x14] sm:$0xf]
  %v2482 = vld [vmem:[%s5 + $0x18] sm:$0xf]
  %v2483 = vld [vmem:[%s5 + $0x1c] sm:$0xf]
  %v2484 = vld [vmem:[%s5 + $0x20] sm:$0xf]
  %v2485 = vld [vmem:[%s5 + $0x24] sm:$0xf]
  %v2486 = vld [vmem:[%s5 + $0x28] sm:$0xf]
  %v2487 = vld [vmem:[%s5 + $0x2c] sm:$0xf]
  %v2488 = vld [vmem:[%s5 + $0x30] sm:$0xf]
  %v2489 = vld [vmem:[%s5 + $0x34] sm:$0xf]
  %v2490 = vld [vmem:[%s5 + $0x38] sm:$0xf]
  %v2491 = vld [vmem:[%s5 + $0x3c] sm:$0xf]
  %v2492 = vld [vmem:[%s5 + $0x40] sm:$0xf]
  %v2493 = vld [vmem:[%s5 + $0x44] sm:$0xf]
  %v2494 = vld [vmem:[%s5 + $0x48] sm:$0xf]
  %v2495 = vld [vmem:[%s5 + $0x4c] sm:$0xf]
  %v2496 = vld [vmem:[%s5 + $0x50] sm:$0xf]
  %v2497 = vld [vmem:[%s5 + $0x54] sm:$0xf]
  %v2498 = vld [vmem:[%s5 + $0x58] sm:$0xf]
  %v2499 = vld [vmem:[%s5 + $0x5c] sm:$0xf]
  %v2500 = vld [vmem:[%s5 + $0x60] sm:$0xf]
  %v2501 = vld [vmem:[%s5 + $0x64] sm:$0xf]
  %v2502 = vld [vmem:[%s5 + $0x68] sm:$0xf]
  %v2503 = vld [vmem:[%s5 + $0x6c] sm:$0xf]
  %v2504 = vld [vmem:[%s5 + $0x70] sm:$0xf]
  %v2505 = vld [vmem:[%s5 + $0x74] sm:$0xf]
  %v2506 = vld [vmem:[%s5 + $0x78] sm:$0xf]
  %v2507 = vld [vmem:[%s5 + $0x7c] sm:$0xf]
  %v2508 = vld [vmem:[%s6] sm:$0x1]
  %v2510 = vperm.slane %v2508, 0
  %v2544 = vunpack.c.l.b16 %v2476
  %v2545 = vunpack.c.l.b16 %v2477
  %v2546 = vunpack.c.l.b16 %v2478
  %v2547 = vunpack.c.l.b16 %v2479
  %v2548 = vunpack.c.l.b16 %v2480
  %v2549 = vunpack.c.l.b16 %v2481
  %v2550 = vunpack.c.l.b16 %v2482
  %v2551 = vunpack.c.l.b16 %v2483
  %v2552 = vunpack.c.l.b16 %v2484
  %v2553 = vunpack.c.l.b16 %v2485
  %v2554 = vunpack.c.l.b16 %v2486
  %v2555 = vunpack.c.l.b16 %v2487
  %v2556 = vunpack.c.l.b16 %v2488
  %v2557 = vunpack.c.l.b16 %v2489
  %v2558 = vunpack.c.l.b16 %v2490
  %v2559 = vunpack.c.l.b16 %v2491
  %v2560 = vunpack.c.l.b16 %v2492
  %v2561 = vunpack.c.l.b16 %v2493
  %v2562 = vunpack.c.l.b16 %v2494
  %v2563 = vunpack.c.l.b16 %v2495
  %v2564 = vunpack.c.l.b16 %v2496
  %v2565 = vunpack.c.l.b16 %v2497
  %v2566 = vunpack.c.l.b16 %v2498
  %v2567 = vunpack.c.l.b16 %v2499
  %v2568 = vunpack.c.l.b16 %v2500
  %v2569 = vunpack.c.l.b16 %v2501
  %v2570 = vunpack.c.l.b16 %v2502
  %v2571 = vunpack.c.l.b16 %v2503
  %v2572 = vunpack.c.l.b16 %v2504
  %v2573 = vunpack.c.l.b16 %v2505
  %v2574 = vunpack.c.l.b16 %v2506
  %v2575 = vunpack.c.l.b16 %v2507
  %v2576 = vpack.c.b16 %v2545, %v2544
  %v2577 = vpack.c.b16 %v2547, %v2546
  %v2578 = vpack.c.b16 %v2549, %v2548
  %v2579 = vpack.c.b16 %v2551, %v2550
  %v2580 = vpack.c.b16 %v2553, %v2552
  %v2581 = vpack.c.b16 %v2555, %v2554
  %v2582 = vpack.c.b16 %v2557, %v2556
  %v2583 = vpack.c.b16 %v2559, %v2558
  %v2584 = vpack.c.b16 %v2561, %v2560
  %v2585 = vpack.c.b16 %v2563, %v2562
  %v2586 = vpack.c.b16 %v2565, %v2564
  %v2587 = vpack.c.b16 %v2567, %v2566
  %v2588 = vpack.c.b16 %v2569, %v2568
  %v2589 = vpack.c.b16 %v2571, %v2570
  %v2590 = vpack.c.b16 %v2573, %v2572
  %v2591 = vpack.c.b16 %v2575, %v2574
  %2608 = vmatpush.bf16.msra.mxu0 %v2583
  %2609 = vmatpush.bf16.msra.mxu0 %v2582
  %2610 = vmatpush.bf16.msra.mxu0 %v2581
  %2611 = vmatpush.bf16.msra.mxu0 %v2580
  %2612 = vmatpush.bf16.msra.mxu0 %v2579
  %2613 = vmatpush.bf16.msra.mxu0 %v2578
  %2614 = vmatpush.bf16.msra.mxu0 %v2577
  %2615 = vmatpush.bf16.msra.mxu0 %v2576
  %2616 = vmatmul.bf16.gmra.mxu0 %v2474
  %v2617 = vpop.f32.mrf.mxu0
  %v2618 = vadd.f32 %v2510, %v2617
  %v2619 = vpop.f32.mrf.mxu0
  %2620 = vdwg.mxu0
  %2621 = vmatpush.bf16.msra.mxu0 %v2591
  %2622 = vmatpush.bf16.msra.mxu0 %v2590
  %2623 = vmatpush.bf16.msra.mxu0 %v2589
  %2624 = vmatpush.bf16.msra.mxu0 %v2588
  %2625 = vmatpush.bf16.msra.mxu0 %v2587
  %2626 = vmatpush.bf16.msra.mxu0 %v2586
  %2627 = vmatpush.bf16.msra.mxu0 %v2585
  %2628 = vmatpush.bf16.msra.mxu0 %v2584
  %2629 = vmatmul.bf16.gmra.mxu0 %v2475
  %v2630 = vpop.f32.mrf.mxu0
  %v2631 = vadd.f32 %v2618, %v2630
  %v2632 = vpop.f32.mrf.mxu0
  %2633 = vdwg.mxu0
  %v2634 = vmax.f32 %v2631, 0.0
  %v2635 = vpack.c.bf16 %v2634, %v2634
  %v2636 = vld [vmem:[%s7] sm:$0xf]
  %v2637 = vld [vmem:[%s7 + $0x4] sm:$0xf]
  %v2638 = vld [vmem:[%s7 + $0x8] sm:$0xf]
  %v2639 = vld [vmem:[%s7 + $0xc] sm:$0xf]
  %v2640 = vld [vmem:[%s7 + $0x10] sm:$0xf]
  %v2641 = vld [vmem:[%s7 + $0x14] sm:$0xf]
  %v2642 = vld [vmem:[%s7 + $0x18] sm:$0xf]
  %v2643 = vld [vmem:[%s7 + $0x1c] sm:$0xf]
  %v2644 = vld [vmem:[%s7 + $0x20] sm:$0xf]
  %v2645 = vld [vmem:[%s7 + $0x24] sm:$0xf]
  %v2646 = vld [vmem:[%s7 + $0x28] sm:$0xf]
  %v2647 = vld [vmem:[%s7 + $0x2c] sm:$0xf]
  %v2648 = vld [vmem:[%s7 + $0x30] sm:$0xf]
  %v2649 = vld [vmem:[%s7 + $0x34] sm:$0xf]
  %v2650 = vld [vmem:[%s7 + $0x38] sm:$0xf]
  %v2651 = vld [vmem:[%s7 + $0x3c] sm:$0xf]
  %v2652 = vld [vmem:[%s8] sm:$0x1]
  %v2654 = vperm.slane %v2652, 0
  %v2672 = vunpack.c.l.b16 %v2636
  %v2673 = vunpack.c.l.b16 %v2637
  %v2674 = vunpack.c.l.b16 %v2638
  %v2675 = vunpack.c.l.b16 %v2639
  %v2676 = vunpack.c.l.b16 %v2640
  %v2677 = vunpack.c.l.b16 %v2641
  %v2678 = vunpack.c.l.b16 %v2642
  %v2679 = vunpack.c.l.b16 %v2643
  %v2680 = vunpack.c.l.b16 %v2644
  %v2681 = vunpack.c.l.b16 %v2645
  %v2682 = vunpack.c.l.b16 %v2646
  %v2683 = vunpack.c.l.b16 %v2647
  %v2684 = vunpack.c.l.b16 %v2648
  %v2685 = vunpack.c.l.b16 %v2649
  %v2686 = vunpack.c.l.b16 %v2650
  %v2687 = vunpack.c.l.b16 %v2651
  %v2688 = vpack.c.b16 %v2673, %v2672
  %v2689 = vpack.c.b16 %v2675, %v2674
  %v2690 = vpack.c.b16 %v2677, %v2676
  %v2691 = vpack.c.b16 %v2679, %v2678
  %v2692 = vpack.c.b16 %v2681, %v2680
  %v2693 = vpack.c.b16 %v2683, %v2682
  %v2694 = vpack.c.b16 %v2685, %v2684
  %v2695 = vpack.c.b16 %v2687, %v2686
  %2704 = vmatpush.bf16.msra.mxu0 %v2695
  %2705 = vmatpush.bf16.msra.mxu0 %v2694
  %2706 = vmatpush.bf16.msra.mxu0 %v2693
  %2707 = vmatpush.bf16.msra.mxu0 %v2692
  %2708 = vmatpush.bf16.msra.mxu0 %v2691
  %2709 = vmatpush.bf16.msra.mxu0 %v2690
  %2710 = vmatpush.bf16.msra.mxu0 %v2689
  %2711 = vmatpush.bf16.msra.mxu0 %v2688
  %2712 = vmatmul.bf16.gmra.mxu0 %v2635
  %v2713 = vpop.f32.mrf.mxu0
  %v2714 = vadd.f32 %v2654, %v2713
  %v2715 = vpop.f32.mrf.mxu0
  %2716 = vdwg.mxu0
  %v2717 = vmax.f32 %v2714, 0.0
  %v2718 = vpack.c.bf16 %v2717, %v2717
  %v2719 = vld [vmem:[%s9] sm:$0xf]
  %v2720 = vld [vmem:[%s9 + $0x4] sm:$0xf]
  %v2721 = vld [vmem:[%s9 + $0x8] sm:$0xf]
  %v2722 = vld [vmem:[%s9 + $0xc] sm:$0xf]
  %v2723 = vld [vmem:[%s9 + $0x10] sm:$0xf]
  %v2724 = vld [vmem:[%s9 + $0x14] sm:$0xf]
  %v2725 = vld [vmem:[%s9 + $0x18] sm:$0xf]
  %v2726 = vld [vmem:[%s9 + $0x1c] sm:$0xf]
  %v2727 = vld [vmem:[%s9 + $0x20] sm:$0xf]
  %v2728 = vld [vmem:[%s9 + $0x24] sm:$0xf]
  %v2729 = vld [vmem:[%s9 + $0x28] sm:$0xf]
  %v2730 = vld [vmem:[%s9 + $0x2c] sm:$0xf]
  %v2731 = vld [vmem:[%s9 + $0x30] sm:$0xf]
  %v2732 = vld [vmem:[%s9 + $0x34] sm:$0xf]
  %v2733 = vld [vmem:[%s9 + $0x38] sm:$0xf]
  %v2734 = vld [vmem:[%s9 + $0x3c] sm:$0xf]
  %v2735 = vld [vmem:[%s10] sm:$0x1]
  %v2737 = vperm.slane %v2735, 0
  %v2755 = vunpack.c.l.b16 %v2719
  %v2756 = vunpack.c.l.b16 %v2720
  %v2757 = vunpack.c.l.b16 %v2721
  %v2758 = vunpack.c.l.b16 %v2722
  %v2759 = vunpack.c.l.b16 %v2723
  %v2760 = vunpack.c.l.b16 %v2724
  %v2761 = vunpack.c.l.b16 %v2725
  %v2762 = vunpack.c.l.b16 %v2726
  %v2763 = vunpack.c.l.b16 %v2727
  %v2764 = vunpack.c.l.b16 %v2728
  %v2765 = vunpack.c.l.b16 %v2729
  %v2766 = vunpack.c.l.b16 %v2730
  %v2767 = vunpack.c.l.b16 %v2731
  %v2768 = vunpack.c.l.b16 %v2732
  %v2769 = vunpack.c.l.b16 %v2733
  %v2770 = vunpack.c.l.b16 %v2734
  %v2771 = vpack.c.b16 %v2756, %v2755
  %v2772 = vpack.c.b16 %v2758, %v2757
  %v2773 = vpack.c.b16 %v2760, %v2759
  %v2774 = vpack.c.b16 %v2762, %v2761
  %v2775 = vpack.c.b16 %v2764, %v2763
  %v2776 = vpack.c.b16 %v2766, %v2765
  %v2777 = vpack.c.b16 %v2768, %v2767
  %v2778 = vpack.c.b16 %v2770, %v2769
  %2787 = vmatpush.bf16.msra.mxu0 %v2778
  %2788 = vmatpush.bf16.msra.mxu0 %v2777
  %2789 = vmatpush.bf16.msra.mxu0 %v2776
  %2790 = vmatpush.bf16.msra.mxu0 %v2775
  %2791 = vmatpush.bf16.msra.mxu0 %v2774
  %2792 = vmatpush.bf16.msra.mxu0 %v2773
  %2793 = vmatpush.bf16.msra.mxu0 %v2772
  %2794 = vmatpush.bf16.msra.mxu0 %v2771
  %2795 = vmatmul.bf16.gmra.mxu0 %v2718
  %v2796 = vpop.f32.mrf.mxu0
  %v2797 = vadd.f32 %v2737, %v2796
  %v2798 = vpop.f32.mrf.mxu0
  %2799 = vdwg.mxu0
  %2800 = vst [vmem:[%s11] sm:$0xff] %v2797
  // Predicated region
  $region46: #{lenet5_forward.1} parent=0 // pred_check
    _
  $region47: #{lenet5_forward.1} parent=0 // pred_check_branch
    %2802 = sbr.rel (0) target = $region49
  $region48: #{lenet5_forward.1} parent=0 // pred_region
    _
  $region49: #{lenet5_forward.1} parent=0 // pred_fallthru
    _
  // Predicated region
  $region50: #{lenet5_forward.1} parent=0 // pred_check
    _
  $region51: #{lenet5_forward.1} parent=0 // pred_check_branch
    %2804 = sbr.rel (0) target = $region53
  $region52: #{lenet5_forward.1} parent=0 // pred_region
    _
  $region53: #{lenet5_forward.1} parent=0 // pred_fallthru
    _

</llo_original>
